<compile_context>
chip_gen: v7x
topology: tpu7x:2x2x1
jax: 0.10.0
libtpu: 0.0.40
codegen_flags: <defaults>
</compile_context>

<pallas_src>
import math
from functools import partial

import jax
import jax.numpy as jnp
from jax.experimental import pallas as pl
from jax.experimental.pallas import tpu as pltpu


_WEIGHT_KEYS = ('wqkv', 'wo', 'w1', 'w2', 'bqkv', 'b1', 'small')


# ----------------------------- kernel -------------------------------------- #

def _layer_norm(x, g, b, eps=1e-5):
    """Two-pass (centered) LayerNorm - avoids E[x^2]-E[x]^2 cancellation."""
    mu = jnp.mean(x, axis=-1, keepdims=True)
    xc = x - mu
    var = jnp.mean(xc * xc, axis=-1, keepdims=True)
    return xc * jax.lax.rsqrt(var + eps) * g + b


def encoder_stack_kernel(
        x_ref, mask_ref,
        wqkv_ref, wo_ref, w1_ref, w2_ref, bqkv_ref, b1_ref, small_ref,
        hid_ref, pooled_ref,
        ctx_ref,
        *, num_heads, q_tile, bb):
    """Whole Marian encoder stack for one batch block of `bb` sequences.

    grid = (B//bb, L): batch-block axis is 'parallel', layer axis is the inner
    'arbitrary' axis.  hid_ref's block index is constant over the layer axis,
    so the residual stream stays resident in VMEM across layers while per-layer
    weight blocks stream in (double-buffered).
    """
    l = pl.program_id(1)

    # First layer of a batch block: seed the VMEM-resident residual stream.
    @pl.when(l == 0)
    def _():
        hid_ref[...] = x_ref[...]

    S = hid_ref.shape[1]
    D = hid_ref.shape[2]
    H = num_heads
    dh = D // H
    BS = bb * S

    x = hid_ref[...].reshape(BS, D)                    # (Bb*S, D) f32 resident
    xb = x.astype(jnp.bfloat16)

    bias = mask_ref[:, 1, :]                           # (Bb, S) additive key bias

    small = small_ref[0]                               # (6, D) packed params
    bo = small[0:1, :]
    b2 = small[1:2, :]
    ln1g = small[2:3, :]
    ln1b = small[3:4, :]
    ln2g = small[4:5, :]
    ln2b = small[5:6, :]

    # ---- fused Q|K|V projection (bf16 MXU, f32 acc); 1/sqrt(dh) folded in ---
    qkv = jnp.dot(xb, wqkv_ref[0],
                  preferred_element_type=jnp.float32) + bqkv_ref[0]  # (BS, 3D)
    q = qkv[:, :D]
    k = qkv[:, D:2 * D]
    v = qkv[:, 2 * D:]

    # ---- head-major relayout hoisted out of the q-tile loop: (Bb*H, S, dh) --
    def to_heads(t):
        t = t.astype(jnp.bfloat16).reshape(bb, S, H, dh)
        return jnp.transpose(t, (0, 2, 1, 3)).reshape(bb * H, S, dh)

    qh = to_heads(q)
    kh = to_heads(k)
    vh = to_heads(v)

    # additive key bias broadcast to (Bb*H, 1, S), once per layer
    bias_bh = jnp.broadcast_to(bias[:, None, None, :],
                               (bb, H, 1, S)).reshape(bb * H, 1, S)

    # ---- query-tiled batched-head attention: only (Bb*H, tq, S) scores live --
    for q0 in range(0, S, q_tile):
        tq = min(q_tile, S - q0)
        qc = qh[:, q0:q0 + tq, :]                                  # (Bb*H, tq, dh)
        sc = jnp.einsum('bqd,bkd->bqk', qc, kh,
                        preferred_element_type=jnp.float32)        # (Bb*H, tq, S)
        sc = sc + bias_bh
        m = jnp.max(sc, axis=-1, keepdims=True)
        e = jnp.exp(sc - m)
        ssum = jnp.sum(e, axis=-1, keepdims=True)
        p = (e * pl.reciprocal(ssum, approx=True)).astype(jnp.bfloat16)
        cc = jnp.einsum('bqk,bkd->bqd', p, vh,
                        preferred_element_type=jnp.float32)        # (Bb*H, tq, dh)
        cc = jnp.transpose(cc.reshape(bb, H, tq, dh),
                           (0, 2, 1, 3)).reshape(bb, tq, D)        # token-major
        ctx_ref[:, q0:q0 + tq, :] = cc.astype(jnp.bfloat16)

    attn_out = jnp.dot(ctx_ref[...].reshape(BS, D), wo_ref[0],
                       preferred_element_type=jnp.float32) + bo
    h1 = _layer_norm(x + attn_out, ln1g, ln1b)          # post-LN (Marian)

    # ---- feed-forward (SiLU / 'swish'), bf16 MXU with f32 accumulate --------
    f = jnp.dot(h1.astype(jnp.bfloat16), w1_ref[0],
                preferred_element_type=jnp.float32) + b1_ref[0]
    f = jax.nn.silu(f)
    f = jnp.dot(f.astype(jnp.bfloat16), w2_ref[0],
                preferred_element_type=jnp.float32) + b2
    out = _layer_norm(h1 + f, ln2g, ln2b)

    hid_ref[...] = out.reshape(bb, S, D)

    # ---- fused masked mean pooling on the last layer's epilogue -------------
    @pl.when(l == pl.num_programs(1) - 1)
    def _():
        mask = mask_ref[:, 0, :]                                   # (Bb, S) 0/1
        out3 = out.reshape(bb, S, D)
        summed = jnp.sum(out3 * mask[:, :, None], axis=1)          # (Bb, D)
        denom = jnp.maximum(jnp.sum(mask, axis=1, keepdims=True), 1e-9)
        pooled_ref[:, 0, :] = summed / denom


# ----------------------------- wrappers ------------------------------------ #

def _pick_vmem_limit():
    try:
        cap = pltpu.get_tpu_info().vmem_capacity_bytes
    except Exception:
        cap = 64 * 1024 * 1024
    # Leave headroom for compiler-internal scratch; caps at ~96 MiB on
    # v5e/v6e (128 MiB physical) and ~48 MiB on v7x (64 MiB physical).
    return min(int(cap * 3 // 4), 96 * 1024 * 1024)


def encoder_stack(x, mask2, stacked, num_heads, *, batch_block=4, q_tile=256,
                  vmem_limit_bytes=None):
    """Full encoder stack + fused masked-mean pooling in one pallas_call."""
    B, S, D = x.shape
    L = stacked['wqkv'].shape[0]

    # largest divisor of B not exceeding batch_block (keeps blocks uniform)
    bb = max(d for d in range(1, min(batch_block, B) + 1) if B % d == 0)
    q_tile = min(q_tile, S)

    weights = [stacked[k] for k in _WEIGHT_KEYS]

    batch_map = lambda i, l: (i, 0, 0)   # constant over layers -> VMEM resident
    layer_map = lambda i, l: (l, 0, 0)   # streams one layer's weights per step

    in_specs = [pl.BlockSpec((bb, S, D), batch_map),
                pl.BlockSpec((bb, 2, S), batch_map)]
    in_specs += [pl.BlockSpec((1,) + w.shape[1:], layer_map) for w in weights]

    out_specs = [pl.BlockSpec((bb, S, D), batch_map),    # last_hidden_state
                 pl.BlockSpec((bb, 1, D), batch_map)]    # pooled embedding

    if vmem_limit_bytes is None:
        vmem_limit_bytes = _pick_vmem_limit()

    grid_spec = pltpu.PrefetchScalarGridSpec(
        num_scalar_prefetch=0,
        grid=(B // bb, L),
        in_specs=in_specs,
        out_specs=out_specs,
        scratch_shapes=[pltpu.VMEM((bb, S, D), jnp.bfloat16)],  # attn ctx slab
    )

    hidden, pooled = pl.pallas_call(
        partial(encoder_stack_kernel, num_heads=num_heads, q_tile=q_tile, bb=bb),
        out_shape=(jax.ShapeDtypeStruct((B, S, D), jnp.float32),
                   jax.ShapeDtypeStruct((B, 1, D), jnp.float32)),
        grid_spec=grid_spec,
        compiler_params=pltpu.CompilerParams(
            dimension_semantics=("parallel", "arbitrary"),
            vmem_limit_bytes=vmem_limit_bytes,
        ),
    )(x, mask2, *weights)
    return hidden, pooled[:, 0, :]


def encdec_forward(input_ids, attention_mask, params):
    """Equivalent of EncDecModel.forward(sentences, partial_value=True,
    generate_sentences=False, target_sentences=None) -> encoder-only path:
    returns (last_hidden_state, sentence_embedding)."""
    B, S = input_ids.shape
    D = params['tok_emb'].shape[1]

    # ---- glue (not hot path): embedding lookup + positions, Marian embed_scale
    # TODO(synk): MarianMT uses fixed sinusoidal position embeddings; a learned
    # table is used here as a stand-in for the test harness.
    x = jnp.take(params['tok_emb'], input_ids, axis=0) * math.sqrt(D)
    x = (x + params['pos_emb'][None, :S, :]).astype(jnp.float32)

    m = attention_mask.astype(jnp.float32)                     # (B, S), 1 = token
    # Pack pooling mask + additive key bias once (avoids rebuilding per layer).
    mask2 = jnp.stack([m, (1.0 - m) * (-1e9)], axis=1)         # (B, 2, S)

    last_hidden, sentence_embedding = encoder_stack(
        x, mask2, params['stacked'], params['num_heads'])
    return last_hidden, sentence_embedding


# ----------------------------- param init ---------------------------------- #

def init_params(key, vocab, S, D, F, num_layers, num_heads):
    dh = D // num_heads
    scale = 1.0 / math.sqrt(dh)

    def nrm(k, shape, std=0.02):
        return std * jax.random.normal(k, shape, dtype=jnp.float32)

    keys = jax.random.split(key, 2 + num_layers)
    per_layer = {k: [] for k in _WEIGHT_KEYS}
    for li in range(num_layers):
        ks = jax.random.split(keys[2 + li], 6)
        wq, wk, wv = nrm(ks[0], (D, D)), nrm(ks[1], (D, D)), nrm(ks[2], (D, D))
        bq = jnp.zeros((1, D), jnp.float32)
        bk = jnp.zeros((1, D), jnp.float32)
        bv = jnp.zeros((1, D), jnp.float32)
        wo = nrm(ks[3], (D, D)); bo = jnp.zeros((1, D), jnp.float32)
        w1 = nrm(ks[4], (D, F)); b1 = jnp.zeros((1, F), jnp.float32)
        w2 = nrm(ks[5], (F, D)); b2 = jnp.zeros((1, D), jnp.float32)
        ln1g = jnp.ones((1, D), jnp.float32); ln1b = jnp.zeros((1, D), jnp.float32)
        ln2g = jnp.ones((1, D), jnp.float32); ln2b = jnp.zeros((1, D), jnp.float32)

        # fuse QKV; fold the 1/sqrt(dh) query scale into the Q columns / bias
        per_layer['wqkv'].append(
            jnp.concatenate([wq * scale, wk, wv], axis=1).astype(jnp.bfloat16))
        per_layer['bqkv'].append(jnp.concatenate([bq * scale, bk, bv], axis=1))
        per_layer['wo'].append(wo.astype(jnp.bfloat16))
        per_layer['w1'].append(w1.astype(jnp.bfloat16))
        per_layer['b1'].append(b1)
        per_layer['w2'].append(w2.astype(jnp.bfloat16))
        # pack the 6 small (1, D) params into one (6, D) array
        per_layer['small'].append(
            jnp.concatenate([bo, b2, ln1g, ln1b, ln2g, ln2b], axis=0))

    stacked = {k: jnp.stack(v, axis=0) for k, v in per_layer.items()}
    return {
        'tok_emb': nrm(keys[0], (vocab, D)),
        'pos_emb': nrm(keys[1], (S, D)),
        'num_heads': num_heads,
        'stacked': stacked,
    }


# ----------------------------- main ----------------------------------------- #

if __name__ == "__main__":
    # TODO(synk): tokenizer, `model.generate()` beam search and the decoder /
    # label-loss paths are string / control-flow level and are not translated;
    # this implements the encoder-only + masked-mean-pooling numeric path.
    B, S, D, F, H, L, VOCAB = 2, 8, 32, 64, 4, 2, 100

    key = jax.random.PRNGKey(0)
    k_ids, k_params = jax.random.split(key)

    input_ids = jax.random.randint(k_ids, (B, S), 0, VOCAB, dtype=jnp.int32)
    # second sequence padded after 5 tokens
    lengths = jnp.array([S, 5], dtype=jnp.int32)
    pos = jax.lax.broadcasted_iota(jnp.int32, (B, S), 1)
    attention_mask = (pos < lengths[:, None]).astype(jnp.int32)

    params = init_params(k_params, VOCAB, S, D, F, L, H)

    last_hidden, sent_emb = encdec_forward(input_ids, attention_mask, params)
    jax.block_until_ready((last_hidden, sent_emb))

    assert last_hidden.shape == (B, S, D)
    assert sent_emb.shape == (B, D)
    assert bool(jnp.all(jnp.isfinite(last_hidden)))
    assert bool(jnp.all(jnp.isfinite(sent_emb)))
    print("KERNEL_OK")
</pallas_src>

<mosaic_0001>
module attributes {stable_mosaic.version = 11 : i64} {
  func.func @encoder_stack_kernel(%arg0: i32, %arg1: i32, %arg2: memref<2x8x32xf32, #tpu.memory_space<vmem>>, %arg3: memref<2x2x8xf32, #tpu.memory_space<vmem>>, %arg4: memref<1x32x96xbf16, #tpu.memory_space<vmem>>, %arg5: memref<1x32x32xbf16, #tpu.memory_space<vmem>>, %arg6: memref<1x32x64xbf16, #tpu.memory_space<vmem>>, %arg7: memref<1x64x32xbf16, #tpu.memory_space<vmem>>, %arg8: memref<1x1x96xf32, #tpu.memory_space<vmem>>, %arg9: memref<1x1x64xf32, #tpu.memory_space<vmem>>, %arg10: memref<1x6x32xf32, #tpu.memory_space<vmem>>, %arg11: memref<2x8x32xf32, #tpu.memory_space<vmem>>, %arg12: memref<2x1x32xf32, #tpu.memory_space<vmem>>, %arg13: memref<2x8x32xbf16, #tpu.memory_space<vmem>>) attributes {dimension_semantics = [#tpu.dimension_semantics<parallel>, #tpu.dimension_semantics<arbitrary>], iteration_bounds = array<i64: 1, 2>, scalar_prefetch = 0 : i64, scratch_operands = 1 : i64, tpu.core_type = #tpu.core_type<tc>, window_params = [{transform_indices = @transform_0, window_bounds = array<i64: 2, 8, 32>}, {transform_indices = @transform_1, window_bounds = array<i64: 2, 2, 8>}, {transform_indices = @transform_2, window_bounds = array<i64: 1, 32, 96>}, {transform_indices = @transform_3, window_bounds = array<i64: 1, 32, 32>}, {transform_indices = @transform_4, window_bounds = array<i64: 1, 32, 64>}, {transform_indices = @transform_5, window_bounds = array<i64: 1, 64, 32>}, {transform_indices = @transform_6, window_bounds = array<i64: 1, 1, 96>}, {transform_indices = @transform_7, window_bounds = array<i64: 1, 1, 64>}, {transform_indices = @transform_8, window_bounds = array<i64: 1, 6, 32>}, {transform_indices = @transform_9, window_bounds = array<i64: 2, 8, 32>}, {transform_indices = @transform_10, window_bounds = array<i64: 2, 1, 32>}]} {
    %c0_i32 = arith.constant 0 : i32
    %0 = arith.cmpi eq, %arg1, %c0_i32 : i32
    %1 = arith.extui %0 : i1 to i32
    %c0_i32_0 = arith.constant 0 : i32
    %2 = arith.cmpi ne, %1, %c0_i32_0 : i32
    scf.if %2 {
      %c0_54 = arith.constant 0 : index
      %c0_55 = arith.constant 0 : index
      %c0_56 = arith.constant 0 : index
      %136 = vector.load %arg2[%c0_54, %c0_55, %c0_56] : memref<2x8x32xf32, #tpu.memory_space<vmem>>, vector<2x8x32xf32>
      %c0_57 = arith.constant 0 : index
      %c0_58 = arith.constant 0 : index
      %c0_59 = arith.constant 0 : index
      %137 = vector.load %arg11[%c0_57, %c0_58, %c0_59] : memref<2x8x32xf32, #tpu.memory_space<vmem>>, vector<2x8x32xf32>
      tpu.vector_store %arg11[%c0_57, %c0_58, %c0_59], %136 {strides = array<i32>} : memref<2x8x32xf32, #tpu.memory_space<vmem>>, vector<2x8x32xf32>,
    } else {
    }
    %c0 = arith.constant 0 : index
    %c0_1 = arith.constant 0 : index
    %c0_2 = arith.constant 0 : index
    %3 = vector.load %arg11[%c0, %c0_1, %c0_2] : memref<2x8x32xf32, #tpu.memory_space<vmem>>, vector<2x8x32xf32>
    %4 = vector.shape_cast %3 : vector<2x8x32xf32> to vector<16x32xf32>
    %5 = arith.truncf %4 : vector<16x32xf32> to vector<16x32xbf16>
    %c0_3 = arith.constant 0 : index
    %c1 = arith.constant 1 : index
    %c0_4 = arith.constant 0 : index
    %6 = vector.load %arg3[%c0_3, %c1, %c0_4] : memref<2x2x8xf32, #tpu.memory_space<vmem>>, vector<2x1x8xf32>
    %7 = vector.shape_cast %6 : vector<2x1x8xf32> to vector<2x8xf32>
    %c0_5 = arith.constant 0 : index
    %c0_6 = arith.constant 0 : index
    %c0_7 = arith.constant 0 : index
    %8 = vector.load %arg10[%c0_5, %c0_6, %c0_7] : memref<1x6x32xf32, #tpu.memory_space<vmem>>, vector<1x6x32xf32>
    %9 = vector.shape_cast %8 : vector<1x6x32xf32> to vector<6x32xf32>
    %10 = vector.extract_strided_slice %9 {offsets = [0, 0], sizes = [1, 32], strides = [1, 1]} : vector<6x32xf32> to vector<1x32xf32>
    %11 = vector.extract_strided_slice %9 {offsets = [1, 0], sizes = [1, 32], strides = [1, 1]} : vector<6x32xf32> to vector<1x32xf32>
    %12 = vector.extract_strided_slice %9 {offsets = [2, 0], sizes = [1, 32], strides = [1, 1]} : vector<6x32xf32> to vector<1x32xf32>
    %13 = vector.extract_strided_slice %9 {offsets = [3, 0], sizes = [1, 32], strides = [1, 1]} : vector<6x32xf32> to vector<1x32xf32>
    %14 = vector.extract_strided_slice %9 {offsets = [4, 0], sizes = [1, 32], strides = [1, 1]} : vector<6x32xf32> to vector<1x32xf32>
    %15 = vector.extract_strided_slice %9 {offsets = [5, 0], sizes = [1, 32], strides = [1, 1]} : vector<6x32xf32> to vector<1x32xf32>
    %c0_8 = arith.constant 0 : index
    %c0_9 = arith.constant 0 : index
    %c0_10 = arith.constant 0 : index
    %16 = vector.load %arg4[%c0_8, %c0_9, %c0_10] : memref<1x32x96xbf16, #tpu.memory_space<vmem>>, vector<1x32x96xbf16>
    %17 = vector.shape_cast %16 : vector<1x32x96xbf16> to vector<32x96xbf16>
    %cst = arith.constant dense<0.000000e+00> : vector<16x96xf32>
    %18 = tpu.matmul %5, %17, %cst {dimension_numbers = #tpu.dot_dimension_numbers<[1], [0], [0], [1], [0, 0, 1, 1], [], []>} : vector<16x32xbf16>, vector<32x96xbf16>, vector<16x96xf32> -> vector<16x96xf32>
    %c0_11 = arith.constant 0 : index
    %c0_12 = arith.constant 0 : index
    %c0_13 = arith.constant 0 : index
    %19 = vector.load %arg8[%c0_11, %c0_12, %c0_13] : memref<1x1x96xf32, #tpu.memory_space<vmem>>, vector<1x1x96xf32>
    %20 = vector.shape_cast %19 : vector<1x1x96xf32> to vector<1x96xf32>
    %21 = vector.broadcast %20 : vector<1x96xf32> to vector<16x96xf32>
    %22 = arith.addf %18, %21 : vector<16x96xf32>
    %23 = vector.extract_strided_slice %22 {offsets = [0, 0], sizes = [16, 32], strides = [1, 1]} : vector<16x96xf32> to vector<16x32xf32>
    %24 = vector.extract_strided_slice %22 {offsets = [0, 32], sizes = [16, 32], strides = [1, 1]} : vector<16x96xf32> to vector<16x32xf32>
    %25 = vector.extract_strided_slice %22 {offsets = [0, 64], sizes = [16, 32], strides = [1, 1]} : vector<16x96xf32> to vector<16x32xf32>
    %26 = arith.truncf %23 : vector<16x32xf32> to vector<16x32xbf16>
    %27 = vector.shape_cast %26 : vector<16x32xbf16> to vector<2x8x4x8xbf16>
    %28 = tpu.transpose %27, [0, 2, 1, 3] : vector<2x8x4x8xbf16> -> vector<2x4x8x8xbf16>
    %29 = vector.shape_cast %28 : vector<2x4x8x8xbf16> to vector<8x8x8xbf16>
    %30 = arith.truncf %24 : vector<16x32xf32> to vector<16x32xbf16>
    %31 = vector.shape_cast %30 : vector<16x32xbf16> to vector<2x8x4x8xbf16>
    %32 = tpu.transpose %31, [0, 2, 1, 3] : vector<2x8x4x8xbf16> -> vector<2x4x8x8xbf16>
    %33 = vector.shape_cast %32 : vector<2x4x8x8xbf16> to vector<8x8x8xbf16>
    %34 = arith.truncf %25 : vector<16x32xf32> to vector<16x32xbf16>
    %35 = vector.shape_cast %34 : vector<16x32xbf16> to vector<2x8x4x8xbf16>
    %36 = tpu.transpose %35, [0, 2, 1, 3] : vector<2x8x4x8xbf16> -> vector<2x4x8x8xbf16>
    %37 = vector.shape_cast %36 : vector<2x4x8x8xbf16> to vector<8x8x8xbf16>
    %38 = vector.shape_cast %7 : vector<2x8xf32> to vector<2x1x1x8xf32>
    %39 = vector.shape_cast %38 : vector<2x1x1x8xf32> to vector<2x1x1x8xf32>
    %40 = vector.broadcast %39 : vector<2x1x1x8xf32> to vector<2x4x1x8xf32>
    %41 = vector.shape_cast %40 : vector<2x4x1x8xf32> to vector<8x1x8xf32>
    "tpu.trace_start"() <{level = 10 : i32, message = "bqd,bkd->bqk"}> : () -> ()
    %cst_14 = arith.constant dense<0.000000e+00> : vector<8x8x8xf32>
    %42 = tpu.matmul %29, %33, %cst_14 {dimension_numbers = #tpu.dot_dimension_numbers<[2], [2], [1], [1], [0, 0, 0, 1, 1, 1], [0], [0]>} : vector<8x8x8xbf16>, vector<8x8x8xbf16>, vector<8x8x8xf32> -> vector<8x8x8xf32>
    "tpu.trace_stop"() : () -> ()
    %43 = vector.broadcast %41 : vector<8x1x8xf32> to vector<8x8x8xf32>
    %44 = arith.addf %42, %43 : vector<8x8x8xf32>
    %cst_15 = arith.constant dense<0xFF800000> : vector<8x8xf32>
    %45 = vector.multi_reduction <maximumf>, %44, %cst_15 [2] : vector<8x8x8xf32> to vector<8x8xf32>
    %46 = vector.shape_cast %45 : vector<8x8xf32> to vector<8x8x1xf32>
    %47 = vector.broadcast %46 : vector<8x8x1xf32> to vector<8x8x8xf32>
    %48 = arith.subf %44, %47 : vector<8x8x8xf32>
    %49 = math.exp %48 : vector<8x8x8xf32>
    %cst_16 = arith.constant dense<0.000000e+00> : vector<8x8xf32>
    %50 = vector.multi_reduction <add>, %49, %cst_16 [2] : vector<8x8x8xf32> to vector<8x8xf32>
    %51 = vector.shape_cast %50 : vector<8x8xf32> to vector<8x8x1xf32>
    %52 = tpu.reciprocal %51 {approx = true} : vector<8x8x1xf32> -> vector<8x8x1xf32>
    %53 = vector.broadcast %52 : vector<8x8x1xf32> to vector<8x8x8xf32>
    %54 = arith.mulf %49, %53 : vector<8x8x8xf32>
    %55 = arith.truncf %54 : vector<8x8x8xf32> to vector<8x8x8xbf16>
    "tpu.trace_start"() <{level = 10 : i32, message = "bqk,bkd->bqd"}> : () -> ()
    %cst_17 = arith.constant dense<0.000000e+00> : vector<8x8x8xf32>
    %56 = tpu.matmul %55, %37, %cst_17 {dimension_numbers = #tpu.dot_dimension_numbers<[2], [1], [1], [2], [0, 0, 0, 1, 1, 2], [0], [0]>} : vector<8x8x8xbf16>, vector<8x8x8xbf16>, vector<8x8x8xf32> -> vector<8x8x8xf32>
    "tpu.trace_stop"() : () -> ()
    %57 = vector.shape_cast %56 : vector<8x8x8xf32> to vector<2x4x8x8xf32>
    %58 = tpu.transpose %57, [0, 2, 1, 3] : vector<2x4x8x8xf32> -> vector<2x8x4x8xf32>
    %59 = vector.shape_cast %58 : vector<2x8x4x8xf32> to vector<2x8x32xf32>
    %60 = arith.truncf %59 : vector<2x8x32xf32> to vector<2x8x32xbf16>
    %c0_18 = arith.constant 0 : index
    %c0_19 = arith.constant 0 : index
    %c0_20 = arith.constant 0 : index
    %61 = vector.load %arg13[%c0_18, %c0_19, %c0_20] : memref<2x8x32xbf16, #tpu.memory_space<vmem>>, vector<2x8x32xbf16>
    tpu.vector_store %arg13[%c0_18, %c0_19, %c0_20], %60 {strides = array<i32>} : memref<2x8x32xbf16, #tpu.memory_space<vmem>>, vector<2x8x32xbf16>,
    %c0_21 = arith.constant 0 : index
    %c0_22 = arith.constant 0 : index
    %c0_23 = arith.constant 0 : index
    %62 = vector.load %arg13[%c0_21, %c0_22, %c0_23] : memref<2x8x32xbf16, #tpu.memory_space<vmem>>, vector<2x8x32xbf16>
    %63 = vector.shape_cast %62 : vector<2x8x32xbf16> to vector<16x32xbf16>
    %c0_24 = arith.constant 0 : index
    %c0_25 = arith.constant 0 : index
    %c0_26 = arith.constant 0 : index
    %64 = vector.load %arg5[%c0_24, %c0_25, %c0_26] : memref<1x32x32xbf16, #tpu.memory_space<vmem>>, vector<1x32x32xbf16>
    %65 = vector.shape_cast %64 : vector<1x32x32xbf16> to vector<32x32xbf16>
    %cst_27 = arith.constant dense<0.000000e+00> : vector<16x32xf32>
    %66 = tpu.matmul %63, %65, %cst_27 {dimension_numbers = #tpu.dot_dimension_numbers<[1], [0], [0], [1], [0, 0, 1, 1], [], []>} : vector<16x32xbf16>, vector<32x32xbf16>, vector<16x32xf32> -> vector<16x32xf32>
    %67 = vector.broadcast %10 : vector<1x32xf32> to vector<16x32xf32>
    %68 = arith.addf %66, %67 : vector<16x32xf32>
    %69 = arith.addf %4, %68 : vector<16x32xf32>
    %cst_28 = arith.constant dense<0.000000e+00> : vector<16xf32>
    %70 = vector.multi_reduction <add>, %69, %cst_28 [1] : vector<16x32xf32> to vector<16xf32>
    %71 = vector.shape_cast %70 : vector<16xf32> to vector<16x1xf32>
    %cst_29 = arith.constant 3.200000e+01 : f32
    %72 = vector.broadcast %cst_29 : f32 to vector<16x1xf32>
    %73 = arith.divf %71, %72 : vector<16x1xf32>
    %74 = vector.broadcast %73 : vector<16x1xf32> to vector<16x32xf32>
    %75 = arith.subf %69, %74 : vector<16x32xf32>
    %76 = arith.mulf %75, %75 : vector<16x32xf32>
    %cst_30 = arith.constant dense<0.000000e+00> : vector<16xf32>
    %77 = vector.multi_reduction <add>, %76, %cst_30 [1] : vector<16x32xf32> to vector<16xf32>
    %78 = vector.shape_cast %77 : vector<16xf32> to vector<16x1xf32>
    %cst_31 = arith.constant 3.200000e+01 : f32
    %79 = vector.broadcast %cst_31 : f32 to vector<16x1xf32>
    %80 = arith.divf %78, %79 : vector<16x1xf32>
    %cst_32 = arith.constant 9.99999974E-6 : f32
    %81 = vector.broadcast %cst_32 : f32 to vector<16x1xf32>
    %82 = arith.addf %80, %81 : vector<16x1xf32>
    %83 = math.rsqrt %82 : vector<16x1xf32>
    %84 = vector.broadcast %83 : vector<16x1xf32> to vector<16x32xf32>
    %85 = arith.mulf %75, %84 : vector<16x32xf32>
    %86 = vector.broadcast %12 : vector<1x32xf32> to vector<16x32xf32>
    %87 = arith.mulf %85, %86 : vector<16x32xf32>
    %88 = vector.broadcast %13 : vector<1x32xf32> to vector<16x32xf32>
    %89 = arith.addf %87, %88 : vector<16x32xf32>
    %90 = arith.truncf %89 : vector<16x32xf32> to vector<16x32xbf16>
    %c0_33 = arith.constant 0 : index
    %c0_34 = arith.constant 0 : index
    %c0_35 = arith.constant 0 : index
    %91 = vector.load %arg6[%c0_33, %c0_34, %c0_35] : memref<1x32x64xbf16, #tpu.memory_space<vmem>>, vector<1x32x64xbf16>
    %92 = vector.shape_cast %91 : vector<1x32x64xbf16> to vector<32x64xbf16>
    %cst_36 = arith.constant dense<0.000000e+00> : vector<16x64xf32>
    %93 = tpu.matmul %90, %92, %cst_36 {dimension_numbers = #tpu.dot_dimension_numbers<[1], [0], [0], [1], [0, 0, 1, 1], [], []>} : vector<16x32xbf16>, vector<32x64xbf16>, vector<16x64xf32> -> vector<16x64xf32>
    %c0_37 = arith.constant 0 : index
    %c0_38 = arith.constant 0 : index
    %c0_39 = arith.constant 0 : index
    %94 = vector.load %arg9[%c0_37, %c0_38, %c0_39] : memref<1x1x64xf32, #tpu.memory_space<vmem>>, vector<1x1x64xf32>
    %95 = vector.shape_cast %94 : vector<1x1x64xf32> to vector<1x64xf32>
    %96 = vector.broadcast %95 : vector<1x64xf32> to vector<16x64xf32>
    %97 = arith.addf %93, %96 : vector<16x64xf32>
    %98 = arith.negf %97 : vector<16x64xf32>
    %99 = math.exp %98 : vector<16x64xf32>
    %cst_40 = arith.constant 1.000000e+00 : f32
    %100 = vector.broadcast %cst_40 : f32 to vector<16x64xf32>
    %101 = arith.addf %100, %99 : vector<16x64xf32>
    %102 = arith.divf %100, %101 : vector<16x64xf32>
    %103 = arith.mulf %97, %102 : vector<16x64xf32>
    %104 = arith.truncf %103 : vector<16x64xf32> to vector<16x64xbf16>
    %c0_41 = arith.constant 0 : index
    %c0_42 = arith.constant 0 : index
    %c0_43 = arith.constant 0 : index
    %105 = vector.load %arg7[%c0_41, %c0_42, %c0_43] : memref<1x64x32xbf16, #tpu.memory_space<vmem>>, vector<1x64x32xbf16>
    %106 = vector.shape_cast %105 : vector<1x64x32xbf16> to vector<64x32xbf16>
    %cst_44 = arith.constant dense<0.000000e+00> : vector<16x32xf32>
    %107 = tpu.matmul %104, %106, %cst_44 {dimension_numbers = #tpu.dot_dimension_numbers<[1], [0], [0], [1], [0, 0, 1, 1], [], []>} : vector<16x64xbf16>, vector<64x32xbf16>, vector<16x32xf32> -> vector<16x32xf32>
    %108 = vector.broadcast %11 : vector<1x32xf32> to vector<16x32xf32>
    %109 = arith.addf %107, %108 : vector<16x32xf32>
    %110 = arith.addf %89, %109 : vector<16x32xf32>
    %cst_45 = arith.constant dense<0.000000e+00> : vector<16xf32>
    %111 = vector.multi_reduction <add>, %110, %cst_45 [1] : vector<16x32xf32> to vector<16xf32>
    %112 = vector.shape_cast %111 : vector<16xf32> to vector<16x1xf32>
    %cst_46 = arith.constant 3.200000e+01 : f32
    %113 = vector.broadcast %cst_46 : f32 to vector<16x1xf32>
    %114 = arith.divf %112, %113 : vector<16x1xf32>
    %115 = vector.broadcast %114 : vector<16x1xf32> to vector<16x32xf32>
    %116 = arith.subf %110, %115 : vector<16x32xf32>
    %117 = arith.mulf %116, %116 : vector<16x32xf32>
    %cst_47 = arith.constant dense<0.000000e+00> : vector<16xf32>
    %118 = vector.multi_reduction <add>, %117, %cst_47 [1] : vector<16x32xf32> to vector<16xf32>
    %119 = vector.shape_cast %118 : vector<16xf32> to vector<16x1xf32>
    %cst_48 = arith.constant 3.200000e+01 : f32
    %120 = vector.broadcast %cst_48 : f32 to vector<16x1xf32>
    %121 = arith.divf %119, %120 : vector<16x1xf32>
    %cst_49 = arith.constant 9.99999974E-6 : f32
    %122 = vector.broadcast %cst_49 : f32 to vector<16x1xf32>
    %123 = arith.addf %121, %122 : vector<16x1xf32>
    %124 = math.rsqrt %123 : vector<16x1xf32>
    %125 = vector.broadcast %124 : vector<16x1xf32> to vector<16x32xf32>
    %126 = arith.mulf %116, %125 : vector<16x32xf32>
    %127 = vector.broadcast %14 : vector<1x32xf32> to vector<16x32xf32>
    %128 = arith.mulf %126, %127 : vector<16x32xf32>
    %129 = vector.broadcast %15 : vector<1x32xf32> to vector<16x32xf32>
    %130 = arith.addf %128, %129 : vector<16x32xf32>
    %131 = vector.shape_cast %130 : vector<16x32xf32> to vector<2x8x32xf32>
    %c0_50 = arith.constant 0 : index
    %c0_51 = arith.constant 0 : index
    %c0_52 = arith.constant 0 : index
    %132 = vector.load %arg11[%c0_50, %c0_51, %c0_52] : memref<2x8x32xf32, #tpu.memory_space<vmem>>, vector<2x8x32xf32>
    tpu.vector_store %arg11[%c0_50, %c0_51, %c0_52], %131 {strides = array<i32>} : memref<2x8x32xf32, #tpu.memory_space<vmem>>, vector<2x8x32xf32>,
    %c1_i32 = arith.constant 1 : i32
    %133 = arith.cmpi eq, %arg1, %c1_i32 : i32
    %134 = arith.extui %133 : i1 to i32
    %c0_i32_53 = arith.constant 0 : i32
    %135 = arith.cmpi ne, %134, %c0_i32_53 : i32
    scf.if %135 {
      %c0_54 = arith.constant 0 : index
      %c0_55 = arith.constant 0 : index
      %c0_56 = arith.constant 0 : index
      %136 = vector.load %arg3[%c0_54, %c0_55, %c0_56] : memref<2x2x8xf32, #tpu.memory_space<vmem>>, vector<2x1x8xf32>
      %137 = vector.shape_cast %136 : vector<2x1x8xf32> to vector<2x8xf32>
      %138 = vector.shape_cast %130 : vector<16x32xf32> to vector<2x8x32xf32>
      %139 = vector.shape_cast %137 : vector<2x8xf32> to vector<2x8x1xf32>
      %140 = vector.broadcast %139 : vector<2x8x1xf32> to vector<2x8x32xf32>
      %141 = arith.mulf %138, %140 : vector<2x8x32xf32>
      %cst_57 = arith.constant dense<0.000000e+00> : vector<2x32xf32>
      %142 = vector.multi_reduction <add>, %141, %cst_57 [1] : vector<2x8x32xf32> to vector<2x32xf32>
      %cst_58 = arith.constant dense<0.000000e+00> : vector<2xf32>
      %143 = vector.multi_reduction <add>, %137, %cst_58 [1] : vector<2x8xf32> to vector<2xf32>
      %144 = vector.shape_cast %143 : vector<2xf32> to vector<2x1xf32>
      %cst_59 = arith.constant 9.99999971E-10 : f32
      %145 = vector.broadcast %cst_59 : f32 to vector<2x1xf32>
      %146 = arith.maximumf %144, %145 : vector<2x1xf32>
      %147 = vector.broadcast %146 : vector<2x1xf32> to vector<2x32xf32>
      %148 = arith.divf %142, %147 : vector<2x32xf32>
      %c0_60 = arith.constant 0 : index
      %c0_61 = arith.constant 0 : index
      %c0_62 = arith.constant 0 : index
      %149 = vector.load %arg12[%c0_60, %c0_61, %c0_62] : memref<2x1x32xf32, #tpu.memory_space<vmem>>, vector<2x1x32xf32>
      %150 = vector.shape_cast %149 : vector<2x1x32xf32> to vector<2x32xf32>
      %151 = vector.shape_cast %148 : vector<2x32xf32> to vector<2x1x32xf32>
      tpu.vector_store %arg12[%c0_60, %c0_61, %c0_62], %151 {strides = array<i32>} : memref<2x1x32xf32, #tpu.memory_space<vmem>>, vector<2x1x32xf32>,
    } else {
    }
    return
  }
  func.func @transform_0(%arg0: i32, %arg1: i32) -> (i32, i32, i32) {
    %c0_i32 = arith.constant 0 : i32
    %c0_i32_0 = arith.constant 0 : i32
    %c0_i32_1 = arith.constant 0 : i32
    return %arg0, %c0_i32, %c0_i32_0 : i32, i32, i32
  }
  func.func @transform_1(%arg0: i32, %arg1: i32) -> (i32, i32, i32) {
    %c0_i32 = arith.constant 0 : i32
    %c0_i32_0 = arith.constant 0 : i32
    %c0_i32_1 = arith.constant 0 : i32
    return %arg0, %c0_i32, %c0_i32_0 : i32, i32, i32
  }
  func.func @transform_2(%arg0: i32, %arg1: i32) -> (i32, i32, i32) {
    %c0_i32 = arith.constant 0 : i32
    %c0_i32_0 = arith.constant 0 : i32
    %c0_i32_1 = arith.constant 0 : i32
    return %arg1, %c0_i32, %c0_i32_0 : i32, i32, i32
  }
  func.func @transform_3(%arg0: i32, %arg1: i32) -> (i32, i32, i32) {
    %c0_i32 = arith.constant 0 : i32
    %c0_i32_0 = arith.constant 0 : i32
    %c0_i32_1 = arith.constant 0 : i32
    return %arg1, %c0_i32, %c0_i32_0 : i32, i32, i32
  }
  func.func @transform_4(%arg0: i32, %arg1: i32) -> (i32, i32, i32) {
    %c0_i32 = arith.constant 0 : i32
    %c0_i32_0 = arith.constant 0 : i32
    %c0_i32_1 = arith.constant 0 : i32
    return %arg1, %c0_i32, %c0_i32_0 : i32, i32, i32
  }
  func.func @transform_5(%arg0: i32, %arg1: i32) -> (i32, i32, i32) {
    %c0_i32 = arith.constant 0 : i32
    %c0_i32_0 = arith.constant 0 : i32
    %c0_i32_1 = arith.constant 0 : i32
    return %arg1, %c0_i32, %c0_i32_0 : i32, i32, i32
  }
  func.func @transform_6(%arg0: i32, %arg1: i32) -> (i32, i32, i32) {
    %c0_i32 = arith.constant 0 : i32
    %c0_i32_0 = arith.constant 0 : i32
    %c0_i32_1 = arith.constant 0 : i32
    return %arg1, %c0_i32, %c0_i32_0 : i32, i32, i32
  }
  func.func @transform_7(%arg0: i32, %arg1: i32) -> (i32, i32, i32) {
    %c0_i32 = arith.constant 0 : i32
    %c0_i32_0 = arith.constant 0 : i32
    %c0_i32_1 = arith.constant 0 : i32
    return %arg1, %c0_i32, %c0_i32_0 : i32, i32, i32
  }
  func.func @transform_8(%arg0: i32, %arg1: i32) -> (i32, i32, i32) {
    %c0_i32 = arith.constant 0 : i32
    %c0_i32_0 = arith.constant 0 : i32
    %c0_i32_1 = arith.constant 0 : i32
    return %arg1, %c0_i32, %c0_i32_0 : i32, i32, i32
  }
  func.func @transform_9(%arg0: i32, %arg1: i32) -> (i32, i32, i32) {
    %c0_i32 = arith.constant 0 : i32
    %c0_i32_0 = arith.constant 0 : i32
    %c0_i32_1 = arith.constant 0 : i32
    return %arg0, %c0_i32, %c0_i32_0 : i32, i32, i32
  }
  func.func @transform_10(%arg0: i32, %arg1: i32) -> (i32, i32, i32) {
    %c0_i32 = arith.constant 0 : i32
    %c0_i32_0 = arith.constant 0 : i32
    %c0_i32_1 = arith.constant 0 : i32
    return %arg0, %c0_i32, %c0_i32_0 : i32, i32, i32
  }
}

</mosaic_0001>

<llo_original>
// kernel: tpu_custom_call.1
$region0: #{tpu_custom_call.1}
  #allocation0 [shape = 'u32[]', space=smem, size = 0x4, offset = 0x4, fixed_abs, tag = 'smem constant byte address 0x4 - core index']
  #allocation1 [shape = 'u32[144,128]{1,0:T(1,128)}', space=vmem, size = 0x12000, scoped, tag = 'internal scratch']
  #allocation2 [shape = 'bf16[2,8,32]{2,1,0:T(8,128)(2,1)}', space=vmem, size = 0x1000, scoped, tag = 'scratch operand']
  %s0 = inlined_call_operand.hbm [shape: f32[2,8,32], index: 0, kind: input, shape index: {}]
  %s1 = inlined_call_operand.vmem [shape: f32[2,2,8], index: 1, kind: input, shape index: {}]
  %s2 = inlined_call_operand.vmem [shape: bf16[2,32,96], index: 2, kind: input, shape index: {}]
  %s3 = inlined_call_operand.vmem [shape: bf16[2,32,32], index: 3, kind: input, shape index: {}]
  %s4 = inlined_call_operand.vmem [shape: bf16[2,32,64], index: 4, kind: input, shape index: {}]
  %s5 = inlined_call_operand.vmem [shape: bf16[2,64,32], index: 5, kind: input, shape index: {}]
  %s6 = inlined_call_operand.vmem [shape: f32[2,1,96], index: 6, kind: input, shape index: {}]
  %s7 = inlined_call_operand.vmem [shape: f32[2,1,64], index: 7, kind: input, shape index: {}]
  %s8 = inlined_call_operand.vmem [shape: f32[2,6,32], index: 8, kind: input, shape index: {}]
  %s9 = inlined_call_operand.hbm [shape: f32[2,8,32], index: 9, kind: output, shape index: {0}]
  %s10 = inlined_call_operand.hbm [shape: f32[2,1,32], index: 10, kind: output, shape index: {1}]
  %11 = xla_tuple %s9, %s10
  %s12 = sld [smem:[#allocation0]]
  $region89: #{tpu_custom_call.1} parent=0
    _
  %s14 = ssub.s32 1, %s12
  %s15 = scalar_select 0, %s14, %s12
  $region1: #{tpu_custom_call.1} parent=0
    #allocation3 [shape = 'u8[8192]{0}', space=vmem, size = 0x2000, scoped, tag = 'input window, operand 0, single buffered']
    #allocation4 [shape = 's32[2]{0}', space=sflag, size = 0x8, scoped, tag = 'scoped memory for tpu_custom_call.1']
    #allocation5 [shape = 's32[2]{0}', space=sflag, size = 0x8, scoped, tag = 'scoped memory for tpu_custom_call.1']
    #allocation6 [shape = 'u8[8192]{0}', space=vmem, size = 0x2000, scoped, tag = 'output window, operand 0, single buffered']
    #allocation7 [shape = 'u8[1024]{0}', space=vmem, size = 0x400, scoped, tag = 'output window, operand 1, single buffered']
    #allocation8 [shape = 's32[1]{0}', space=sflag, size = 0x4, scoped, tag = 'scoped memory for tpu_custom_call.1']
    %16 = vsyncpa [#allocation4], 0
    %17 = vsyncpa [#allocation5], 0
    %18 = vsyncpa [#allocation8], 0
    loop: start=0, step=1, limit=4
    $region2: #{tpu_custom_call.1} parent=1 // loop_pre_header
      _
    $region3: #{tpu_custom_call.1} parent=1 // loop_header
      %s20 = sphi 0, %s24
      %p21 = scmp.ge.s32.totalorder %s20, 4
      %s27 = sphi 0, %s39
      %s28 = sphi 0, %s35
      %s29 = sphi 0, %s27
      %s30 = sphi 0, %s28
      %s31 = sphi 0, %s29
      %s32 = sphi 0, %s30
      %s42 = sphi 0, %s44
      %s45 = sphi 0, %s42
      %s46 = sphi 0, %s45
      %s62 = sphi 0, %s46
      %s68 = sphi 0, %s70
      %s71 = sphi 0, %s68
      %s72 = sphi 0, %s71
      %s88 = sphi 0, %s72
      %s94 = sphi 0, %s96
      %s97 = sphi 0, %s94
      %s98 = sphi 0, %s97
      %s114 = sphi 0, %s98
      %s120 = sphi 0, %s122
      %s123 = sphi 0, %s120
      %s124 = sphi 0, %s123
      %s140 = sphi 0, %s124
      %s146 = sphi 0, %s148
      %s149 = sphi 0, %s146
      %s150 = sphi 0, %s149
      %s166 = sphi 0, %s150
      %s172 = sphi 0, %s174
      %s175 = sphi 0, %s172
      %s176 = sphi 0, %s175
      %s192 = sphi 0, %s176
      %s198 = sphi 0, %s200
      %s201 = sphi 0, %s198
      %s202 = sphi 0, %s201
      %s218 = sphi 0, %s202
      %s224 = sphi 0, %s226
      %s227 = sphi 0, %s224
      %s228 = sphi 0, %s227
      %s244 = sphi 0, %s228
      %s250 = sphi 0, %s252
      %s253 = sphi 0, %s250
      %s254 = sphi 0, %s253
      %s270 = sphi 0, %s254
      %s276 = sphi 0, %s278
      %s279 = sphi 0, %s276
      %s280 = sphi 0, %s279
      %s296 = sphi 0, %s280
      %s302 = sphi 0, %s304
      %s305 = sphi 0, %s302
      %s306 = sphi 0, %s305
      %s322 = sphi 0, %s306
    $region4: #{tpu_custom_call.1} parent=1 // loop_header_branch
      %23 = sbr.rel (%p21) target = $region8
    $region5: #{tpu_custom_call.1} parent=1 // loop_body
      %s25 = ssub.s32 %s20, 1
      %s26 = ssub.s32 %s20, 2
      %s33 = sadd.s32 1, %s28
      %p34 = scmp.ge.s32.totalorder %s33, 2
      %s35 = scalar_select %p34, 0, %s33
      %s36 = sadd.s32 1, %s27
      %s37 = scalar_select %p34, %s36, %s27
      %p38 = scmp.ge.s32.totalorder %s37, 1
      %s39 = scalar_select %p38, 0, %s37
      %s40 = ssub.s32 %s27, %s39
      %p41 = scmp.eq.s32.totalorder %s40, 0
      %s43 = sadd.s32 %s42, 1
      %s44 = scalar_select %p41, %s42, %s43
      %p47 = pneg %p41
      %p48 = scmp.eq.s32.totalorder %s20, 1
      %p49 = por %p47, %p48
      %p50 = scmp.ne.s32.totalorder %s42, %s45
      %p51 = scmp.eq.s32.totalorder %s20, 0
      %p52 = por %p50, %p51
      %p53 = scmp.ne.s32.totalorder %s42, %s45
      %p54 = scmp.eq.s32.totalorder %s25, 1
      %p55 = por %p53, %p54
      %p56 = scmp.ne.s32.totalorder %s45, %s46
      %p57 = scmp.eq.s32.totalorder %s25, 0
      %p58 = por %p56, %p57
      %p59 = scmp.ne.s32.totalorder %s45, %s46
      %p60 = scmp.eq.s32.totalorder %s26, 1
      %p61 = por %p59, %p60
      %p63 = scmp.ne.s32.totalorder %s46, %s62
      %p64 = scmp.eq.s32.totalorder %s26, 0
      %p65 = por %p63, %p64
      %s66 = ssub.s32 %s27, %s39
      %p67 = scmp.eq.s32.totalorder %s66, 0
      %s69 = sadd.s32 %s68, 1
      %s70 = scalar_select %p67, %s68, %s69
      %p73 = pneg %p67
      %p74 = scmp.eq.s32.totalorder %s20, 1
      %p75 = por %p73, %p74
      %p76 = scmp.ne.s32.totalorder %s68, %s71
      %p77 = scmp.eq.s32.totalorder %s20, 0
      %p78 = por %p76, %p77
      %p79 = scmp.ne.s32.totalorder %s68, %s71
      %p80 = scmp.eq.s32.totalorder %s25, 1
      %p81 = por %p79, %p80
      %p82 = scmp.ne.s32.totalorder %s71, %s72
      %p83 = scmp.eq.s32.totalorder %s25, 0
      %p84 = por %p82, %p83
      %p85 = scmp.ne.s32.totalorder %s71, %s72
      %p86 = scmp.eq.s32.totalorder %s26, 1
      %p87 = por %p85, %p86
      %p89 = scmp.ne.s32.totalorder %s72, %s88
      %p90 = scmp.eq.s32.totalorder %s26, 0
      %p91 = por %p89, %p90
      %s92 = ssub.s32 %s28, %s35
      %p93 = scmp.eq.s32.totalorder %s92, 0
      %s95 = sadd.s32 %s94, 1
      %s96 = scalar_select %p93, %s94, %s95
      %p99 = pneg %p93
      %p100 = scmp.eq.s32.totalorder %s20, 1
      %p101 = por %p99, %p100
      %p102 = scmp.ne.s32.totalorder %s94, %s97
      %p103 = scmp.eq.s32.totalorder %s20, 0
      %p104 = por %p102, %p103
      %p105 = scmp.ne.s32.totalorder %s94, %s97
      %p106 = scmp.eq.s32.totalorder %s25, 1
      %p107 = por %p105, %p106
      %p108 = scmp.ne.s32.totalorder %s97, %s98
      %p109 = scmp.eq.s32.totalorder %s25, 0
      %p110 = por %p108, %p109
      %p111 = scmp.ne.s32.totalorder %s97, %s98
      %p112 = scmp.eq.s32.totalorder %s26, 1
      %p113 = por %p111, %p112
      %p115 = scmp.ne.s32.totalorder %s98, %s114
      %p116 = scmp.eq.s32.totalorder %s26, 0
      %p117 = por %p115, %p116
      %s118 = ssub.s32 %s28, %s35
      %p119 = scmp.eq.s32.totalorder %s118, 0
      %s121 = sadd.s32 %s120, 1
      %s122 = scalar_select %p119, %s120, %s121
      %p125 = pneg %p119
      %p126 = scmp.eq.s32.totalorder %s20, 1
      %p127 = por %p125, %p126
      %p128 = scmp.ne.s32.totalorder %s120, %s123
      %p129 = scmp.eq.s32.totalorder %s20, 0
      %p130 = por %p128, %p129
      %p131 = scmp.ne.s32.totalorder %s120, %s123
      %p132 = scmp.eq.s32.totalorder %s25, 1
      %p133 = por %p131, %p132
      %p134 = scmp.ne.s32.totalorder %s123, %s124
      %p135 = scmp.eq.s32.totalorder %s25, 0
      %p136 = por %p134, %p135
      %p137 = scmp.ne.s32.totalorder %s123, %s124
      %p138 = scmp.eq.s32.totalorder %s26, 1
      %p139 = por %p137, %p138
      %p141 = scmp.ne.s32.totalorder %s124, %s140
      %p142 = scmp.eq.s32.totalorder %s26, 0
      %p143 = por %p141, %p142
      %s144 = ssub.s32 %s28, %s35
      %p145 = scmp.eq.s32.totalorder %s144, 0
      %s147 = sadd.s32 %s146, 1
      %s148 = scalar_select %p145, %s146, %s147
      %p151 = pneg %p145
      %p152 = scmp.eq.s32.totalorder %s20, 1
      %p153 = por %p151, %p152
      %p154 = scmp.ne.s32.totalorder %s146, %s149
      %p155 = scmp.eq.s32.totalorder %s20, 0
      %p156 = por %p154, %p155
      %p157 = scmp.ne.s32.totalorder %s146, %s149
      %p158 = scmp.eq.s32.totalorder %s25, 1
      %p159 = por %p157, %p158
      %p160 = scmp.ne.s32.totalorder %s149, %s150
      %p161 = scmp.eq.s32.totalorder %s25, 0
      %p162 = por %p160, %p161
      %p163 = scmp.ne.s32.totalorder %s149, %s150
      %p164 = scmp.eq.s32.totalorder %s26, 1
      %p165 = por %p163, %p164
      %p167 = scmp.ne.s32.totalorder %s150, %s166
      %p168 = scmp.eq.s32.totalorder %s26, 0
      %p169 = por %p167, %p168
      %s170 = ssub.s32 %s28, %s35
      %p171 = scmp.eq.s32.totalorder %s170, 0
      %s173 = sadd.s32 %s172, 1
      %s174 = scalar_select %p171, %s172, %s173
      %p177 = pneg %p171
      %p178 = scmp.eq.s32.totalorder %s20, 1
      %p179 = por %p177, %p178
      %p180 = scmp.ne.s32.totalorder %s172, %s175
      %p181 = scmp.eq.s32.totalorder %s20, 0
      %p182 = por %p180, %p181
      %p183 = scmp.ne.s32.totalorder %s172, %s175
      %p184 = scmp.eq.s32.totalorder %s25, 1
      %p185 = por %p183, %p184
      %p186 = scmp.ne.s32.totalorder %s175, %s176
      %p187 = scmp.eq.s32.totalorder %s25, 0
      %p188 = por %p186, %p187
      %p189 = scmp.ne.s32.totalorder %s175, %s176
      %p190 = scmp.eq.s32.totalorder %s26, 1
      %p191 = por %p189, %p190
      %p193 = scmp.ne.s32.totalorder %s176, %s192
      %p194 = scmp.eq.s32.totalorder %s26, 0
      %p195 = por %p193, %p194
      %s196 = ssub.s32 %s28, %s35
      %p197 = scmp.eq.s32.totalorder %s196, 0
      %s199 = sadd.s32 %s198, 1
      %s200 = scalar_select %p197, %s198, %s199
      %p203 = pneg %p197
      %p204 = scmp.eq.s32.totalorder %s20, 1
      %p205 = por %p203, %p204
      %p206 = scmp.ne.s32.totalorder %s198, %s201
      %p207 = scmp.eq.s32.totalorder %s20, 0
      %p208 = por %p206, %p207
      %p209 = scmp.ne.s32.totalorder %s198, %s201
      %p210 = scmp.eq.s32.totalorder %s25, 1
      %p211 = por %p209, %p210
      %p212 = scmp.ne.s32.totalorder %s201, %s202
      %p213 = scmp.eq.s32.totalorder %s25, 0
      %p214 = por %p212, %p213
      %p215 = scmp.ne.s32.totalorder %s201, %s202
      %p216 = scmp.eq.s32.totalorder %s26, 1
      %p217 = por %p215, %p216
      %p219 = scmp.ne.s32.totalorder %s202, %s218
      %p220 = scmp.eq.s32.totalorder %s26, 0
      %p221 = por %p219, %p220
      %s222 = ssub.s32 %s28, %s35
      %p223 = scmp.eq.s32.totalorder %s222, 0
      %s225 = sadd.s32 %s224, 1
      %s226 = scalar_select %p223, %s224, %s225
      %p229 = pneg %p223
      %p230 = scmp.eq.s32.totalorder %s20, 1
      %p231 = por %p229, %p230
      %p232 = scmp.ne.s32.totalorder %s224, %s227
      %p233 = scmp.eq.s32.totalorder %s20, 0
      %p234 = por %p232, %p233
      %p235 = scmp.ne.s32.totalorder %s224, %s227
      %p236 = scmp.eq.s32.totalorder %s25, 1
      %p237 = por %p235, %p236
      %p238 = scmp.ne.s32.totalorder %s227, %s228
      %p239 = scmp.eq.s32.totalorder %s25, 0
      %p240 = por %p238, %p239
      %p241 = scmp.ne.s32.totalorder %s227, %s228
      %p242 = scmp.eq.s32.totalorder %s26, 1
      %p243 = por %p241, %p242
      %p245 = scmp.ne.s32.totalorder %s228, %s244
      %p246 = scmp.eq.s32.totalorder %s26, 0
      %p247 = por %p245, %p246
      %s248 = ssub.s32 %s28, %s35
      %p249 = scmp.eq.s32.totalorder %s248, 0
      %s251 = sadd.s32 %s250, 1
      %s252 = scalar_select %p249, %s250, %s251
      %p255 = pneg %p249
      %p256 = scmp.eq.s32.totalorder %s20, 1
      %p257 = por %p255, %p256
      %p258 = scmp.ne.s32.totalorder %s250, %s253
      %p259 = scmp.eq.s32.totalorder %s20, 0
      %p260 = por %p258, %p259
      %p261 = scmp.ne.s32.totalorder %s250, %s253
      %p262 = scmp.eq.s32.totalorder %s25, 1
      %p263 = por %p261, %p262
      %p264 = scmp.ne.s32.totalorder %s253, %s254
      %p265 = scmp.eq.s32.totalorder %s25, 0
      %p266 = por %p264, %p265
      %p267 = scmp.ne.s32.totalorder %s253, %s254
      %p268 = scmp.eq.s32.totalorder %s26, 1
      %p269 = por %p267, %p268
      %p271 = scmp.ne.s32.totalorder %s254, %s270
      %p272 = scmp.eq.s32.totalorder %s26, 0
      %p273 = por %p271, %p272
      %s274 = ssub.s32 %s27, %s39
      %p275 = scmp.eq.s32.totalorder %s274, 0
      %s277 = sadd.s32 %s276, 1
      %s278 = scalar_select %p275, %s276, %s277
      %p281 = pneg %p275
      %p282 = scmp.eq.s32.totalorder %s20, 1
      %p283 = por %p281, %p282
      %p284 = scmp.ne.s32.totalorder %s276, %s279
      %p285 = scmp.eq.s32.totalorder %s20, 0
      %p286 = por %p284, %p285
      %p287 = scmp.ne.s32.totalorder %s276, %s279
      %p288 = scmp.eq.s32.totalorder %s25, 1
      %p289 = por %p287, %p288
      %p290 = scmp.ne.s32.totalorder %s279, %s280
      %p291 = scmp.eq.s32.totalorder %s25, 0
      %p292 = por %p290, %p291
      %p293 = scmp.ne.s32.totalorder %s279, %s280
      %p294 = scmp.eq.s32.totalorder %s26, 1
      %p295 = por %p293, %p294
      %p297 = scmp.ne.s32.totalorder %s280, %s296
      %p298 = scmp.eq.s32.totalorder %s26, 0
      %p299 = por %p297, %p298
      %s300 = ssub.s32 %s27, %s39
      %p301 = scmp.eq.s32.totalorder %s300, 0
      %s303 = sadd.s32 %s302, 1
      %s304 = scalar_select %p301, %s302, %s303
      %p307 = pneg %p301
      %p308 = scmp.eq.s32.totalorder %s20, 1
      %p309 = por %p307, %p308
      %p310 = scmp.ne.s32.totalorder %s302, %s305
      %p311 = scmp.eq.s32.totalorder %s20, 0
      %p312 = por %p310, %p311
      %p313 = scmp.ne.s32.totalorder %s302, %s305
      %p314 = scmp.eq.s32.totalorder %s25, 1
      %p315 = por %p313, %p314
      %p316 = scmp.ne.s32.totalorder %s305, %s306
      %p317 = scmp.eq.s32.totalorder %s25, 0
      %p318 = por %p316, %p317
      %p319 = scmp.ne.s32.totalorder %s305, %s306
      %p320 = scmp.eq.s32.totalorder %s26, 1
      %p321 = por %p319, %p320
      %p323 = scmp.ne.s32.totalorder %s306, %s322
      %p324 = scmp.eq.s32.totalorder %s26, 0
      %p325 = por %p323, %p324
      %p326 = scmp.le.s32.totalorder 1, %s20
      %p327 = scmp.lt.s32.totalorder %s20, 3
      %p328 = pnand %p326, %p327
      %p329 = pneg %p328
      // Predicated region
      $region9: #{tpu_custom_call.1} parent=5 // pred_check
        _
      $region10: #{tpu_custom_call.1} parent=5 // pred_check_branch
        %331 = sbr.rel (%p328) target = $region12
      $region11: #{tpu_custom_call.1} parent=5 // pred_region
        %s332 = ssub.s32 %s20, 1
        // Predicated region
        $region13: #{tpu_custom_call.1} parent=11 // pred_check
          %p333 = pneg %p58
        $region14: #{tpu_custom_call.1} parent=11 // pred_check_branch
          %335 = sbr.rel (%p333) target = $region16
        $region15: #{tpu_custom_call.1} parent=11 // pred_region
          %s336 = smul.u32 2, %s29
          %s338 = ssub.s32 256, 256
          %339 = vsyncadd [#allocation4], %s338
          %s340 = smul.addr %s336, 128
          %s341 = scalar_lea.hbm %s0, %s340
          %s342 = sshll.u32 [#allocation3], 4
          %s343 = int_to_ptr.vmem [resolvable:$true] %s342
          %348 = dma.hbm_to_vmem [thread:$0]  %s341, 256, %s343, [#allocation4], 128, 128, 8
        $region16: #{tpu_custom_call.1} parent=11 // pred_fallthru
          _
        // Predicated region
        $region17: #{tpu_custom_call.1} parent=11 // pred_check
          %p349 = pneg %p84
        $region18: #{tpu_custom_call.1} parent=11 // pred_check_branch
          %351 = sbr.rel (%p349) target = $region20
        $region19: #{tpu_custom_call.1} parent=11 // pred_region
          %s352 = smul.u32 2, %s29
          %p353 = scmp.lt.s32.totalorder %s352, 1
          %s354 = scalar_select %p353, %s352, 1
          %s355 = smul.addr %s354, 2
          %s356 = scalar_lea.vmem %s1, %s355
          %s357 = smul.u32 2, %s29
        $region20: #{tpu_custom_call.1} parent=11 // pred_fallthru
          _
      $region12: #{tpu_custom_call.1} parent=5 // pred_fallthru
        _
      %p358 = scmp.lt.s32.totalorder %s20, 2
      // Predicated region
      $region21: #{tpu_custom_call.1} parent=5 // pred_check
        %p359 = pneg %p358
      $region22: #{tpu_custom_call.1} parent=5 // pred_check_branch
        %361 = sbr.rel (%p359) target = $region24
      $region23: #{tpu_custom_call.1} parent=5 // pred_region
        // Predicated region
        $region25: #{tpu_custom_call.1} parent=23 // pred_check
          %p362 = pneg %p104
        $region26: #{tpu_custom_call.1} parent=23 // pred_check_branch
          %364 = sbr.rel (%p362) target = $region28
        $region27: #{tpu_custom_call.1} parent=23 // pred_region
          %p365 = scmp.lt.s32.totalorder %s28, 1
          %s366 = scalar_select %p365, %s28, 1
          %s367 = smul.addr %s366, 4
          %s368 = smul.addr %s367, 4
          %s369 = scalar_lea.vmem %s2, %s368
        $region28: #{tpu_custom_call.1} parent=23 // pred_fallthru
          _
        // Predicated region
        $region29: #{tpu_custom_call.1} parent=23 // pred_check
          %p370 = pneg %p130
        $region30: #{tpu_custom_call.1} parent=23 // pred_check_branch
          %372 = sbr.rel (%p370) target = $region32
        $region31: #{tpu_custom_call.1} parent=23 // pred_region
          %p373 = scmp.lt.s32.totalorder %s28, 1
          %s374 = scalar_select %p373, %s28, 1
          %s375 = smul.addr %s374, 4
          %s376 = smul.addr %s375, 4
          %s377 = scalar_lea.vmem %s3, %s376
        $region32: #{tpu_custom_call.1} parent=23 // pred_fallthru
          _
        // Predicated region
        $region33: #{tpu_custom_call.1} parent=23 // pred_check
          %p378 = pneg %p156
        $region34: #{tpu_custom_call.1} parent=23 // pred_check_branch
          %380 = sbr.rel (%p378) target = $region36
        $region35: #{tpu_custom_call.1} parent=23 // pred_region
          %p381 = scmp.lt.s32.totalorder %s28, 1
          %s382 = scalar_select %p381, %s28, 1
          %s383 = smul.addr %s382, 4
          %s384 = smul.addr %s383, 4
          %s385 = scalar_lea.vmem %s4, %s384
        $region36: #{tpu_custom_call.1} parent=23 // pred_fallthru
          _
        // Predicated region
        $region37: #{tpu_custom_call.1} parent=23 // pred_check
          %p386 = pneg %p182
        $region38: #{tpu_custom_call.1} parent=23 // pred_check_branch
          %388 = sbr.rel (%p386) target = $region40
        $region39: #{tpu_custom_call.1} parent=23 // pred_region
          %p389 = scmp.lt.s32.totalorder %s28, 1
          %s390 = scalar_select %p389, %s28, 1
          %s391 = smul.addr %s390, 8
          %s392 = smul.addr %s391, 4
          %s393 = scalar_lea.vmem %s5, %s392
        $region40: #{tpu_custom_call.1} parent=23 // pred_fallthru
          _
        // Predicated region
        $region41: #{tpu_custom_call.1} parent=23 // pred_check
          %p394 = pneg %p208
        $region42: #{tpu_custom_call.1} parent=23 // pred_check_branch
          %396 = sbr.rel (%p394) target = $region44
        $region43: #{tpu_custom_call.1} parent=23 // pred_region
          %p397 = scmp.lt.s32.totalorder %s28, 1
          %s398 = scalar_select %p397, %s28, 1
          %s399 = scalar_lea.vmem %s6, %s398
        $region44: #{tpu_custom_call.1} parent=23 // pred_fallthru
          _
        // Predicated region
        $region45: #{tpu_custom_call.1} parent=23 // pred_check
          %p400 = pneg %p234
        $region46: #{tpu_custom_call.1} parent=23 // pred_check_branch
          %402 = sbr.rel (%p400) target = $region48
        $region47: #{tpu_custom_call.1} parent=23 // pred_region
          %p403 = scmp.lt.s32.totalorder %s28, 1
          %s404 = scalar_select %p403, %s28, 1
          %s405 = scalar_lea.vmem %s7, %s404
        $region48: #{tpu_custom_call.1} parent=23 // pred_fallthru
          _
        // Predicated region
        $region49: #{tpu_custom_call.1} parent=23 // pred_check
          %p406 = pneg %p260
        $region50: #{tpu_custom_call.1} parent=23 // pred_check_branch
          %408 = sbr.rel (%p406) target = $region52
        $region51: #{tpu_custom_call.1} parent=23 // pred_region
          %p409 = scmp.lt.s32.totalorder %s28, 1
          %s410 = scalar_select %p409, %s28, 1
          %s411 = smul.addr %s410, 8
          %s412 = scalar_lea.vmem %s8, %s411
        $region52: #{tpu_custom_call.1} parent=23 // pred_fallthru
          _
      $region24: #{tpu_custom_call.1} parent=5 // pred_fallthru
        _
      %p413 = scmp.le.s32.totalorder 1, %s20
      %p414 = scmp.lt.s32.totalorder %s20, 3
      %p415 = pnand %p413, %p414
      %p416 = pneg %p415
      // Predicated region
      $region53: #{tpu_custom_call.1} parent=5 // pred_check
        _
      $region54: #{tpu_custom_call.1} parent=5 // pred_check_branch
        %418 = sbr.rel (%p415) target = $region56
      $region55: #{tpu_custom_call.1} parent=5 // pred_region
        %s419 = ssub.s32 %s20, 1
        // Predicated region
        $region57: #{tpu_custom_call.1} parent=55 // pred_check
          %p420 = pneg %p58
        $region58: #{tpu_custom_call.1} parent=55 // pred_check_branch
          %422 = sbr.rel (%p420) target = $region60
        $region59: #{tpu_custom_call.1} parent=55 // pred_region
          %423 = dma.done [#allocation4], 256
        $region60: #{tpu_custom_call.1} parent=55 // pred_fallthru
          _
        %p424 = pneg %p58
        %p425 = pneg %p55
        %s426 = smul.u32 2, %s29
        %p427 = scmp.lt.s32.totalorder %s426, 1
        %s428 = scalar_select %p427, %s426, 1
        %s429 = smul.addr %s428, 2
        %s430 = scalar_lea.vmem %s1, %s429
        %p431 = pneg %p84
        %p432 = pneg %p81
        %p433 = scmp.lt.s32.totalorder %s30, 1
        %s434 = scalar_select %p433, %s30, 1
        %s435 = smul.addr %s434, 4
        %s436 = smul.addr %s435, 4
        %s437 = scalar_lea.vmem %s2, %s436
        %p438 = pneg %p110
        %p439 = pneg %p107
        %p440 = scmp.lt.s32.totalorder %s30, 1
        %s441 = scalar_select %p440, %s30, 1
        %s442 = smul.addr %s441, 4
        %s443 = smul.addr %s442, 4
        %s444 = scalar_lea.vmem %s3, %s443
        %p445 = pneg %p136
        %p446 = pneg %p133
        %p447 = scmp.lt.s32.totalorder %s30, 1
        %s448 = scalar_select %p447, %s30, 1
        %s449 = smul.addr %s448, 4
        %s450 = smul.addr %s449, 4
        %s451 = scalar_lea.vmem %s4, %s450
        %p452 = pneg %p162
        %p453 = pneg %p159
        %p454 = scmp.lt.s32.totalorder %s30, 1
        %s455 = scalar_select %p454, %s30, 1
        %s456 = smul.addr %s455, 8
        %s457 = smul.addr %s456, 4
        %s458 = scalar_lea.vmem %s5, %s457
        %p459 = pneg %p188
        %p460 = pneg %p185
        %p461 = scmp.lt.s32.totalorder %s30, 1
        %s462 = scalar_select %p461, %s30, 1
        %s463 = scalar_lea.vmem %s6, %s462
        %p464 = pneg %p214
        %p465 = pneg %p211
        %p466 = scmp.lt.s32.totalorder %s30, 1
        %s467 = scalar_select %p466, %s30, 1
        %s468 = scalar_lea.vmem %s7, %s467
        %p469 = pneg %p240
        %p470 = pneg %p237
        %p471 = scmp.lt.s32.totalorder %s30, 1
        %s472 = scalar_select %p471, %s30, 1
        %s473 = smul.addr %s472, 8
        %s474 = scalar_lea.vmem %s8, %s473
        %p475 = pneg %p266
        %p476 = pneg %p263
        %p477 = pneg %p292
        %p478 = pneg %p289
        %p479 = pneg %p318
        %p480 = pneg %p315
        %s481 = smul.u32 2, %s29
        %s482 = smul.u32 2, %s29
        %p483 = scmp.lt.s32.totalorder %s482, 1
        %s484 = scalar_select %p483, %s482, 1
        %s485 = smul.addr %s484, 2
        %s486 = scalar_lea.vmem %s1, %s485
        %s487 = smul.u32 2, %s29
        %p488 = scmp.lt.s32.totalorder %s30, 1
        %s489 = scalar_select %p488, %s30, 1
        %s490 = smul.addr %s489, 4
        %s491 = smul.addr %s490, 4
        %s492 = scalar_lea.vmem %s2, %s491
        %p493 = scmp.lt.s32.totalorder %s30, 1
        %s494 = scalar_select %p493, %s30, 1
        %s495 = smul.addr %s494, 4
        %s496 = smul.addr %s495, 4
        %s497 = scalar_lea.vmem %s3, %s496
        %p498 = scmp.lt.s32.totalorder %s30, 1
        %s499 = scalar_select %p498, %s30, 1
        %s500 = smul.addr %s499, 4
        %s501 = smul.addr %s500, 4
        %s502 = scalar_lea.vmem %s4, %s501
        %p503 = scmp.lt.s32.totalorder %s30, 1
        %s504 = scalar_select %p503, %s30, 1
        %s505 = smul.addr %s504, 8
        %s506 = smul.addr %s505, 4
        %s507 = scalar_lea.vmem %s5, %s506
        %p508 = scmp.lt.s32.totalorder %s30, 1
        %s509 = scalar_select %p508, %s30, 1
        %s510 = scalar_lea.vmem %s6, %s509
        %p511 = scmp.lt.s32.totalorder %s30, 1
        %s512 = scalar_select %p511, %s30, 1
        %s513 = scalar_lea.vmem %s7, %s512
        %p514 = scmp.lt.s32.totalorder %s30, 1
        %s515 = scalar_select %p514, %s30, 1
        %s516 = smul.addr %s515, 8
        %s517 = scalar_lea.vmem %s8, %s516
        %s518 = smul.u32 2, %s29
        %s519 = smul.u32 2, %s29
        %p521 = scmp.eq.s32.totalorder %s30, 0
        // Predicated region
        $region61: #{tpu_custom_call.1} parent=55 // pred_check
          %p522 = pneg %p521
        $region62: #{tpu_custom_call.1} parent=55 // pred_check_branch
          %524 = sbr.rel (%p522) target = $region64
        $region63: #{tpu_custom_call.1} parent=55 // pred_region
          %v525 = vld [vmem:[#allocation3] sm:$0xff]
          %v526 = vld [vmem:[#allocation3 + $0x8] sm:$0xff]
          %vm527 = vcmask 261120
          %528 = vst.msk [vmem:[#allocation6] sm:$0xff] %vm527, %v525
          %529 = vst.msk [vmem:[#allocation6 + $0x8] sm:$0xff] %vm527, %v526
        $region64: #{tpu_custom_call.1} parent=55 // pred_fallthru
          _
        %v530 = vld [vmem:[#allocation6] sm:$0xff]
        %v531 = vld [vmem:[#allocation6 + $0x8] sm:$0xff]
        %v532 = vpack.c.bf16 %v531, %v530
        %v533 = vld [vmem:[%s486 + $0x1] sm:$0x1]
        %v534 = vld [vmem:[%s486 + $0x3] sm:$0x1]
        %v535 = vld [vmem:[%s517] sm:$0x3f]
        %v536 = vld [vmem:[%s492] sm:$0xf]
        %v537 = vld [vmem:[%s492 + $0x4] sm:$0xf]
        %v538 = vld [vmem:[%s492 + $0x8] sm:$0xf]
        %v539 = vld [vmem:[%s492 + $0xc] sm:$0xf]
        %v540 = vld [vmem:[%s510] sm:$0x1]
        %v542 = vlaneseq
        %v543 = vshrl.u32 %v542, 7
        %v544 = vsub.s32 0, %v543
        %v545 = vrot.slane %v540, %v544
        %v551 = vunpack.c.l.b16 %v536
        %v552 = vunpack.c.l.b16 %v537
        %v553 = vunpack.c.l.b16 %v538
        %v554 = vunpack.c.l.b16 %v539
        %v555 = vpack.c.b16 %v552, %v551
        %v556 = vpack.c.b16 %v554, %v553
        %vm559 = vcmask 261120
        %v561 = vsel %vm559, %v532, 0
        %563 = vmatprep.subr.bf16.mxu0 0
        %564 = vmatpush1.bf16.msra.mxu0 %v555
        %565 = vmatprep.subr.bf16.mxu0 0
        %566 = vmatpush1.bf16.msra.mxu0 %v556
        %567 = vmatprep.subr.bf16.mxu0 0
        %568 = vmatpush1.bf16.msra.mxu0 0
        %569 = vmatprep.subr.bf16.mxu0 0
        %570 = vmatpush1.bf16.msra.mxu0 0
        %571 = vmatprep.subr.bf16.mxu0 0
        %572 = vmatpush1.bf16.msra.mxu0 0
        %573 = vmatprep.subr.bf16.mxu0 0
        %574 = vmatpush1.bf16.msra.mxu0 0
        %575 = vmatprep.subr.bf16.mxu0 0
        %576 = vmatpush1.bf16.msra.mxu0 0
        %577 = vmatprep.subr.bf16.mxu0 0
        %578 = vmatpush1.bf16.msra.mxu0 0
        %579 = vmatprep.subr.bf16.mxu0 0
        %580 = vmatpush1.bf16.msra.mxu0 0
        %581 = vmatprep.subr.bf16.mxu0 0
        %582 = vmatpush1.bf16.msra.mxu0 0
        %583 = vmatprep.subr.bf16.mxu0 0
        %584 = vmatpush1.bf16.msra.mxu0 0
        %585 = vmatprep.subr.bf16.mxu0 0
        %586 = vmatpush1.bf16.msra.mxu0 0
        %587 = vmatprep.subr.bf16.mxu0 0
        %588 = vmatpush1.bf16.msra.mxu0 0
        %589 = vmatprep.subr.bf16.mxu0 0
        %590 = vmatpush1.bf16.msra.mxu0 0
        %591 = vmatprep.subr.bf16.mxu0 0
        %592 = vmatpush1.bf16.msra.mxu0 0
        %593 = vmatprep.subr.bf16.mxu0 0
        %594 = vmatpush1.bf16.msra.mxu0 0
        %595 = vmatprep.mubr.bf16.mxu0 0
        %596 = vmatmul.mubr.bf16.gmra.mrb[0].mxu0 %v561
        %v597 = vpop.f32.mrb[0].mxu0
        %v598 = vadd.f32 %v545, %v597
        %v599 = vpop.f32.mrb[0].mxu0
        %v600 = vpop.f32.mrb[0].mxu0
        %v601 = vadd.f32 %v545, %v600
        %v602 = vpop.f32.mrb[0].mxu0
        %603 = vdwg.mxu0
        %v604 = vpack.c.bf16 %v601, %v598
        %606 = vrot.lane.b32.xlu0 %v604, 120
        %v607 = vpop.permute.xlu0 %606
        %608 = vrot.lane.b32.xlu0 %v604, 112
        %v609 = vpop.permute.xlu0 %608
        %610 = vrot.lane.b32.xlu0 %v604, 104
        %v611 = vpop.permute.xlu0 %610
        %v614 = vpack.i.b16 %v607, %v604
        %v616 = vshrl.u32 %v604, 16
        %v617 = vshrl.u32 %v607, 16
        %v618 = vpack.i.b16 %v617, %v616
        %v622 = vpack.i.b16 %v611, %v609
        %v624 = vshrl.u32 %v609, 16
        %v625 = vshrl.u32 %v611, 16
        %v626 = vpack.i.b16 %v625, %v624
        %v629 = vpack.i.b16 0, 0
        %v631 = vshrl.u32 0, 16
        %v632 = vpack.i.b16 %v631, %v631
        %v634 = vcombine.high %v614, %v629
        %v636 = vunpack.c.l.s4 1983009808
        %v637 = vunpack.c.0.s8 %v636
        %v638 = vlaneseq
        %v639 = vshrl.u32 %v638, 7
        %v640 = vsub.s32 %v637, %v639
        %v641 = vrot.slane %v614, %v640
        %v643 = vunpack.c.l.s4 1983009808
        %v644 = vunpack.c.0.s8 %v643
        %v645 = vlaneseq
        %v646 = vshrl.u32 %v645, 7
        %v647 = vsub.s32 %v644, %v646
        %v648 = vrot.slane %v634, %v647
        %v649 = vcombine.high %v622, %v629
        %v651 = vunpack.c.l.s4 1983009808
        %v652 = vunpack.c.0.s8 %v651
        %v653 = vlaneseq
        %v654 = vshrl.u32 %v653, 7
        %v655 = vsub.s32 %v652, %v654
        %v656 = vrot.slane %v622, %v655
        %v658 = vunpack.c.l.s4 1983009808
        %v659 = vunpack.c.0.s8 %v658
        %v660 = vlaneseq
        %v661 = vshrl.u32 %v660, 7
        %v662 = vsub.s32 %v659, %v661
        %v663 = vrot.slane %v649, %v662
        %v664 = vcombine.low %v641, %v656
        %v665 = vcombine.high %v641, %v656
        %v667 = vunpack.c.l.s4 1934713408
        %v668 = vunpack.c.0.s8 %v667
        %v669 = vlaneseq
        %v670 = vshrl.u32 %v669, 7
        %v671 = vsub.s32 %v668, %v670
        %v672 = vrot.slane %v664, %v671
        %v674 = vunpack.c.l.s4 1934713408
        %v675 = vunpack.c.0.s8 %v674
        %v676 = vlaneseq
        %v677 = vshrl.u32 %v676, 7
        %v678 = vsub.s32 %v675, %v677
        %v679 = vrot.slane %v665, %v678
        %v680 = vcombine.low %v648, %v663
        %v681 = vcombine.high %v648, %v663
        %v683 = vunpack.c.l.s4 1934713408
        %v684 = vunpack.c.0.s8 %v683
        %v685 = vlaneseq
        %v686 = vshrl.u32 %v685, 7
        %v687 = vsub.s32 %v684, %v686
        %v688 = vrot.slane %v680, %v687
        %v690 = vunpack.c.l.s4 1934713408
        %v691 = vunpack.c.0.s8 %v690
        %v692 = vlaneseq
        %v693 = vshrl.u32 %v692, 7
        %v694 = vsub.s32 %v691, %v693
        %v695 = vrot.slane %v681, %v694
        %v696 = vcombine.high %v672, 0
        %v697 = vcombine.high %v679, 0
        %v698 = vcombine.high %v688, 0
        %v699 = vcombine.high %v695, 0
        %v700 = vcombine.high %v618, %v632
        %v702 = vunpack.c.l.s4 1983009808
        %v703 = vunpack.c.0.s8 %v702
        %v704 = vlaneseq
        %v705 = vshrl.u32 %v704, 7
        %v706 = vsub.s32 %v703, %v705
        %v707 = vrot.slane %v618, %v706
        %v709 = vunpack.c.l.s4 1983009808
        %v710 = vunpack.c.0.s8 %v709
        %v711 = vlaneseq
        %v712 = vshrl.u32 %v711, 7
        %v713 = vsub.s32 %v710, %v712
        %v714 = vrot.slane %v700, %v713
        %v715 = vcombine.high %v626, %v632
        %v717 = vunpack.c.l.s4 1983009808
        %v718 = vunpack.c.0.s8 %v717
        %v719 = vlaneseq
        %v720 = vshrl.u32 %v719, 7
        %v721 = vsub.s32 %v718, %v720
        %v722 = vrot.slane %v626, %v721
        %v724 = vunpack.c.l.s4 1983009808
        %v725 = vunpack.c.0.s8 %v724
        %v726 = vlaneseq
        %v727 = vshrl.u32 %v726, 7
        %v728 = vsub.s32 %v725, %v727
        %v729 = vrot.slane %v715, %v728
        %v730 = vcombine.low %v707, %v722
        %v731 = vcombine.high %v707, %v722
        %v733 = vunpack.c.l.s4 1934713408
        %v734 = vunpack.c.0.s8 %v733
        %v735 = vlaneseq
        %v736 = vshrl.u32 %v735, 7
        %v737 = vsub.s32 %v734, %v736
        %v738 = vrot.slane %v730, %v737
        %v740 = vunpack.c.l.s4 1934713408
        %v741 = vunpack.c.0.s8 %v740
        %v742 = vlaneseq
        %v743 = vshrl.u32 %v742, 7
        %v744 = vsub.s32 %v741, %v743
        %v745 = vrot.slane %v731, %v744
        %v746 = vcombine.low %v714, %v729
        %v747 = vcombine.high %v714, %v729
        %v749 = vunpack.c.l.s4 1934713408
        %v750 = vunpack.c.0.s8 %v749
        %v751 = vlaneseq
        %v752 = vshrl.u32 %v751, 7
        %v753 = vsub.s32 %v750, %v752
        %v754 = vrot.slane %v746, %v753
        %v756 = vunpack.c.l.s4 1934713408
        %v757 = vunpack.c.0.s8 %v756
        %v758 = vlaneseq
        %v759 = vshrl.u32 %v758, 7
        %v760 = vsub.s32 %v757, %v759
        %v761 = vrot.slane %v747, %v760
        %v762 = vcombine.high %v738, 0
        %v763 = vcombine.high %v745, 0
        %v764 = vcombine.high %v754, 0
        %v765 = vcombine.high %v761, 0
        %v766 = vcombine.low %v672, %v679
        %v768 = vunpack.c.l.s4 1983009808
        %v769 = vunpack.c.0.s8 %v768
        %v770 = vlaneseq
        %v771 = vshrl.u32 %v770, 7
        %v772 = vsub.s32 %v769, %v771
        %v773 = vrot.slane %v766, %v772
        %v774 = vcombine.low %v696, %v697
        %v776 = vunpack.c.l.s4 1983009808
        %v777 = vunpack.c.0.s8 %v776
        %v778 = vlaneseq
        %v779 = vshrl.u32 %v778, 7
        %v780 = vsub.s32 %v777, %v779
        %v781 = vrot.slane %v774, %v780
        %v782 = vcombine.low %v773, %v781
        %v784 = vunpack.c.l.s4 1934713408
        %v785 = vunpack.c.0.s8 %v784
        %v786 = vlaneseq
        %v787 = vshrl.u32 %v786, 7
        %v788 = vsub.s32 %v785, %v787
        %v789 = vrot.slane %v782, %v788
        %v790 = vcombine.high %v789, 0
        %v791 = vcombine.low %v738, %v745
        %v793 = vunpack.c.l.s4 1983009808
        %v794 = vunpack.c.0.s8 %v793
        %v795 = vlaneseq
        %v796 = vshrl.u32 %v795, 7
        %v797 = vsub.s32 %v794, %v796
        %v798 = vrot.slane %v791, %v797
        %v799 = vcombine.low %v762, %v763
        %v801 = vunpack.c.l.s4 1983009808
        %v802 = vunpack.c.0.s8 %v801
        %v803 = vlaneseq
        %v804 = vshrl.u32 %v803, 7
        %v805 = vsub.s32 %v802, %v804
        %v806 = vrot.slane %v799, %v805
        %v807 = vcombine.low %v798, %v806
        %v809 = vunpack.c.l.s4 1934713408
        %v810 = vunpack.c.0.s8 %v809
        %v811 = vlaneseq
        %v812 = vshrl.u32 %v811, 7
        %v813 = vsub.s32 %v810, %v812
        %v814 = vrot.slane %v807, %v813
        %v815 = vcombine.high %v814, 0
        %v816 = vcombine.low %v688, %v695
        %v818 = vunpack.c.l.s4 1983009808
        %v819 = vunpack.c.0.s8 %v818
        %v820 = vlaneseq
        %v821 = vshrl.u32 %v820, 7
        %v822 = vsub.s32 %v819, %v821
        %v823 = vrot.slane %v816, %v822
        %v824 = vcombine.low %v698, %v699
        %v826 = vunpack.c.l.s4 1983009808
        %v827 = vunpack.c.0.s8 %v826
        %v828 = vlaneseq
        %v829 = vshrl.u32 %v828, 7
        %v830 = vsub.s32 %v827, %v829
        %v831 = vrot.slane %v824, %v830
        %v832 = vcombine.low %v823, %v831
        %v834 = vunpack.c.l.s4 1934713408
        %v835 = vunpack.c.0.s8 %v834
        %v836 = vlaneseq
        %v837 = vshrl.u32 %v836, 7
        %v838 = vsub.s32 %v835, %v837
        %v839 = vrot.slane %v832, %v838
        %v840 = vcombine.high %v839, 0
        %v841 = vcombine.low %v754, %v761
        %v843 = vunpack.c.l.s4 1983009808
        %v844 = vunpack.c.0.s8 %v843
        %v845 = vlaneseq
        %v846 = vshrl.u32 %v845, 7
        %v847 = vsub.s32 %v844, %v846
        %v848 = vrot.slane %v841, %v847
        %v849 = vcombine.low %v764, %v765
        %v851 = vunpack.c.l.s4 1983009808
        %v852 = vunpack.c.0.s8 %v851
        %v853 = vlaneseq
        %v854 = vshrl.u32 %v853, 7
        %v855 = vsub.s32 %v852, %v854
        %v856 = vrot.slane %v849, %v855
        %v857 = vcombine.low %v848, %v856
        %v859 = vunpack.c.l.s4 1934713408
        %v860 = vunpack.c.0.s8 %v859
        %v861 = vlaneseq
        %v862 = vshrl.u32 %v861, 7
        %v863 = vsub.s32 %v860, %v862
        %v864 = vrot.slane %v857, %v863
        %v865 = vcombine.high %v864, 0
        %v868 = vpack.i.b16 %v814, %v789
        %v869 = vshrl.u32 %v789, 16
        %v870 = vshrl.u32 %v814, 16
        %v871 = vpack.i.b16 %v870, %v869
        %v874 = vpack.i.b16 %v815, %v790
        %v875 = vshrl.u32 %v790, 16
        %v876 = vshrl.u32 %v815, 16
        %v877 = vpack.i.b16 %v876, %v875
        %v880 = vpack.i.b16 %v864, %v839
        %v881 = vshrl.u32 %v839, 16
        %v882 = vshrl.u32 %v864, 16
        %v883 = vpack.i.b16 %v882, %v881
        %v886 = vpack.i.b16 %v865, %v840
        %v887 = vshrl.u32 %v840, 16
        %v888 = vshrl.u32 %v865, 16
        %v889 = vpack.i.b16 %v888, %v887
        %890 = vrot.lane.b32.xlu0 %v604, 96
        %v891 = vpop.permute.xlu0 %890
        %892 = vrot.lane.b32.xlu0 %v607, 96
        %v893 = vpop.permute.xlu0 %892
        %894 = vrot.lane.b32.xlu0 %v609, 96
        %v895 = vpop.permute.xlu0 %894
        %896 = vrot.lane.b32.xlu0 %v611, 96
        %v897 = vpop.permute.xlu0 %896
        %v900 = vpack.i.b16 %v893, %v891
        %v902 = vshrl.u32 %v891, 16
        %v903 = vshrl.u32 %v893, 16
        %v904 = vpack.i.b16 %v903, %v902
        %v908 = vpack.i.b16 %v897, %v895
        %v910 = vshrl.u32 %v895, 16
        %v911 = vshrl.u32 %v897, 16
        %v912 = vpack.i.b16 %v911, %v910
        %v914 = vcombine.high %v900, %v629
        %v916 = vunpack.c.l.s4 1983009808
        %v917 = vunpack.c.0.s8 %v916
        %v918 = vlaneseq
        %v919 = vshrl.u32 %v918, 7
        %v920 = vsub.s32 %v917, %v919
        %v921 = vrot.slane %v900, %v920
        %v923 = vunpack.c.l.s4 1983009808
        %v924 = vunpack.c.0.s8 %v923
        %v925 = vlaneseq
        %v926 = vshrl.u32 %v925, 7
        %v927 = vsub.s32 %v924, %v926
        %v928 = vrot.slane %v914, %v927
        %v929 = vcombine.high %v908, %v629
        %v931 = vunpack.c.l.s4 1983009808
        %v932 = vunpack.c.0.s8 %v931
        %v933 = vlaneseq
        %v934 = vshrl.u32 %v933, 7
        %v935 = vsub.s32 %v932, %v934
        %v936 = vrot.slane %v908, %v935
        %v938 = vunpack.c.l.s4 1983009808
        %v939 = vunpack.c.0.s8 %v938
        %v940 = vlaneseq
        %v941 = vshrl.u32 %v940, 7
        %v942 = vsub.s32 %v939, %v941
        %v943 = vrot.slane %v929, %v942
        %v944 = vcombine.low %v921, %v936
        %v945 = vcombine.high %v921, %v936
        %v947 = vunpack.c.l.s4 1934713408
        %v948 = vunpack.c.0.s8 %v947
        %v949 = vlaneseq
        %v950 = vshrl.u32 %v949, 7
        %v951 = vsub.s32 %v948, %v950
        %v952 = vrot.slane %v944, %v951
        %v954 = vunpack.c.l.s4 1934713408
        %v955 = vunpack.c.0.s8 %v954
        %v956 = vlaneseq
        %v957 = vshrl.u32 %v956, 7
        %v958 = vsub.s32 %v955, %v957
        %v959 = vrot.slane %v945, %v958
        %v960 = vcombine.low %v928, %v943
        %v961 = vcombine.high %v928, %v943
        %v963 = vunpack.c.l.s4 1934713408
        %v964 = vunpack.c.0.s8 %v963
        %v965 = vlaneseq
        %v966 = vshrl.u32 %v965, 7
        %v967 = vsub.s32 %v964, %v966
        %v968 = vrot.slane %v960, %v967
        %v970 = vunpack.c.l.s4 1934713408
        %v971 = vunpack.c.0.s8 %v970
        %v972 = vlaneseq
        %v973 = vshrl.u32 %v972, 7
        %v974 = vsub.s32 %v971, %v973
        %v975 = vrot.slane %v961, %v974
        %v976 = vcombine.high %v952, 0
        %v977 = vcombine.high %v959, 0
        %v978 = vcombine.high %v968, 0
        %v979 = vcombine.high %v975, 0
        %v980 = vcombine.high %v904, %v632
        %v982 = vunpack.c.l.s4 1983009808
        %v983 = vunpack.c.0.s8 %v982
        %v984 = vlaneseq
        %v985 = vshrl.u32 %v984, 7
        %v986 = vsub.s32 %v983, %v985
        %v987 = vrot.slane %v904, %v986
        %v989 = vunpack.c.l.s4 1983009808
        %v990 = vunpack.c.0.s8 %v989
        %v991 = vlaneseq
        %v992 = vshrl.u32 %v991, 7
        %v993 = vsub.s32 %v990, %v992
        %v994 = vrot.slane %v980, %v993
        %v995 = vcombine.high %v912, %v632
        %v997 = vunpack.c.l.s4 1983009808
        %v998 = vunpack.c.0.s8 %v997
        %v999 = vlaneseq
        %v1000 = vshrl.u32 %v999, 7
        %v1001 = vsub.s32 %v998, %v1000
        %v1002 = vrot.slane %v912, %v1001
        %v1004 = vunpack.c.l.s4 1983009808
        %v1005 = vunpack.c.0.s8 %v1004
        %v1006 = vlaneseq
        %v1007 = vshrl.u32 %v1006, 7
        %v1008 = vsub.s32 %v1005, %v1007
        %v1009 = vrot.slane %v995, %v1008
        %v1010 = vcombine.low %v987, %v1002
        %v1011 = vcombine.high %v987, %v1002
        %v1013 = vunpack.c.l.s4 1934713408
        %v1014 = vunpack.c.0.s8 %v1013
        %v1015 = vlaneseq
        %v1016 = vshrl.u32 %v1015, 7
        %v1017 = vsub.s32 %v1014, %v1016
        %v1018 = vrot.slane %v1010, %v1017
        %v1020 = vunpack.c.l.s4 1934713408
        %v1021 = vunpack.c.0.s8 %v1020
        %v1022 = vlaneseq
        %v1023 = vshrl.u32 %v1022, 7
        %v1024 = vsub.s32 %v1021, %v1023
        %v1025 = vrot.slane %v1011, %v1024
        %v1026 = vcombine.low %v994, %v1009
        %v1027 = vcombine.high %v994, %v1009
        %v1029 = vunpack.c.l.s4 1934713408
        %v1030 = vunpack.c.0.s8 %v1029
        %v1031 = vlaneseq
        %v1032 = vshrl.u32 %v1031, 7
        %v1033 = vsub.s32 %v1030, %v1032
        %v1034 = vrot.slane %v1026, %v1033
        %v1036 = vunpack.c.l.s4 1934713408
        %v1037 = vunpack.c.0.s8 %v1036
        %v1038 = vlaneseq
        %v1039 = vshrl.u32 %v1038, 7
        %v1040 = vsub.s32 %v1037, %v1039
        %v1041 = vrot.slane %v1027, %v1040
        %v1042 = vcombine.high %v1018, 0
        %v1043 = vcombine.high %v1025, 0
        %v1044 = vcombine.high %v1034, 0
        %v1045 = vcombine.high %v1041, 0
        %v1046 = vcombine.low %v952, %v959
        %v1048 = vunpack.c.l.s4 1983009808
        %v1049 = vunpack.c.0.s8 %v1048
        %v1050 = vlaneseq
        %v1051 = vshrl.u32 %v1050, 7
        %v1052 = vsub.s32 %v1049, %v1051
        %v1053 = vrot.slane %v1046, %v1052
        %v1054 = vcombine.low %v976, %v977
        %v1056 = vunpack.c.l.s4 1983009808
        %v1057 = vunpack.c.0.s8 %v1056
        %v1058 = vlaneseq
        %v1059 = vshrl.u32 %v1058, 7
        %v1060 = vsub.s32 %v1057, %v1059
        %v1061 = vrot.slane %v1054, %v1060
        %v1062 = vcombine.low %v1053, %v1061
        %v1064 = vunpack.c.l.s4 1934713408
        %v1065 = vunpack.c.0.s8 %v1064
        %v1066 = vlaneseq
        %v1067 = vshrl.u32 %v1066, 7
        %v1068 = vsub.s32 %v1065, %v1067
        %v1069 = vrot.slane %v1062, %v1068
        %v1070 = vcombine.high %v1069, 0
        %v1071 = vcombine.low %v1018, %v1025
        %v1073 = vunpack.c.l.s4 1983009808
        %v1074 = vunpack.c.0.s8 %v1073
        %v1075 = vlaneseq
        %v1076 = vshrl.u32 %v1075, 7
        %v1077 = vsub.s32 %v1074, %v1076
        %v1078 = vrot.slane %v1071, %v1077
        %v1079 = vcombine.low %v1042, %v1043
        %v1081 = vunpack.c.l.s4 1983009808
        %v1082 = vunpack.c.0.s8 %v1081
        %v1083 = vlaneseq
        %v1084 = vshrl.u32 %v1083, 7
        %v1085 = vsub.s32 %v1082, %v1084
        %v1086 = vrot.slane %v1079, %v1085
        %v1087 = vcombine.low %v1078, %v1086
        %v1089 = vunpack.c.l.s4 1934713408
        %v1090 = vunpack.c.0.s8 %v1089
        %v1091 = vlaneseq
        %v1092 = vshrl.u32 %v1091, 7
        %v1093 = vsub.s32 %v1090, %v1092
        %v1094 = vrot.slane %v1087, %v1093
        %v1095 = vcombine.high %v1094, 0
        %v1096 = vcombine.low %v968, %v975
        %v1098 = vunpack.c.l.s4 1983009808
        %v1099 = vunpack.c.0.s8 %v1098
        %v1100 = vlaneseq
        %v1101 = vshrl.u32 %v1100, 7
        %v1102 = vsub.s32 %v1099, %v1101
        %v1103 = vrot.slane %v1096, %v1102
        %v1104 = vcombine.low %v978, %v979
        %v1106 = vunpack.c.l.s4 1983009808
        %v1107 = vunpack.c.0.s8 %v1106
        %v1108 = vlaneseq
        %v1109 = vshrl.u32 %v1108, 7
        %v1110 = vsub.s32 %v1107, %v1109
        %v1111 = vrot.slane %v1104, %v1110
        %v1112 = vcombine.low %v1103, %v1111
        %v1114 = vunpack.c.l.s4 1934713408
        %v1115 = vunpack.c.0.s8 %v1114
        %v1116 = vlaneseq
        %v1117 = vshrl.u32 %v1116, 7
        %v1118 = vsub.s32 %v1115, %v1117
        %v1119 = vrot.slane %v1112, %v1118
        %v1120 = vcombine.high %v1119, 0
        %v1121 = vcombine.low %v1034, %v1041
        %v1123 = vunpack.c.l.s4 1983009808
        %v1124 = vunpack.c.0.s8 %v1123
        %v1125 = vlaneseq
        %v1126 = vshrl.u32 %v1125, 7
        %v1127 = vsub.s32 %v1124, %v1126
        %v1128 = vrot.slane %v1121, %v1127
        %v1129 = vcombine.low %v1044, %v1045
        %v1131 = vunpack.c.l.s4 1983009808
        %v1132 = vunpack.c.0.s8 %v1131
        %v1133 = vlaneseq
        %v1134 = vshrl.u32 %v1133, 7
        %v1135 = vsub.s32 %v1132, %v1134
        %v1136 = vrot.slane %v1129, %v1135
        %v1137 = vcombine.low %v1128, %v1136
        %v1139 = vunpack.c.l.s4 1934713408
        %v1140 = vunpack.c.0.s8 %v1139
        %v1141 = vlaneseq
        %v1142 = vshrl.u32 %v1141, 7
        %v1143 = vsub.s32 %v1140, %v1142
        %v1144 = vrot.slane %v1137, %v1143
        %v1145 = vcombine.high %v1144, 0
        %v1148 = vpack.i.b16 %v1094, %v1069
        %v1149 = vshrl.u32 %v1069, 16
        %v1150 = vshrl.u32 %v1094, 16
        %v1151 = vpack.i.b16 %v1150, %v1149
        %v1154 = vpack.i.b16 %v1095, %v1070
        %v1155 = vshrl.u32 %v1070, 16
        %v1156 = vshrl.u32 %v1095, 16
        %v1157 = vpack.i.b16 %v1156, %v1155
        %v1160 = vpack.i.b16 %v1144, %v1119
        %v1161 = vshrl.u32 %v1119, 16
        %v1162 = vshrl.u32 %v1144, 16
        %v1163 = vpack.i.b16 %v1162, %v1161
        %v1166 = vpack.i.b16 %v1145, %v1120
        %v1167 = vshrl.u32 %v1120, 16
        %v1168 = vshrl.u32 %v1145, 16
        %v1169 = vpack.i.b16 %v1168, %v1167
        %1170 = vrot.lane.b32.xlu0 %v604, 64
        %v1171 = vpop.permute.xlu0 %1170
        %1172 = vrot.lane.b32.xlu0 %v607, 64
        %v1173 = vpop.permute.xlu0 %1172
        %1174 = vrot.lane.b32.xlu0 %v609, 64
        %v1175 = vpop.permute.xlu0 %1174
        %1176 = vrot.lane.b32.xlu0 %v611, 64
        %v1177 = vpop.permute.xlu0 %1176
        %v1180 = vpack.i.b16 %v1173, %v1171
        %v1182 = vshrl.u32 %v1171, 16
        %v1183 = vshrl.u32 %v1173, 16
        %v1184 = vpack.i.b16 %v1183, %v1182
        %v1188 = vpack.i.b16 %v1177, %v1175
        %v1190 = vshrl.u32 %v1175, 16
        %v1191 = vshrl.u32 %v1177, 16
        %v1192 = vpack.i.b16 %v1191, %v1190
        %v1194 = vcombine.high %v1180, %v629
        %v1196 = vunpack.c.l.s4 1983009808
        %v1197 = vunpack.c.0.s8 %v1196
        %v1198 = vlaneseq
        %v1199 = vshrl.u32 %v1198, 7
        %v1200 = vsub.s32 %v1197, %v1199
        %v1201 = vrot.slane %v1180, %v1200
        %v1203 = vunpack.c.l.s4 1983009808
        %v1204 = vunpack.c.0.s8 %v1203
        %v1205 = vlaneseq
        %v1206 = vshrl.u32 %v1205, 7
        %v1207 = vsub.s32 %v1204, %v1206
        %v1208 = vrot.slane %v1194, %v1207
        %v1209 = vcombine.high %v1188, %v629
        %v1211 = vunpack.c.l.s4 1983009808
        %v1212 = vunpack.c.0.s8 %v1211
        %v1213 = vlaneseq
        %v1214 = vshrl.u32 %v1213, 7
        %v1215 = vsub.s32 %v1212, %v1214
        %v1216 = vrot.slane %v1188, %v1215
        %v1218 = vunpack.c.l.s4 1983009808
        %v1219 = vunpack.c.0.s8 %v1218
        %v1220 = vlaneseq
        %v1221 = vshrl.u32 %v1220, 7
        %v1222 = vsub.s32 %v1219, %v1221
        %v1223 = vrot.slane %v1209, %v1222
        %v1224 = vcombine.low %v1201, %v1216
        %v1225 = vcombine.high %v1201, %v1216
        %v1227 = vunpack.c.l.s4 1934713408
        %v1228 = vunpack.c.0.s8 %v1227
        %v1229 = vlaneseq
        %v1230 = vshrl.u32 %v1229, 7
        %v1231 = vsub.s32 %v1228, %v1230
        %v1232 = vrot.slane %v1224, %v1231
        %v1234 = vunpack.c.l.s4 1934713408
        %v1235 = vunpack.c.0.s8 %v1234
        %v1236 = vlaneseq
        %v1237 = vshrl.u32 %v1236, 7
        %v1238 = vsub.s32 %v1235, %v1237
        %v1239 = vrot.slane %v1225, %v1238
        %v1240 = vcombine.low %v1208, %v1223
        %v1241 = vcombine.high %v1208, %v1223
        %v1243 = vunpack.c.l.s4 1934713408
        %v1244 = vunpack.c.0.s8 %v1243
        %v1245 = vlaneseq
        %v1246 = vshrl.u32 %v1245, 7
        %v1247 = vsub.s32 %v1244, %v1246
        %v1248 = vrot.slane %v1240, %v1247
        %v1250 = vunpack.c.l.s4 1934713408
        %v1251 = vunpack.c.0.s8 %v1250
        %v1252 = vlaneseq
        %v1253 = vshrl.u32 %v1252, 7
        %v1254 = vsub.s32 %v1251, %v1253
        %v1255 = vrot.slane %v1241, %v1254
        %v1256 = vcombine.high %v1232, 0
        %v1257 = vcombine.high %v1239, 0
        %v1258 = vcombine.high %v1248, 0
        %v1259 = vcombine.high %v1255, 0
        %v1260 = vcombine.high %v1184, %v632
        %v1262 = vunpack.c.l.s4 1983009808
        %v1263 = vunpack.c.0.s8 %v1262
        %v1264 = vlaneseq
        %v1265 = vshrl.u32 %v1264, 7
        %v1266 = vsub.s32 %v1263, %v1265
        %v1267 = vrot.slane %v1184, %v1266
        %v1269 = vunpack.c.l.s4 1983009808
        %v1270 = vunpack.c.0.s8 %v1269
        %v1271 = vlaneseq
        %v1272 = vshrl.u32 %v1271, 7
        %v1273 = vsub.s32 %v1270, %v1272
        %v1274 = vrot.slane %v1260, %v1273
        %v1275 = vcombine.high %v1192, %v632
        %v1277 = vunpack.c.l.s4 1983009808
        %v1278 = vunpack.c.0.s8 %v1277
        %v1279 = vlaneseq
        %v1280 = vshrl.u32 %v1279, 7
        %v1281 = vsub.s32 %v1278, %v1280
        %v1282 = vrot.slane %v1192, %v1281
        %v1284 = vunpack.c.l.s4 1983009808
        %v1285 = vunpack.c.0.s8 %v1284
        %v1286 = vlaneseq
        %v1287 = vshrl.u32 %v1286, 7
        %v1288 = vsub.s32 %v1285, %v1287
        %v1289 = vrot.slane %v1275, %v1288
        %v1290 = vcombine.low %v1267, %v1282
        %v1291 = vcombine.high %v1267, %v1282
        %v1293 = vunpack.c.l.s4 1934713408
        %v1294 = vunpack.c.0.s8 %v1293
        %v1295 = vlaneseq
        %v1296 = vshrl.u32 %v1295, 7
        %v1297 = vsub.s32 %v1294, %v1296
        %v1298 = vrot.slane %v1290, %v1297
        %v1300 = vunpack.c.l.s4 1934713408
        %v1301 = vunpack.c.0.s8 %v1300
        %v1302 = vlaneseq
        %v1303 = vshrl.u32 %v1302, 7
        %v1304 = vsub.s32 %v1301, %v1303
        %v1305 = vrot.slane %v1291, %v1304
        %v1306 = vcombine.low %v1274, %v1289
        %v1307 = vcombine.high %v1274, %v1289
        %v1309 = vunpack.c.l.s4 1934713408
        %v1310 = vunpack.c.0.s8 %v1309
        %v1311 = vlaneseq
        %v1312 = vshrl.u32 %v1311, 7
        %v1313 = vsub.s32 %v1310, %v1312
        %v1314 = vrot.slane %v1306, %v1313
        %v1316 = vunpack.c.l.s4 1934713408
        %v1317 = vunpack.c.0.s8 %v1316
        %v1318 = vlaneseq
        %v1319 = vshrl.u32 %v1318, 7
        %v1320 = vsub.s32 %v1317, %v1319
        %v1321 = vrot.slane %v1307, %v1320
        %v1322 = vcombine.high %v1298, 0
        %v1323 = vcombine.high %v1305, 0
        %v1324 = vcombine.high %v1314, 0
        %v1325 = vcombine.high %v1321, 0
        %v1326 = vcombine.low %v1232, %v1239
        %v1328 = vunpack.c.l.s4 1983009808
        %v1329 = vunpack.c.0.s8 %v1328
        %v1330 = vlaneseq
        %v1331 = vshrl.u32 %v1330, 7
        %v1332 = vsub.s32 %v1329, %v1331
        %v1333 = vrot.slane %v1326, %v1332
        %v1334 = vcombine.low %v1256, %v1257
        %v1336 = vunpack.c.l.s4 1983009808
        %v1337 = vunpack.c.0.s8 %v1336
        %v1338 = vlaneseq
        %v1339 = vshrl.u32 %v1338, 7
        %v1340 = vsub.s32 %v1337, %v1339
        %v1341 = vrot.slane %v1334, %v1340
        %v1342 = vcombine.low %v1333, %v1341
        %v1344 = vunpack.c.l.s4 1934713408
        %v1345 = vunpack.c.0.s8 %v1344
        %v1346 = vlaneseq
        %v1347 = vshrl.u32 %v1346, 7
        %v1348 = vsub.s32 %v1345, %v1347
        %v1349 = vrot.slane %v1342, %v1348
        %v1350 = vcombine.high %v1349, 0
        %v1351 = vcombine.low %v1298, %v1305
        %v1353 = vunpack.c.l.s4 1983009808
        %v1354 = vunpack.c.0.s8 %v1353
        %v1355 = vlaneseq
        %v1356 = vshrl.u32 %v1355, 7
        %v1357 = vsub.s32 %v1354, %v1356
        %v1358 = vrot.slane %v1351, %v1357
        %v1359 = vcombine.low %v1322, %v1323
        %v1361 = vunpack.c.l.s4 1983009808
        %v1362 = vunpack.c.0.s8 %v1361
        %v1363 = vlaneseq
        %v1364 = vshrl.u32 %v1363, 7
        %v1365 = vsub.s32 %v1362, %v1364
        %v1366 = vrot.slane %v1359, %v1365
        %v1367 = vcombine.low %v1358, %v1366
        %v1369 = vunpack.c.l.s4 1934713408
        %v1370 = vunpack.c.0.s8 %v1369
        %v1371 = vlaneseq
        %v1372 = vshrl.u32 %v1371, 7
        %v1373 = vsub.s32 %v1370, %v1372
        %v1374 = vrot.slane %v1367, %v1373
        %v1375 = vcombine.high %v1374, 0
        %v1376 = vcombine.low %v1248, %v1255
        %v1378 = vunpack.c.l.s4 1983009808
        %v1379 = vunpack.c.0.s8 %v1378
        %v1380 = vlaneseq
        %v1381 = vshrl.u32 %v1380, 7
        %v1382 = vsub.s32 %v1379, %v1381
        %v1383 = vrot.slane %v1376, %v1382
        %v1384 = vcombine.low %v1258, %v1259
        %v1386 = vunpack.c.l.s4 1983009808
        %v1387 = vunpack.c.0.s8 %v1386
        %v1388 = vlaneseq
        %v1389 = vshrl.u32 %v1388, 7
        %v1390 = vsub.s32 %v1387, %v1389
        %v1391 = vrot.slane %v1384, %v1390
        %v1392 = vcombine.low %v1383, %v1391
        %v1394 = vunpack.c.l.s4 1934713408
        %v1395 = vunpack.c.0.s8 %v1394
        %v1396 = vlaneseq
        %v1397 = vshrl.u32 %v1396, 7
        %v1398 = vsub.s32 %v1395, %v1397
        %v1399 = vrot.slane %v1392, %v1398
        %v1400 = vcombine.high %v1399, 0
        %v1401 = vcombine.low %v1314, %v1321
        %v1403 = vunpack.c.l.s4 1983009808
        %v1404 = vunpack.c.0.s8 %v1403
        %v1405 = vlaneseq
        %v1406 = vshrl.u32 %v1405, 7
        %v1407 = vsub.s32 %v1404, %v1406
        %v1408 = vrot.slane %v1401, %v1407
        %v1409 = vcombine.low %v1324, %v1325
        %v1411 = vunpack.c.l.s4 1983009808
        %v1412 = vunpack.c.0.s8 %v1411
        %v1413 = vlaneseq
        %v1414 = vshrl.u32 %v1413, 7
        %v1415 = vsub.s32 %v1412, %v1414
        %v1416 = vrot.slane %v1409, %v1415
        %v1417 = vcombine.low %v1408, %v1416
        %v1419 = vunpack.c.l.s4 1934713408
        %v1420 = vunpack.c.0.s8 %v1419
        %v1421 = vlaneseq
        %v1422 = vshrl.u32 %v1421, 7
        %v1423 = vsub.s32 %v1420, %v1422
        %v1424 = vrot.slane %v1417, %v1423
        %v1425 = vcombine.high %v1424, 0
        %v1428 = vpack.i.b16 %v1374, %v1349
        %v1429 = vshrl.u32 %v1349, 16
        %v1430 = vshrl.u32 %v1374, 16
        %v1431 = vpack.i.b16 %v1430, %v1429
        %v1434 = vpack.i.b16 %v1375, %v1350
        %v1435 = vshrl.u32 %v1350, 16
        %v1436 = vshrl.u32 %v1375, 16
        %v1437 = vpack.i.b16 %v1436, %v1435
        %v1440 = vpack.i.b16 %v1424, %v1399
        %v1441 = vshrl.u32 %v1399, 16
        %v1442 = vshrl.u32 %v1424, 16
        %v1443 = vpack.i.b16 %v1442, %v1441
        %v1446 = vpack.i.b16 %v1425, %v1400
        %v1447 = vshrl.u32 %v1400, 16
        %v1448 = vshrl.u32 %v1425, 16
        %v1449 = vpack.i.b16 %v1448, %v1447
        %v1450 = vlaneseq
        %v1451 = vshrl.u32 %v1450, 7
        %v1452 = vsub.s32 0, %v1451
        %v1453 = vrot.slane %v533, %v1452
        %v1454 = vlaneseq
        %v1455 = vshrl.u32 %v1454, 7
        %v1456 = vsub.s32 0, %v1455
        %v1457 = vrot.slane %v534, %v1456
        %vm1458 = vcmask 64512
        %v1460 = vsel %vm1458, %v868, 0
        %v1463 = vsel %vm1458, %v1148, 0
        %1465 = vmatprep.subr.bf16.mxu0 0
        %1466 = vmatpush1.bf16.xpose.msra.mxu0 %v1463
        %1467 = vmatprep.subr.bf16.mxu0 0
        %1468 = vmatpush1.bf16.xpose.msra.mxu0 0
        %1469 = vmatprep.subr.bf16.mxu0 0
        %1470 = vmatpush1.bf16.xpose.msra.mxu0 0
        %1471 = vmatprep.subr.bf16.mxu0 0
        %1472 = vmatpush1.bf16.xpose.msra.mxu0 0
        %1473 = vmatprep.subr.bf16.mxu0 0
        %1474 = vmatpush1.bf16.xpose.msra.mxu0 0
        %1475 = vmatprep.subr.bf16.mxu0 0
        %1476 = vmatpush1.bf16.xpose.msra.mxu0 0
        %1477 = vmatprep.subr.bf16.mxu0 0
        %1478 = vmatpush1.bf16.xpose.msra.mxu0 0
        %1479 = vmatprep.subr.bf16.mxu0 0
        %1480 = vmatpush1.bf16.xpose.msra.mxu0 0
        %1481 = vmatprep.subr.bf16.mxu0 0
        %1482 = vmatpush1.bf16.xpose.msra.mxu0 0
        %1483 = vmatprep.subr.bf16.mxu0 0
        %1484 = vmatpush1.bf16.xpose.msra.mxu0 0
        %1485 = vmatprep.subr.bf16.mxu0 0
        %1486 = vmatpush1.bf16.xpose.msra.mxu0 0
        %1487 = vmatprep.subr.bf16.mxu0 0
        %1488 = vmatpush1.bf16.xpose.msra.mxu0 0
        %1489 = vmatprep.subr.bf16.mxu0 0
        %1490 = vmatpush1.bf16.xpose.msra.mxu0 0
        %1491 = vmatprep.subr.bf16.mxu0 0
        %1492 = vmatpush1.bf16.xpose.msra.mxu0 0
        %1493 = vmatprep.subr.bf16.mxu0 0
        %1494 = vmatpush1.bf16.xpose.msra.mxu0 0
        %1495 = vmatprep.subr.bf16.mxu0 0
        %1496 = vmatpush1.bf16.xpose.msra.mxu0 0
        %1497 = vmatprep.mubr.bf16.mxu0 0
        %1498 = vmatmul.mubr.bf16.gmra.mrb[0].mxu0 %v1460
        %v1499 = vpop.f32.mrb[0].mxu0
        %v1500 = vadd.f32 %v1453, %v1499
        %v1501 = vpop.f32.mrb[0].mxu0
        %v1502 = vpop.f32.mrb[0].mxu0
        %v1503 = vpop.f32.mrb[0].mxu0
        %1504 = vdwg.mxu0
        %v1506 = vsel %vm1458, %v871, 0
        %v1509 = vsel %vm1458, %v1151, 0
        %1511 = vmatprep.subr.bf16.mxu0 0
        %1512 = vmatpush1.bf16.xpose.msra.mxu0 %v1509
        %1513 = vmatprep.subr.bf16.mxu0 0
        %1514 = vmatpush1.bf16.xpose.msra.mxu0 0
        %1515 = vmatprep.subr.bf16.mxu0 0
        %1516 = vmatpush1.bf16.xpose.msra.mxu0 0
        %1517 = vmatprep.subr.bf16.mxu0 0
        %1518 = vmatpush1.bf16.xpose.msra.mxu0 0
        %1519 = vmatprep.subr.bf16.mxu0 0
        %1520 = vmatpush1.bf16.xpose.msra.mxu0 0
        %1521 = vmatprep.subr.bf16.mxu0 0
        %1522 = vmatpush1.bf16.xpose.msra.mxu0 0
        %1523 = vmatprep.subr.bf16.mxu0 0
        %1524 = vmatpush1.bf16.xpose.msra.mxu0 0
        %1525 = vmatprep.subr.bf16.mxu0 0
        %1526 = vmatpush1.bf16.xpose.msra.mxu0 0
        %1527 = vmatprep.subr.bf16.mxu0 0
        %1528 = vmatpush1.bf16.xpose.msra.mxu0 0
        %1529 = vmatprep.subr.bf16.mxu0 0
        %1530 = vmatpush1.bf16.xpose.msra.mxu0 0
        %1531 = vmatprep.subr.bf16.mxu0 0
        %1532 = vmatpush1.bf16.xpose.msra.mxu0 0
        %1533 = vmatprep.subr.bf16.mxu0 0
        %1534 = vmatpush1.bf16.xpose.msra.mxu0 0
        %1535 = vmatprep.subr.bf16.mxu0 0
        %1536 = vmatpush1.bf16.xpose.msra.mxu0 0
        %1537 = vmatprep.subr.bf16.mxu0 0
        %1538 = vmatpush1.bf16.xpose.msra.mxu0 0
        %1539 = vmatprep.subr.bf16.mxu0 0
        %1540 = vmatpush1.bf16.xpose.msra.mxu0 0
        %1541 = vmatprep.subr.bf16.mxu0 0
        %1542 = vmatpush1.bf16.xpose.msra.mxu0 0
        %1543 = vmatprep.mubr.bf16.mxu0 0
        %1544 = vmatmul.mubr.bf16.gmra.mrb[0].mxu0 %v1506
        %v1545 = vpop.f32.mrb[0].mxu0
        %v1546 = vadd.f32 %v1453, %v1545
        %v1547 = vpop.f32.mrb[0].mxu0
        %v1548 = vpop.f32.mrb[0].mxu0
        %v1549 = vpop.f32.mrb[0].mxu0
        %1550 = vdwg.mxu0
        %v1552 = vsel %vm1458, %v874, 0
        %v1555 = vsel %vm1458, %v1154, 0
        %1557 = vmatprep.subr.bf16.mxu0 0
        %1558 = vmatpush1.bf16.xpose.msra.mxu0 %v1555
        %1559 = vmatprep.subr.bf16.mxu0 0
        %1560 = vmatpush1.bf16.xpose.msra.mxu0 0
        %1561 = vmatprep.subr.bf16.mxu0 0
        %1562 = vmatpush1.bf16.xpose.msra.mxu0 0
        %1563 = vmatprep.subr.bf16.mxu0 0
        %1564 = vmatpush1.bf16.xpose.msra.mxu0 0
        %1565 = vmatprep.subr.bf16.mxu0 0
        %1566 = vmatpush1.bf16.xpose.msra.mxu0 0
        %1567 = vmatprep.subr.bf16.mxu0 0
        %1568 = vmatpush1.bf16.xpose.msra.mxu0 0
        %1569 = vmatprep.subr.bf16.mxu0 0
        %1570 = vmatpush1.bf16.xpose.msra.mxu0 0
        %1571 = vmatprep.subr.bf16.mxu0 0
        %1572 = vmatpush1.bf16.xpose.msra.mxu0 0
        %1573 = vmatprep.subr.bf16.mxu0 0
        %1574 = vmatpush1.bf16.xpose.msra.mxu0 0
        %1575 = vmatprep.subr.bf16.mxu0 0
        %1576 = vmatpush1.bf16.xpose.msra.mxu0 0
        %1577 = vmatprep.subr.bf16.mxu0 0
        %1578 = vmatpush1.bf16.xpose.msra.mxu0 0
        %1579 = vmatprep.subr.bf16.mxu0 0
        %1580 = vmatpush1.bf16.xpose.msra.mxu0 0
        %1581 = vmatprep.subr.bf16.mxu0 0
        %1582 = vmatpush1.bf16.xpose.msra.mxu0 0
        %1583 = vmatprep.subr.bf16.mxu0 0
        %1584 = vmatpush1.bf16.xpose.msra.mxu0 0
        %1585 = vmatprep.subr.bf16.mxu0 0
        %1586 = vmatpush1.bf16.xpose.msra.mxu0 0
        %1587 = vmatprep.subr.bf16.mxu0 0
        %1588 = vmatpush1.bf16.xpose.msra.mxu0 0
        %1589 = vmatprep.mubr.bf16.mxu0 0
        %1590 = vmatmul.mubr.bf16.gmra.mrb[0].mxu0 %v1552
        %v1591 = vpop.f32.mrb[0].mxu0
        %v1592 = vadd.f32 %v1453, %v1591
        %v1593 = vpop.f32.mrb[0].mxu0
        %v1594 = vpop.f32.mrb[0].mxu0
        %v1595 = vpop.f32.mrb[0].mxu0
        %1596 = vdwg.mxu0
        %v1598 = vsel %vm1458, %v877, 0
        %v1601 = vsel %vm1458, %v1157, 0
        %1603 = vmatprep.subr.bf16.mxu0 0
        %1604 = vmatpush1.bf16.xpose.msra.mxu0 %v1601
        %1605 = vmatprep.subr.bf16.mxu0 0
        %1606 = vmatpush1.bf16.xpose.msra.mxu0 0
        %1607 = vmatprep.subr.bf16.mxu0 0
        %1608 = vmatpush1.bf16.xpose.msra.mxu0 0
        %1609 = vmatprep.subr.bf16.mxu0 0
        %1610 = vmatpush1.bf16.xpose.msra.mxu0 0
        %1611 = vmatprep.subr.bf16.mxu0 0
        %1612 = vmatpush1.bf16.xpose.msra.mxu0 0
        %1613 = vmatprep.subr.bf16.mxu0 0
        %1614 = vmatpush1.bf16.xpose.msra.mxu0 0
        %1615 = vmatprep.subr.bf16.mxu0 0
        %1616 = vmatpush1.bf16.xpose.msra.mxu0 0
        %1617 = vmatprep.subr.bf16.mxu0 0
        %1618 = vmatpush1.bf16.xpose.msra.mxu0 0
        %1619 = vmatprep.subr.bf16.mxu0 0
        %1620 = vmatpush1.bf16.xpose.msra.mxu0 0
        %1621 = vmatprep.subr.bf16.mxu0 0
        %1622 = vmatpush1.bf16.xpose.msra.mxu0 0
        %1623 = vmatprep.subr.bf16.mxu0 0
        %1624 = vmatpush1.bf16.xpose.msra.mxu0 0
        %1625 = vmatprep.subr.bf16.mxu0 0
        %1626 = vmatpush1.bf16.xpose.msra.mxu0 0
        %1627 = vmatprep.subr.bf16.mxu0 0
        %1628 = vmatpush1.bf16.xpose.msra.mxu0 0
        %1629 = vmatprep.subr.bf16.mxu0 0
        %1630 = vmatpush1.bf16.xpose.msra.mxu0 0
        %1631 = vmatprep.subr.bf16.mxu0 0
        %1632 = vmatpush1.bf16.xpose.msra.mxu0 0
        %1633 = vmatprep.subr.bf16.mxu0 0
        %1634 = vmatpush1.bf16.xpose.msra.mxu0 0
        %1635 = vmatprep.mubr.bf16.mxu0 0
        %1636 = vmatmul.mubr.bf16.gmra.mrb[0].mxu0 %v1598
        %v1637 = vpop.f32.mrb[0].mxu0
        %v1638 = vadd.f32 %v1453, %v1637
        %v1639 = vpop.f32.mrb[0].mxu0
        %v1640 = vpop.f32.mrb[0].mxu0
        %v1641 = vpop.f32.mrb[0].mxu0
        %1642 = vdwg.mxu0
        %v1644 = vsel %vm1458, %v880, 0
        %v1647 = vsel %vm1458, %v1160, 0
        %1649 = vmatprep.subr.bf16.mxu0 0
        %1650 = vmatpush1.bf16.xpose.msra.mxu0 %v1647
        %1651 = vmatprep.subr.bf16.mxu0 0
        %1652 = vmatpush1.bf16.xpose.msra.mxu0 0
        %1653 = vmatprep.subr.bf16.mxu0 0
        %1654 = vmatpush1.bf16.xpose.msra.mxu0 0
        %1655 = vmatprep.subr.bf16.mxu0 0
        %1656 = vmatpush1.bf16.xpose.msra.mxu0 0
        %1657 = vmatprep.subr.bf16.mxu0 0
        %1658 = vmatpush1.bf16.xpose.msra.mxu0 0
        %1659 = vmatprep.subr.bf16.mxu0 0
        %1660 = vmatpush1.bf16.xpose.msra.mxu0 0
        %1661 = vmatprep.subr.bf16.mxu0 0
        %1662 = vmatpush1.bf16.xpose.msra.mxu0 0
        %1663 = vmatprep.subr.bf16.mxu0 0
        %1664 = vmatpush1.bf16.xpose.msra.mxu0 0
        %1665 = vmatprep.subr.bf16.mxu0 0
        %1666 = vmatpush1.bf16.xpose.msra.mxu0 0
        %1667 = vmatprep.subr.bf16.mxu0 0
        %1668 = vmatpush1.bf16.xpose.msra.mxu0 0
        %1669 = vmatprep.subr.bf16.mxu0 0
        %1670 = vmatpush1.bf16.xpose.msra.mxu0 0
        %1671 = vmatprep.subr.bf16.mxu0 0
        %1672 = vmatpush1.bf16.xpose.msra.mxu0 0
        %1673 = vmatprep.subr.bf16.mxu0 0
        %1674 = vmatpush1.bf16.xpose.msra.mxu0 0
        %1675 = vmatprep.subr.bf16.mxu0 0
        %1676 = vmatpush1.bf16.xpose.msra.mxu0 0
        %1677 = vmatprep.subr.bf16.mxu0 0
        %1678 = vmatpush1.bf16.xpose.msra.mxu0 0
        %1679 = vmatprep.subr.bf16.mxu0 0
        %1680 = vmatpush1.bf16.xpose.msra.mxu0 0
        %1681 = vmatprep.mubr.bf16.mxu0 0
        %1682 = vmatmul.mubr.bf16.gmra.mrb[0].mxu0 %v1644
        %v1683 = vpop.f32.mrb[0].mxu0
        %v1684 = vadd.f32 %v1457, %v1683
        %v1685 = vpop.f32.mrb[0].mxu0
        %v1686 = vpop.f32.mrb[0].mxu0
        %v1687 = vpop.f32.mrb[0].mxu0
        %1688 = vdwg.mxu0
        %v1690 = vsel %vm1458, %v883, 0
        %v1693 = vsel %vm1458, %v1163, 0
        %1695 = vmatprep.subr.bf16.mxu0 0
        %1696 = vmatpush1.bf16.xpose.msra.mxu0 %v1693
        %1697 = vmatprep.subr.bf16.mxu0 0
        %1698 = vmatpush1.bf16.xpose.msra.mxu0 0
        %1699 = vmatprep.subr.bf16.mxu0 0
        %1700 = vmatpush1.bf16.xpose.msra.mxu0 0
        %1701 = vmatprep.subr.bf16.mxu0 0
        %1702 = vmatpush1.bf16.xpose.msra.mxu0 0
        %1703 = vmatprep.subr.bf16.mxu0 0
        %1704 = vmatpush1.bf16.xpose.msra.mxu0 0
        %1705 = vmatprep.subr.bf16.mxu0 0
        %1706 = vmatpush1.bf16.xpose.msra.mxu0 0
        %1707 = vmatprep.subr.bf16.mxu0 0
        %1708 = vmatpush1.bf16.xpose.msra.mxu0 0
        %1709 = vmatprep.subr.bf16.mxu0 0
        %1710 = vmatpush1.bf16.xpose.msra.mxu0 0
        %1711 = vmatprep.subr.bf16.mxu0 0
        %1712 = vmatpush1.bf16.xpose.msra.mxu0 0
        %1713 = vmatprep.subr.bf16.mxu0 0
        %1714 = vmatpush1.bf16.xpose.msra.mxu0 0
        %1715 = vmatprep.subr.bf16.mxu0 0
        %1716 = vmatpush1.bf16.xpose.msra.mxu0 0
        %1717 = vmatprep.subr.bf16.mxu0 0
        %1718 = vmatpush1.bf16.xpose.msra.mxu0 0
        %1719 = vmatprep.subr.bf16.mxu0 0
        %1720 = vmatpush1.bf16.xpose.msra.mxu0 0
        %1721 = vmatprep.subr.bf16.mxu0 0
        %1722 = vmatpush1.bf16.xpose.msra.mxu0 0
        %1723 = vmatprep.subr.bf16.mxu0 0
        %1724 = vmatpush1.bf16.xpose.msra.mxu0 0
        %1725 = vmatprep.subr.bf16.mxu0 0
        %1726 = vmatpush1.bf16.xpose.msra.mxu0 0
        %1727 = vmatprep.mubr.bf16.mxu0 0
        %1728 = vmatmul.mubr.bf16.gmra.mrb[0].mxu0 %v1690
        %v1729 = vpop.f32.mrb[0].mxu0
        %v1730 = vadd.f32 %v1457, %v1729
        %v1731 = vpop.f32.mrb[0].mxu0
        %v1732 = vpop.f32.mrb[0].mxu0
        %v1733 = vpop.f32.mrb[0].mxu0
        %1734 = vdwg.mxu0
        %v1736 = vsel %vm1458, %v886, 0
        %v1739 = vsel %vm1458, %v1166, 0
        %1741 = vmatprep.subr.bf16.mxu0 0
        %1742 = vmatpush1.bf16.xpose.msra.mxu0 %v1739
        %1743 = vmatprep.subr.bf16.mxu0 0
        %1744 = vmatpush1.bf16.xpose.msra.mxu0 0
        %1745 = vmatprep.subr.bf16.mxu0 0
        %1746 = vmatpush1.bf16.xpose.msra.mxu0 0
        %1747 = vmatprep.subr.bf16.mxu0 0
        %1748 = vmatpush1.bf16.xpose.msra.mxu0 0
        %1749 = vmatprep.subr.bf16.mxu0 0
        %1750 = vmatpush1.bf16.xpose.msra.mxu0 0
        %1751 = vmatprep.subr.bf16.mxu0 0
        %1752 = vmatpush1.bf16.xpose.msra.mxu0 0
        %1753 = vmatprep.subr.bf16.mxu0 0
        %1754 = vmatpush1.bf16.xpose.msra.mxu0 0
        %1755 = vmatprep.subr.bf16.mxu0 0
        %1756 = vmatpush1.bf16.xpose.msra.mxu0 0
        %1757 = vmatprep.subr.bf16.mxu0 0
        %1758 = vmatpush1.bf16.xpose.msra.mxu0 0
        %1759 = vmatprep.subr.bf16.mxu0 0
        %1760 = vmatpush1.bf16.xpose.msra.mxu0 0
        %1761 = vmatprep.subr.bf16.mxu0 0
        %1762 = vmatpush1.bf16.xpose.msra.mxu0 0
        %1763 = vmatprep.subr.bf16.mxu0 0
        %1764 = vmatpush1.bf16.xpose.msra.mxu0 0
        %1765 = vmatprep.subr.bf16.mxu0 0
        %1766 = vmatpush1.bf16.xpose.msra.mxu0 0
        %1767 = vmatprep.subr.bf16.mxu0 0
        %1768 = vmatpush1.bf16.xpose.msra.mxu0 0
        %1769 = vmatprep.subr.bf16.mxu0 0
        %1770 = vmatpush1.bf16.xpose.msra.mxu0 0
        %1771 = vmatprep.subr.bf16.mxu0 0
        %1772 = vmatpush1.bf16.xpose.msra.mxu0 0
        %1773 = vmatprep.mubr.bf16.mxu0 0
        %1774 = vmatmul.mubr.bf16.gmra.mrb[0].mxu0 %v1736
        %v1775 = vpop.f32.mrb[0].mxu0
        %v1776 = vadd.f32 %v1457, %v1775
        %v1777 = vpop.f32.mrb[0].mxu0
        %v1778 = vpop.f32.mrb[0].mxu0
        %v1779 = vpop.f32.mrb[0].mxu0
        %1780 = vdwg.mxu0
        %v1782 = vsel %vm1458, %v889, 0
        %v1785 = vsel %vm1458, %v1169, 0
        %1787 = vmatprep.subr.bf16.mxu0 0
        %1788 = vmatpush1.bf16.xpose.msra.mxu0 %v1785
        %1789 = vmatprep.subr.bf16.mxu0 0
        %1790 = vmatpush1.bf16.xpose.msra.mxu0 0
        %1791 = vmatprep.subr.bf16.mxu0 0
        %1792 = vmatpush1.bf16.xpose.msra.mxu0 0
        %1793 = vmatprep.subr.bf16.mxu0 0
        %1794 = vmatpush1.bf16.xpose.msra.mxu0 0
        %1795 = vmatprep.subr.bf16.mxu0 0
        %1796 = vmatpush1.bf16.xpose.msra.mxu0 0
        %1797 = vmatprep.subr.bf16.mxu0 0
        %1798 = vmatpush1.bf16.xpose.msra.mxu0 0
        %1799 = vmatprep.subr.bf16.mxu0 0
        %1800 = vmatpush1.bf16.xpose.msra.mxu0 0
        %1801 = vmatprep.subr.bf16.mxu0 0
        %1802 = vmatpush1.bf16.xpose.msra.mxu0 0
        %1803 = vmatprep.subr.bf16.mxu0 0
        %1804 = vmatpush1.bf16.xpose.msra.mxu0 0
        %1805 = vmatprep.subr.bf16.mxu0 0
        %1806 = vmatpush1.bf16.xpose.msra.mxu0 0
        %1807 = vmatprep.subr.bf16.mxu0 0
        %1808 = vmatpush1.bf16.xpose.msra.mxu0 0
        %1809 = vmatprep.subr.bf16.mxu0 0
        %1810 = vmatpush1.bf16.xpose.msra.mxu0 0
        %1811 = vmatprep.subr.bf16.mxu0 0
        %1812 = vmatpush1.bf16.xpose.msra.mxu0 0
        %1813 = vmatprep.subr.bf16.mxu0 0
        %1814 = vmatpush1.bf16.xpose.msra.mxu0 0
        %1815 = vmatprep.subr.bf16.mxu0 0
        %1816 = vmatpush1.bf16.xpose.msra.mxu0 0
        %1817 = vmatprep.subr.bf16.mxu0 0
        %1818 = vmatpush1.bf16.xpose.msra.mxu0 0
        %1819 = vmatprep.mubr.bf16.mxu0 0
        %1820 = vmatmul.mubr.bf16.gmra.mrb[0].mxu0 %v1782
        %v1821 = vpop.f32.mrb[0].mxu0
        %v1822 = vadd.f32 %v1457, %v1821
        %v1823 = vpop.f32.mrb[0].mxu0
        %v1824 = vpop.f32.mrb[0].mxu0
        %v1825 = vpop.f32.mrb[0].mxu0
        %1826 = vdwg.mxu0
        %v1827 = vsel %vm1458, %v1500, -inf
        %1828 = vmax.xlane.f32.xlu0 %v1827
        %v1829 = vpop.xlane.xlu0 %1828
        %v1830 = vsel %vm1458, %v1546, -inf
        %1831 = vmax.xlane.f32.xlu0 %v1830
        %v1832 = vpop.xlane.xlu0 %1831
        %v1833 = vsel %vm1458, %v1592, -inf
        %1834 = vmax.xlane.f32.xlu0 %v1833
        %v1835 = vpop.xlane.xlu0 %1834
        %v1836 = vsel %vm1458, %v1638, -inf
        %1837 = vmax.xlane.f32.xlu0 %v1836
        %v1838 = vpop.xlane.xlu0 %1837
        %v1839 = vsel %vm1458, %v1684, -inf
        %1840 = vmax.xlane.f32.xlu0 %v1839
        %v1841 = vpop.xlane.xlu0 %1840
        %v1842 = vsel %vm1458, %v1730, -inf
        %1843 = vmax.xlane.f32.xlu0 %v1842
        %v1844 = vpop.xlane.xlu0 %1843
        %v1845 = vsel %vm1458, %v1776, -inf
        %1846 = vmax.xlane.f32.xlu0 %v1845
        %v1847 = vpop.xlane.xlu0 %1846
        %v1848 = vsel %vm1458, %v1822, -inf
        %1849 = vmax.xlane.f32.xlu0 %v1848
        %v1850 = vpop.xlane.xlu0 %1849
        %v1851 = vsub.f32 %v1500, %v1829
        %v1852 = vsub.f32 %v1546, %v1832
        %v1853 = vsub.f32 %v1592, %v1835
        %v1854 = vsub.f32 %v1638, %v1838
        %v1855 = vsub.f32 %v1684, %v1841
        %v1856 = vsub.f32 %v1730, %v1844
        %v1857 = vsub.f32 %v1776, %v1847
        %v1858 = vsub.f32 %v1822, %v1850
        %v1859 = vmul.f32 %v1851, 1.442695
        %v1860 = vpow.pop %v1859
        %v1861 = vmul.f32 %v1852, 1.442695
        %v1862 = vpow.pop %v1861
        %v1863 = vmul.f32 %v1853, 1.442695
        %v1864 = vpow.pop %v1863
        %v1865 = vmul.f32 %v1854, 1.442695
        %v1866 = vpow.pop %v1865
        %v1867 = vmul.f32 %v1855, 1.442695
        %v1868 = vpow.pop %v1867
        %v1869 = vmul.f32 %v1856, 1.442695
        %v1870 = vpow.pop %v1869
        %v1871 = vmul.f32 %v1857, 1.442695
        %v1872 = vpow.pop %v1871
        %v1873 = vmul.f32 %v1858, 1.442695
        %v1874 = vpow.pop %v1873
        %v1875 = vsel %vm1458, %v1860, 0.0
        %1876 = vadd.xlane.f32.xlu0 %v1875
        %v1877 = vpop.xlane.xlu0 %1876
        %v1878 = vsel %vm1458, %v1862, 0.0
        %1879 = vadd.xlane.f32.xlu0 %v1878
        %v1880 = vpop.xlane.xlu0 %1879
        %v1881 = vsel %vm1458, %v1864, 0.0
        %1882 = vadd.xlane.f32.xlu0 %v1881
        %v1883 = vpop.xlane.xlu0 %1882
        %v1884 = vsel %vm1458, %v1866, 0.0
        %1885 = vadd.xlane.f32.xlu0 %v1884
        %v1886 = vpop.xlane.xlu0 %1885
        %v1887 = vsel %vm1458, %v1868, 0.0
        %1888 = vadd.xlane.f32.xlu0 %v1887
        %v1889 = vpop.xlane.xlu0 %1888
        %v1890 = vsel %vm1458, %v1870, 0.0
        %1891 = vadd.xlane.f32.xlu0 %v1890
        %v1892 = vpop.xlane.xlu0 %1891
        %v1893 = vsel %vm1458, %v1872, 0.0
        %1894 = vadd.xlane.f32.xlu0 %v1893
        %v1895 = vpop.xlane.xlu0 %1894
        %v1896 = vsel %vm1458, %v1874, 0.0
        %1897 = vadd.xlane.f32.xlu0 %v1896
        %v1898 = vpop.xlane.xlu0 %1897
        %v1899 = vrcp.pop %v1877
        %v1900 = vrcp.pop %v1880
        %v1901 = vrcp.pop %v1883
        %v1902 = vrcp.pop %v1886
        %v1903 = vrcp.pop %v1889
        %v1904 = vrcp.pop %v1892
        %v1905 = vrcp.pop %v1895
        %v1906 = vrcp.pop %v1898
        %v1907 = vmul.f32 %v1860, %v1899
        %v1908 = vmul.f32 %v1862, %v1900
        %v1909 = vmul.f32 %v1864, %v1901
        %v1910 = vmul.f32 %v1866, %v1902
        %v1911 = vmul.f32 %v1868, %v1903
        %v1912 = vmul.f32 %v1870, %v1904
        %v1913 = vmul.f32 %v1872, %v1905
        %v1914 = vmul.f32 %v1874, %v1906
        %v1915 = vpack.c.bf16 %v1907, %v1907
        %v1916 = vpack.c.bf16 %v1908, %v1908
        %v1917 = vpack.c.bf16 %v1909, %v1909
        %v1918 = vpack.c.bf16 %v1910, %v1910
        %v1919 = vpack.c.bf16 %v1911, %v1911
        %v1920 = vpack.c.bf16 %v1912, %v1912
        %v1921 = vpack.c.bf16 %v1913, %v1913
        %v1922 = vpack.c.bf16 %v1914, %v1914
        %v1924 = vsel %vm1458, %v1915, 0
        %vm1926 = vcmask 1043456
        %v1928 = vsel %vm1926, %v1428, 0
        %1930 = vmatprep.subr.bf16.mxu0 0
        %1931 = vmatpush1.bf16.msra.mxu0 %v1928
        %1932 = vmatprep.subr.bf16.mxu0 0
        %1933 = vmatpush1.bf16.msra.mxu0 0
        %1934 = vmatprep.subr.bf16.mxu0 0
        %1935 = vmatpush1.bf16.msra.mxu0 0
        %1936 = vmatprep.subr.bf16.mxu0 0
        %1937 = vmatpush1.bf16.msra.mxu0 0
        %1938 = vmatprep.subr.bf16.mxu0 0
        %1939 = vmatpush1.bf16.msra.mxu0 0
        %1940 = vmatprep.subr.bf16.mxu0 0
        %1941 = vmatpush1.bf16.msra.mxu0 0
        %1942 = vmatprep.subr.bf16.mxu0 0
        %1943 = vmatpush1.bf16.msra.mxu0 0
        %1944 = vmatprep.subr.bf16.mxu0 0
        %1945 = vmatpush1.bf16.msra.mxu0 0
        %1946 = vmatprep.subr.bf16.mxu0 0
        %1947 = vmatpush1.bf16.msra.mxu0 0
        %1948 = vmatprep.subr.bf16.mxu0 0
        %1949 = vmatpush1.bf16.msra.mxu0 0
        %1950 = vmatprep.subr.bf16.mxu0 0
        %1951 = vmatpush1.bf16.msra.mxu0 0
        %1952 = vmatprep.subr.bf16.mxu0 0
        %1953 = vmatpush1.bf16.msra.mxu0 0
        %1954 = vmatprep.subr.bf16.mxu0 0
        %1955 = vmatpush1.bf16.msra.mxu0 0
        %1956 = vmatprep.subr.bf16.mxu0 0
        %1957 = vmatpush1.bf16.msra.mxu0 0
        %1958 = vmatprep.subr.bf16.mxu0 0
        %1959 = vmatpush1.bf16.msra.mxu0 0
        %1960 = vmatprep.subr.bf16.mxu0 0
        %1961 = vmatpush1.bf16.msra.mxu0 0
        %1962 = vmatprep.mubr.bf16.mxu0 0
        %1963 = vmatmul.mubr.bf16.gmra.mrb[0].mxu0 %v1924
        %v1964 = vpop.f32.mrb[0].mxu0
        %v1965 = vadd.f32 0.0, %v1964
        %v1966 = vpop.f32.mrb[0].mxu0
        %v1967 = vpop.f32.mrb[0].mxu0
        %v1968 = vpop.f32.mrb[0].mxu0
        %1969 = vdwg.mxu0
        %v1971 = vsel %vm1458, %v1916, 0
        %v1974 = vsel %vm1926, %v1431, 0
        %1976 = vmatprep.subr.bf16.mxu0 0
        %1977 = vmatpush1.bf16.msra.mxu0 %v1974
        %1978 = vmatprep.subr.bf16.mxu0 0
        %1979 = vmatpush1.bf16.msra.mxu0 0
        %1980 = vmatprep.subr.bf16.mxu0 0
        %1981 = vmatpush1.bf16.msra.mxu0 0
        %1982 = vmatprep.subr.bf16.mxu0 0
        %1983 = vmatpush1.bf16.msra.mxu0 0
        %1984 = vmatprep.subr.bf16.mxu0 0
        %1985 = vmatpush1.bf16.msra.mxu0 0
        %1986 = vmatprep.subr.bf16.mxu0 0
        %1987 = vmatpush1.bf16.msra.mxu0 0
        %1988 = vmatprep.subr.bf16.mxu0 0
        %1989 = vmatpush1.bf16.msra.mxu0 0
        %1990 = vmatprep.subr.bf16.mxu0 0
        %1991 = vmatpush1.bf16.msra.mxu0 0
        %1992 = vmatprep.subr.bf16.mxu0 0
        %1993 = vmatpush1.bf16.msra.mxu0 0
        %1994 = vmatprep.subr.bf16.mxu0 0
        %1995 = vmatpush1.bf16.msra.mxu0 0
        %1996 = vmatprep.subr.bf16.mxu0 0
        %1997 = vmatpush1.bf16.msra.mxu0 0
        %1998 = vmatprep.subr.bf16.mxu0 0
        %1999 = vmatpush1.bf16.msra.mxu0 0
        %2000 = vmatprep.subr.bf16.mxu0 0
        %2001 = vmatpush1.bf16.msra.mxu0 0
        %2002 = vmatprep.subr.bf16.mxu0 0
        %2003 = vmatpush1.bf16.msra.mxu0 0
        %2004 = vmatprep.subr.bf16.mxu0 0
        %2005 = vmatpush1.bf16.msra.mxu0 0
        %2006 = vmatprep.subr.bf16.mxu0 0
        %2007 = vmatpush1.bf16.msra.mxu0 0
        %2008 = vmatprep.mubr.bf16.mxu0 0
        %2009 = vmatmul.mubr.bf16.gmra.mrb[0].mxu0 %v1971
        %v2010 = vpop.f32.mrb[0].mxu0
        %v2011 = vadd.f32 0.0, %v2010
        %v2012 = vpop.f32.mrb[0].mxu0
        %v2013 = vpop.f32.mrb[0].mxu0
        %v2014 = vpop.f32.mrb[0].mxu0
        %2015 = vdwg.mxu0
        %v2017 = vsel %vm1458, %v1917, 0
        %v2020 = vsel %vm1926, %v1434, 0
        %2022 = vmatprep.subr.bf16.mxu0 0
        %2023 = vmatpush1.bf16.msra.mxu0 %v2020
        %2024 = vmatprep.subr.bf16.mxu0 0
        %2025 = vmatpush1.bf16.msra.mxu0 0
        %2026 = vmatprep.subr.bf16.mxu0 0
        %2027 = vmatpush1.bf16.msra.mxu0 0
        %2028 = vmatprep.subr.bf16.mxu0 0
        %2029 = vmatpush1.bf16.msra.mxu0 0
        %2030 = vmatprep.subr.bf16.mxu0 0
        %2031 = vmatpush1.bf16.msra.mxu0 0
        %2032 = vmatprep.subr.bf16.mxu0 0
        %2033 = vmatpush1.bf16.msra.mxu0 0
        %2034 = vmatprep.subr.bf16.mxu0 0
        %2035 = vmatpush1.bf16.msra.mxu0 0
        %2036 = vmatprep.subr.bf16.mxu0 0
        %2037 = vmatpush1.bf16.msra.mxu0 0
        %2038 = vmatprep.subr.bf16.mxu0 0
        %2039 = vmatpush1.bf16.msra.mxu0 0
        %2040 = vmatprep.subr.bf16.mxu0 0
        %2041 = vmatpush1.bf16.msra.mxu0 0
        %2042 = vmatprep.subr.bf16.mxu0 0
        %2043 = vmatpush1.bf16.msra.mxu0 0
        %2044 = vmatprep.subr.bf16.mxu0 0
        %2045 = vmatpush1.bf16.msra.mxu0 0
        %2046 = vmatprep.subr.bf16.mxu0 0
        %2047 = vmatpush1.bf16.msra.mxu0 0
        %2048 = vmatprep.subr.bf16.mxu0 0
        %2049 = vmatpush1.bf16.msra.mxu0 0
        %2050 = vmatprep.subr.bf16.mxu0 0
        %2051 = vmatpush1.bf16.msra.mxu0 0
        %2052 = vmatprep.subr.bf16.mxu0 0
        %2053 = vmatpush1.bf16.msra.mxu0 0
        %2054 = vmatprep.mubr.bf16.mxu0 0
        %2055 = vmatmul.mubr.bf16.gmra.mrb[0].mxu0 %v2017
        %v2056 = vpop.f32.mrb[0].mxu0
        %v2057 = vadd.f32 0.0, %v2056
        %v2058 = vpop.f32.mrb[0].mxu0
        %v2059 = vpop.f32.mrb[0].mxu0
        %v2060 = vpop.f32.mrb[0].mxu0
        %2061 = vdwg.mxu0
        %v2063 = vsel %vm1458, %v1918, 0
        %v2066 = vsel %vm1926, %v1437, 0
        %2068 = vmatprep.subr.bf16.mxu0 0
        %2069 = vmatpush1.bf16.msra.mxu0 %v2066
        %2070 = vmatprep.subr.bf16.mxu0 0
        %2071 = vmatpush1.bf16.msra.mxu0 0
        %2072 = vmatprep.subr.bf16.mxu0 0
        %2073 = vmatpush1.bf16.msra.mxu0 0
        %2074 = vmatprep.subr.bf16.mxu0 0
        %2075 = vmatpush1.bf16.msra.mxu0 0
        %2076 = vmatprep.subr.bf16.mxu0 0
        %2077 = vmatpush1.bf16.msra.mxu0 0
        %2078 = vmatprep.subr.bf16.mxu0 0
        %2079 = vmatpush1.bf16.msra.mxu0 0
        %2080 = vmatprep.subr.bf16.mxu0 0
        %2081 = vmatpush1.bf16.msra.mxu0 0
        %2082 = vmatprep.subr.bf16.mxu0 0
        %2083 = vmatpush1.bf16.msra.mxu0 0
        %2084 = vmatprep.subr.bf16.mxu0 0
        %2085 = vmatpush1.bf16.msra.mxu0 0
        %2086 = vmatprep.subr.bf16.mxu0 0
        %2087 = vmatpush1.bf16.msra.mxu0 0
        %2088 = vmatprep.subr.bf16.mxu0 0
        %2089 = vmatpush1.bf16.msra.mxu0 0
        %2090 = vmatprep.subr.bf16.mxu0 0
        %2091 = vmatpush1.bf16.msra.mxu0 0
        %2092 = vmatprep.subr.bf16.mxu0 0
        %2093 = vmatpush1.bf16.msra.mxu0 0
        %2094 = vmatprep.subr.bf16.mxu0 0
        %2095 = vmatpush1.bf16.msra.mxu0 0
        %2096 = vmatprep.subr.bf16.mxu0 0
        %2097 = vmatpush1.bf16.msra.mxu0 0
        %2098 = vmatprep.subr.bf16.mxu0 0
        %2099 = vmatpush1.bf16.msra.mxu0 0
        %2100 = vmatprep.mubr.bf16.mxu0 0
        %2101 = vmatmul.mubr.bf16.gmra.mrb[0].mxu0 %v2063
        %v2102 = vpop.f32.mrb[0].mxu0
        %v2103 = vadd.f32 0.0, %v2102
        %v2104 = vpop.f32.mrb[0].mxu0
        %v2105 = vpop.f32.mrb[0].mxu0
        %v2106 = vpop.f32.mrb[0].mxu0
        %2107 = vdwg.mxu0
        %v2109 = vsel %vm1458, %v1919, 0
        %v2112 = vsel %vm1926, %v1440, 0
        %2114 = vmatprep.subr.bf16.mxu0 0
        %2115 = vmatpush1.bf16.msra.mxu0 %v2112
        %2116 = vmatprep.subr.bf16.mxu0 0
        %2117 = vmatpush1.bf16.msra.mxu0 0
        %2118 = vmatprep.subr.bf16.mxu0 0
        %2119 = vmatpush1.bf16.msra.mxu0 0
        %2120 = vmatprep.subr.bf16.mxu0 0
        %2121 = vmatpush1.bf16.msra.mxu0 0
        %2122 = vmatprep.subr.bf16.mxu0 0
        %2123 = vmatpush1.bf16.msra.mxu0 0
        %2124 = vmatprep.subr.bf16.mxu0 0
        %2125 = vmatpush1.bf16.msra.mxu0 0
        %2126 = vmatprep.subr.bf16.mxu0 0
        %2127 = vmatpush1.bf16.msra.mxu0 0
        %2128 = vmatprep.subr.bf16.mxu0 0
        %2129 = vmatpush1.bf16.msra.mxu0 0
        %2130 = vmatprep.subr.bf16.mxu0 0
        %2131 = vmatpush1.bf16.msra.mxu0 0
        %2132 = vmatprep.subr.bf16.mxu0 0
        %2133 = vmatpush1.bf16.msra.mxu0 0
        %2134 = vmatprep.subr.bf16.mxu0 0
        %2135 = vmatpush1.bf16.msra.mxu0 0
        %2136 = vmatprep.subr.bf16.mxu0 0
        %2137 = vmatpush1.bf16.msra.mxu0 0
        %2138 = vmatprep.subr.bf16.mxu0 0
        %2139 = vmatpush1.bf16.msra.mxu0 0
        %2140 = vmatprep.subr.bf16.mxu0 0
        %2141 = vmatpush1.bf16.msra.mxu0 0
        %2142 = vmatprep.subr.bf16.mxu0 0
        %2143 = vmatpush1.bf16.msra.mxu0 0
        %2144 = vmatprep.subr.bf16.mxu0 0
        %2145 = vmatpush1.bf16.msra.mxu0 0
        %2146 = vmatprep.mubr.bf16.mxu0 0
        %2147 = vmatmul.mubr.bf16.gmra.mrb[0].mxu0 %v2109
        %v2148 = vpop.f32.mrb[0].mxu0
        %v2149 = vadd.f32 0.0, %v2148
        %v2150 = vpop.f32.mrb[0].mxu0
        %v2151 = vpop.f32.mrb[0].mxu0
        %v2152 = vpop.f32.mrb[0].mxu0
        %2153 = vdwg.mxu0
        %v2155 = vsel %vm1458, %v1920, 0
        %v2158 = vsel %vm1926, %v1443, 0
        %2160 = vmatprep.subr.bf16.mxu0 0
        %2161 = vmatpush1.bf16.msra.mxu0 %v2158
        %2162 = vmatprep.subr.bf16.mxu0 0
        %2163 = vmatpush1.bf16.msra.mxu0 0
        %2164 = vmatprep.subr.bf16.mxu0 0
        %2165 = vmatpush1.bf16.msra.mxu0 0
        %2166 = vmatprep.subr.bf16.mxu0 0
        %2167 = vmatpush1.bf16.msra.mxu0 0
        %2168 = vmatprep.subr.bf16.mxu0 0
        %2169 = vmatpush1.bf16.msra.mxu0 0
        %2170 = vmatprep.subr.bf16.mxu0 0
        %2171 = vmatpush1.bf16.msra.mxu0 0
        %2172 = vmatprep.subr.bf16.mxu0 0
        %2173 = vmatpush1.bf16.msra.mxu0 0
        %2174 = vmatprep.subr.bf16.mxu0 0
        %2175 = vmatpush1.bf16.msra.mxu0 0
        %2176 = vmatprep.subr.bf16.mxu0 0
        %2177 = vmatpush1.bf16.msra.mxu0 0
        %2178 = vmatprep.subr.bf16.mxu0 0
        %2179 = vmatpush1.bf16.msra.mxu0 0
        %2180 = vmatprep.subr.bf16.mxu0 0
        %2181 = vmatpush1.bf16.msra.mxu0 0
        %2182 = vmatprep.subr.bf16.mxu0 0
        %2183 = vmatpush1.bf16.msra.mxu0 0
        %2184 = vmatprep.subr.bf16.mxu0 0
        %2185 = vmatpush1.bf16.msra.mxu0 0
        %2186 = vmatprep.subr.bf16.mxu0 0
        %2187 = vmatpush1.bf16.msra.mxu0 0
        %2188 = vmatprep.subr.bf16.mxu0 0
        %2189 = vmatpush1.bf16.msra.mxu0 0
        %2190 = vmatprep.subr.bf16.mxu0 0
        %2191 = vmatpush1.bf16.msra.mxu0 0
        %2192 = vmatprep.mubr.bf16.mxu0 0
        %2193 = vmatmul.mubr.bf16.gmra.mrb[0].mxu0 %v2155
        %v2194 = vpop.f32.mrb[0].mxu0
        %v2195 = vadd.f32 0.0, %v2194
        %v2196 = vpop.f32.mrb[0].mxu0
        %v2197 = vpop.f32.mrb[0].mxu0
        %v2198 = vpop.f32.mrb[0].mxu0
        %2199 = vdwg.mxu0
        %v2201 = vsel %vm1458, %v1921, 0
        %v2204 = vsel %vm1926, %v1446, 0
        %2206 = vmatprep.subr.bf16.mxu0 0
        %2207 = vmatpush1.bf16.msra.mxu0 %v2204
        %2208 = vmatprep.subr.bf16.mxu0 0
        %2209 = vmatpush1.bf16.msra.mxu0 0
        %2210 = vmatprep.subr.bf16.mxu0 0
        %2211 = vmatpush1.bf16.msra.mxu0 0
        %2212 = vmatprep.subr.bf16.mxu0 0
        %2213 = vmatpush1.bf16.msra.mxu0 0
        %2214 = vmatprep.subr.bf16.mxu0 0
        %2215 = vmatpush1.bf16.msra.mxu0 0
        %2216 = vmatprep.subr.bf16.mxu0 0
        %2217 = vmatpush1.bf16.msra.mxu0 0
        %2218 = vmatprep.subr.bf16.mxu0 0
        %2219 = vmatpush1.bf16.msra.mxu0 0
        %2220 = vmatprep.subr.bf16.mxu0 0
        %2221 = vmatpush1.bf16.msra.mxu0 0
        %2222 = vmatprep.subr.bf16.mxu0 0
        %2223 = vmatpush1.bf16.msra.mxu0 0
        %2224 = vmatprep.subr.bf16.mxu0 0
        %2225 = vmatpush1.bf16.msra.mxu0 0
        %2226 = vmatprep.subr.bf16.mxu0 0
        %2227 = vmatpush1.bf16.msra.mxu0 0
        %2228 = vmatprep.subr.bf16.mxu0 0
        %2229 = vmatpush1.bf16.msra.mxu0 0
        %2230 = vmatprep.subr.bf16.mxu0 0
        %2231 = vmatpush1.bf16.msra.mxu0 0
        %2232 = vmatprep.subr.bf16.mxu0 0
        %2233 = vmatpush1.bf16.msra.mxu0 0
        %2234 = vmatprep.subr.bf16.mxu0 0
        %2235 = vmatpush1.bf16.msra.mxu0 0
        %2236 = vmatprep.subr.bf16.mxu0 0
        %2237 = vmatpush1.bf16.msra.mxu0 0
        %2238 = vmatprep.mubr.bf16.mxu0 0
        %2239 = vmatmul.mubr.bf16.gmra.mrb[0].mxu0 %v2201
        %v2240 = vpop.f32.mrb[0].mxu0
        %v2241 = vadd.f32 0.0, %v2240
        %v2242 = vpop.f32.mrb[0].mxu0
        %v2243 = vpop.f32.mrb[0].mxu0
        %v2244 = vpop.f32.mrb[0].mxu0
        %2245 = vdwg.mxu0
        %v2247 = vsel %vm1458, %v1922, 0
        %v2250 = vsel %vm1926, %v1449, 0
        %2252 = vmatprep.subr.bf16.mxu0 0
        %2253 = vmatpush1.bf16.msra.mxu0 %v2250
        %2254 = vmatprep.subr.bf16.mxu0 0
        %2255 = vmatpush1.bf16.msra.mxu0 0
        %2256 = vmatprep.subr.bf16.mxu0 0
        %2257 = vmatpush1.bf16.msra.mxu0 0
        %2258 = vmatprep.subr.bf16.mxu0 0
        %2259 = vmatpush1.bf16.msra.mxu0 0
        %2260 = vmatprep.subr.bf16.mxu0 0
        %2261 = vmatpush1.bf16.msra.mxu0 0
        %2262 = vmatprep.subr.bf16.mxu0 0
        %2263 = vmatpush1.bf16.msra.mxu0 0
        %2264 = vmatprep.subr.bf16.mxu0 0
        %2265 = vmatpush1.bf16.msra.mxu0 0
        %2266 = vmatprep.subr.bf16.mxu0 0
        %2267 = vmatpush1.bf16.msra.mxu0 0
        %2268 = vmatprep.subr.bf16.mxu0 0
        %2269 = vmatpush1.bf16.msra.mxu0 0
        %2270 = vmatprep.subr.bf16.mxu0 0
        %2271 = vmatpush1.bf16.msra.mxu0 0
        %2272 = vmatprep.subr.bf16.mxu0 0
        %2273 = vmatpush1.bf16.msra.mxu0 0
        %2274 = vmatprep.subr.bf16.mxu0 0
        %2275 = vmatpush1.bf16.msra.mxu0 0
        %2276 = vmatprep.subr.bf16.mxu0 0
        %2277 = vmatpush1.bf16.msra.mxu0 0
        %2278 = vmatprep.subr.bf16.mxu0 0
        %2279 = vmatpush1.bf16.msra.mxu0 0
        %2280 = vmatprep.subr.bf16.mxu0 0
        %2281 = vmatpush1.bf16.msra.mxu0 0
        %2282 = vmatprep.subr.bf16.mxu0 0
        %2283 = vmatpush1.bf16.msra.mxu0 0
        %2284 = vmatprep.mubr.bf16.mxu0 0
        %2285 = vmatmul.mubr.bf16.gmra.mrb[0].mxu0 %v2247
        %v2286 = vpop.f32.mrb[0].mxu0
        %v2287 = vadd.f32 0.0, %v2286
        %v2288 = vpop.f32.mrb[0].mxu0
        %v2289 = vpop.f32.mrb[0].mxu0
        %v2290 = vpop.f32.mrb[0].mxu0
        %2291 = vdwg.mxu0
        %v2292 = vcombine.low %v1965, %v2057
        %v2293 = vcombine.high %v1965, %v2057
        %v2295 = vunpack.c.l.s4 1983009808
        %v2296 = vunpack.c.0.s8 %v2295
        %v2297 = vlaneseq
        %v2298 = vshrl.u32 %v2297, 7
        %v2299 = vsub.s32 %v2296, %v2298
        %v2300 = vrot.slane %v2292, %v2299
        %v2302 = vunpack.c.l.s4 1983009808
        %v2303 = vunpack.c.0.s8 %v2302
        %v2304 = vlaneseq
        %v2305 = vshrl.u32 %v2304, 7
        %v2306 = vsub.s32 %v2303, %v2305
        %v2307 = vrot.slane %v2293, %v2306
        %v2308 = vcombine.low %v2011, %v2103
        %v2309 = vcombine.high %v2011, %v2103
        %v2311 = vunpack.c.l.s4 1983009808
        %v2312 = vunpack.c.0.s8 %v2311
        %v2313 = vlaneseq
        %v2314 = vshrl.u32 %v2313, 7
        %v2315 = vsub.s32 %v2312, %v2314
        %v2316 = vrot.slane %v2308, %v2315
        %v2318 = vunpack.c.l.s4 1983009808
        %v2319 = vunpack.c.0.s8 %v2318
        %v2320 = vlaneseq
        %v2321 = vshrl.u32 %v2320, 7
        %v2322 = vsub.s32 %v2319, %v2321
        %v2323 = vrot.slane %v2309, %v2322
        %v2324 = vcombine.low %v2300, %v2316
        %v2325 = vcombine.high %v2300, %v2316
        %v2327 = vunpack.c.l.s4 1934713408
        %v2328 = vunpack.c.0.s8 %v2327
        %v2329 = vlaneseq
        %v2330 = vshrl.u32 %v2329, 7
        %v2331 = vsub.s32 %v2328, %v2330
        %v2332 = vrot.slane %v2324, %v2331
        %v2334 = vunpack.c.l.s4 1934713408
        %v2335 = vunpack.c.0.s8 %v2334
        %v2336 = vlaneseq
        %v2337 = vshrl.u32 %v2336, 7
        %v2338 = vsub.s32 %v2335, %v2337
        %v2339 = vrot.slane %v2325, %v2338
        %v2340 = vcombine.low %v2307, %v2323
        %v2341 = vcombine.high %v2307, %v2323
        %v2343 = vunpack.c.l.s4 1934713408
        %v2344 = vunpack.c.0.s8 %v2343
        %v2345 = vlaneseq
        %v2346 = vshrl.u32 %v2345, 7
        %v2347 = vsub.s32 %v2344, %v2346
        %v2348 = vrot.slane %v2340, %v2347
        %v2350 = vunpack.c.l.s4 1934713408
        %v2351 = vunpack.c.0.s8 %v2350
        %v2352 = vlaneseq
        %v2353 = vshrl.u32 %v2352, 7
        %v2354 = vsub.s32 %v2351, %v2353
        %v2355 = vrot.slane %v2341, %v2354
        %v2356 = vcombine.high %v2332, 0.0
        %v2357 = vcombine.high %v2339, 0.0
        %v2358 = vcombine.high %v2348, 0.0
        %v2359 = vcombine.high %v2355, 0.0
        %v2360 = vcombine.low %v2149, %v2241
        %v2361 = vcombine.high %v2149, %v2241
        %v2363 = vunpack.c.l.s4 1983009808
        %v2364 = vunpack.c.0.s8 %v2363
        %v2365 = vlaneseq
        %v2366 = vshrl.u32 %v2365, 7
        %v2367 = vsub.s32 %v2364, %v2366
        %v2368 = vrot.slane %v2360, %v2367
        %v2370 = vunpack.c.l.s4 1983009808
        %v2371 = vunpack.c.0.s8 %v2370
        %v2372 = vlaneseq
        %v2373 = vshrl.u32 %v2372, 7
        %v2374 = vsub.s32 %v2371, %v2373
        %v2375 = vrot.slane %v2361, %v2374
        %v2376 = vcombine.low %v2195, %v2287
        %v2377 = vcombine.high %v2195, %v2287
        %v2379 = vunpack.c.l.s4 1983009808
        %v2380 = vunpack.c.0.s8 %v2379
        %v2381 = vlaneseq
        %v2382 = vshrl.u32 %v2381, 7
        %v2383 = vsub.s32 %v2380, %v2382
        %v2384 = vrot.slane %v2376, %v2383
        %v2386 = vunpack.c.l.s4 1983009808
        %v2387 = vunpack.c.0.s8 %v2386
        %v2388 = vlaneseq
        %v2389 = vshrl.u32 %v2388, 7
        %v2390 = vsub.s32 %v2387, %v2389
        %v2391 = vrot.slane %v2377, %v2390
        %v2392 = vcombine.low %v2368, %v2384
        %v2393 = vcombine.high %v2368, %v2384
        %v2395 = vunpack.c.l.s4 1934713408
        %v2396 = vunpack.c.0.s8 %v2395
        %v2397 = vlaneseq
        %v2398 = vshrl.u32 %v2397, 7
        %v2399 = vsub.s32 %v2396, %v2398
        %v2400 = vrot.slane %v2392, %v2399
        %v2402 = vunpack.c.l.s4 1934713408
        %v2403 = vunpack.c.0.s8 %v2402
        %v2404 = vlaneseq
        %v2405 = vshrl.u32 %v2404, 7
        %v2406 = vsub.s32 %v2403, %v2405
        %v2407 = vrot.slane %v2393, %v2406
        %v2408 = vcombine.low %v2375, %v2391
        %v2409 = vcombine.high %v2375, %v2391
        %v2411 = vunpack.c.l.s4 1934713408
        %v2412 = vunpack.c.0.s8 %v2411
        %v2413 = vlaneseq
        %v2414 = vshrl.u32 %v2413, 7
        %v2415 = vsub.s32 %v2412, %v2414
        %v2416 = vrot.slane %v2408, %v2415
        %v2418 = vunpack.c.l.s4 1934713408
        %v2419 = vunpack.c.0.s8 %v2418
        %v2420 = vlaneseq
        %v2421 = vshrl.u32 %v2420, 7
        %v2422 = vsub.s32 %v2419, %v2421
        %v2423 = vrot.slane %v2409, %v2422
        %v2424 = vcombine.high %v2400, 0.0
        %v2425 = vcombine.high %v2407, 0.0
        %v2426 = vcombine.high %v2416, 0.0
        %v2427 = vcombine.high %v2423, 0.0
        %v2428 = vcombine.low %v2332, %v2339
        %v2430 = vunpack.c.l.s4 1983009808
        %v2431 = vunpack.c.0.s8 %v2430
        %v2432 = vlaneseq
        %v2433 = vshrl.u32 %v2432, 7
        %v2434 = vsub.s32 %v2431, %v2433
        %v2435 = vrot.slane %v2428, %v2434
        %v2436 = vcombine.low %v2356, %v2357
        %v2438 = vunpack.c.l.s4 1983009808
        %v2439 = vunpack.c.0.s8 %v2438
        %v2440 = vlaneseq
        %v2441 = vshrl.u32 %v2440, 7
        %v2442 = vsub.s32 %v2439, %v2441
        %v2443 = vrot.slane %v2436, %v2442
        %v2444 = vcombine.low %v2348, %v2355
        %v2446 = vunpack.c.l.s4 1983009808
        %v2447 = vunpack.c.0.s8 %v2446
        %v2448 = vlaneseq
        %v2449 = vshrl.u32 %v2448, 7
        %v2450 = vsub.s32 %v2447, %v2449
        %v2451 = vrot.slane %v2444, %v2450
        %v2452 = vcombine.low %v2358, %v2359
        %v2454 = vunpack.c.l.s4 1983009808
        %v2455 = vunpack.c.0.s8 %v2454
        %v2456 = vlaneseq
        %v2457 = vshrl.u32 %v2456, 7
        %v2458 = vsub.s32 %v2455, %v2457
        %v2459 = vrot.slane %v2452, %v2458
        %v2460 = vcombine.low %v2435, %v2443
        %v2461 = vcombine.high %v2435, %v2443
        %v2463 = vunpack.c.l.s4 1934713408
        %v2464 = vunpack.c.0.s8 %v2463
        %v2465 = vlaneseq
        %v2466 = vshrl.u32 %v2465, 7
        %v2467 = vsub.s32 %v2464, %v2466
        %v2468 = vrot.slane %v2460, %v2467
        %v2470 = vunpack.c.l.s4 1934713408
        %v2471 = vunpack.c.0.s8 %v2470
        %v2472 = vlaneseq
        %v2473 = vshrl.u32 %v2472, 7
        %v2474 = vsub.s32 %v2471, %v2473
        %v2475 = vrot.slane %v2461, %v2474
        %v2476 = vcombine.low %v2451, %v2459
        %v2477 = vcombine.high %v2451, %v2459
        %v2479 = vunpack.c.l.s4 1934713408
        %v2480 = vunpack.c.0.s8 %v2479
        %v2481 = vlaneseq
        %v2482 = vshrl.u32 %v2481, 7
        %v2483 = vsub.s32 %v2480, %v2482
        %v2484 = vrot.slane %v2476, %v2483
        %v2486 = vunpack.c.l.s4 1934713408
        %v2487 = vunpack.c.0.s8 %v2486
        %v2488 = vlaneseq
        %v2489 = vshrl.u32 %v2488, 7
        %v2490 = vsub.s32 %v2487, %v2489
        %v2491 = vrot.slane %v2477, %v2490
        %v2492 = vcombine.low %v2468, %v2484
        %v2493 = vcombine.high %v2468, %v2484
        %v2494 = vcombine.low %v2475, %v2491
        %v2495 = vcombine.high %v2475, %v2491
        %v2496 = vcombine.low %v2400, %v2407
        %v2498 = vunpack.c.l.s4 1983009808
        %v2499 = vunpack.c.0.s8 %v2498
        %v2500 = vlaneseq
        %v2501 = vshrl.u32 %v2500, 7
        %v2502 = vsub.s32 %v2499, %v2501
        %v2503 = vrot.slane %v2496, %v2502
        %v2504 = vcombine.low %v2424, %v2425
        %v2506 = vunpack.c.l.s4 1983009808
        %v2507 = vunpack.c.0.s8 %v2506
        %v2508 = vlaneseq
        %v2509 = vshrl.u32 %v2508, 7
        %v2510 = vsub.s32 %v2507, %v2509
        %v2511 = vrot.slane %v2504, %v2510
        %v2512 = vcombine.low %v2416, %v2423
        %v2514 = vunpack.c.l.s4 1983009808
        %v2515 = vunpack.c.0.s8 %v2514
        %v2516 = vlaneseq
        %v2517 = vshrl.u32 %v2516, 7
        %v2518 = vsub.s32 %v2515, %v2517
        %v2519 = vrot.slane %v2512, %v2518
        %v2520 = vcombine.low %v2426, %v2427
        %v2522 = vunpack.c.l.s4 1983009808
        %v2523 = vunpack.c.0.s8 %v2522
        %v2524 = vlaneseq
        %v2525 = vshrl.u32 %v2524, 7
        %v2526 = vsub.s32 %v2523, %v2525
        %v2527 = vrot.slane %v2520, %v2526
        %v2528 = vcombine.low %v2503, %v2511
        %v2529 = vcombine.high %v2503, %v2511
        %v2531 = vunpack.c.l.s4 1934713408
        %v2532 = vunpack.c.0.s8 %v2531
        %v2533 = vlaneseq
        %v2534 = vshrl.u32 %v2533, 7
        %v2535 = vsub.s32 %v2532, %v2534
        %v2536 = vrot.slane %v2528, %v2535
        %v2538 = vunpack.c.l.s4 1934713408
        %v2539 = vunpack.c.0.s8 %v2538
        %v2540 = vlaneseq
        %v2541 = vshrl.u32 %v2540, 7
        %v2542 = vsub.s32 %v2539, %v2541
        %v2543 = vrot.slane %v2529, %v2542
        %v2544 = vcombine.low %v2519, %v2527
        %v2545 = vcombine.high %v2519, %v2527
        %v2547 = vunpack.c.l.s4 1934713408
        %v2548 = vunpack.c.0.s8 %v2547
        %v2549 = vlaneseq
        %v2550 = vshrl.u32 %v2549, 7
        %v2551 = vsub.s32 %v2548, %v2550
        %v2552 = vrot.slane %v2544, %v2551
        %v2554 = vunpack.c.l.s4 1934713408
        %v2555 = vunpack.c.0.s8 %v2554
        %v2556 = vlaneseq
        %v2557 = vshrl.u32 %v2556, 7
        %v2558 = vsub.s32 %v2555, %v2557
        %v2559 = vrot.slane %v2545, %v2558
        %v2560 = vcombine.low %v2536, %v2552
        %v2561 = vcombine.high %v2536, %v2552
        %v2562 = vcombine.low %v2543, %v2559
        %v2563 = vcombine.high %v2543, %v2559
        %2566 = vrot.lane.b32.xlu0 %v2493, 8
        %v2567 = vpop.permute.xlu0 %2566
        %2568 = vrot.lane.b32.xlu0 %v2561, 8
        %v2569 = vpop.permute.xlu0 %2568
        %2574 = vrot.lane.b32.xlu0 %v2494, 16
        %v2575 = vpop.permute.xlu0 %2574
        %2576 = vrot.lane.b32.xlu0 %v2562, 16
        %v2577 = vpop.permute.xlu0 %2576
        %2582 = vrot.lane.b32.xlu0 %v2495, 24
        %v2583 = vpop.permute.xlu0 %2582
        %2584 = vrot.lane.b32.xlu0 %v2563, 24
        %v2585 = vpop.permute.xlu0 %2584
        %v2588 = vsel %vm1458, %v2492, %v2567
        %v2589 = vsel %vm1458, %v2560, %v2569
        %vm2590 = vcmask 130048
        %v2591 = vsel %vm2590, %v2588, %v2575
        %v2592 = vsel %vm2590, %v2589, %v2577
        %vm2593 = vcmask 195584
        %v2594 = vsel %vm2593, %v2591, %v2583
        %v2595 = vsel %vm2593, %v2592, %v2585
        %v2596 = vpack.c.bf16 %v2594, %v2594
        %v2597 = vpack.c.bf16 %v2595, %v2595
        %vm2598 = vcmask 257024
        %2599 = vst.msk [vmem:[#allocation2] sm:$0xf] %vm2598, %v2596
        %2600 = vst.msk [vmem:[#allocation2 + $0x4] sm:$0xf] %vm2598, %v2597
        %v2601 = vld [vmem:[#allocation2] sm:$0xf]
        %v2602 = vld [vmem:[#allocation2 + $0x4] sm:$0xf]
        %v2603 = vld [vmem:[%s497] sm:$0xf]
        %v2604 = vld [vmem:[%s497 + $0x4] sm:$0xf]
        %v2605 = vld [vmem:[%s497 + $0x8] sm:$0xf]
        %v2606 = vld [vmem:[%s497 + $0xc] sm:$0xf]
        %v2607 = vlaneseq
        %v2608 = vshrl.u32 %v2607, 7
        %v2609 = vsub.s32 0, %v2608
        %v2610 = vrot.slane %v535, %v2609
        %v2613 = vunpack.c.l.b16 %v2601
        %v2614 = vunpack.c.l.b16 %v2602
        %v2615 = vpack.c.b16 %v2614, %v2613
        %v2620 = vunpack.c.l.b16 %v2603
        %v2621 = vunpack.c.l.b16 %v2604
        %v2622 = vunpack.c.l.b16 %v2605
        %v2623 = vunpack.c.l.b16 %v2606
        %v2624 = vpack.c.b16 %v2621, %v2620
        %v2625 = vpack.c.b16 %v2623, %v2622
        %v2629 = vsel %vm559, %v2615, 0
        %2631 = vmatprep.subr.bf16.mxu0 0
        %2632 = vmatpush1.bf16.msra.mxu0 %v2624
        %2633 = vmatprep.subr.bf16.mxu0 0
        %2634 = vmatpush1.bf16.msra.mxu0 %v2625
        %2635 = vmatprep.subr.bf16.mxu0 0
        %2636 = vmatpush1.bf16.msra.mxu0 0
        %2637 = vmatprep.subr.bf16.mxu0 0
        %2638 = vmatpush1.bf16.msra.mxu0 0
        %2639 = vmatprep.subr.bf16.mxu0 0
        %2640 = vmatpush1.bf16.msra.mxu0 0
        %2641 = vmatprep.subr.bf16.mxu0 0
        %2642 = vmatpush1.bf16.msra.mxu0 0
        %2643 = vmatprep.subr.bf16.mxu0 0
        %2644 = vmatpush1.bf16.msra.mxu0 0
        %2645 = vmatprep.subr.bf16.mxu0 0
        %2646 = vmatpush1.bf16.msra.mxu0 0
        %2647 = vmatprep.subr.bf16.mxu0 0
        %2648 = vmatpush1.bf16.msra.mxu0 0
        %2649 = vmatprep.subr.bf16.mxu0 0
        %2650 = vmatpush1.bf16.msra.mxu0 0
        %2651 = vmatprep.subr.bf16.mxu0 0
        %2652 = vmatpush1.bf16.msra.mxu0 0
        %2653 = vmatprep.subr.bf16.mxu0 0
        %2654 = vmatpush1.bf16.msra.mxu0 0
        %2655 = vmatprep.subr.bf16.mxu0 0
        %2656 = vmatpush1.bf16.msra.mxu0 0
        %2657 = vmatprep.subr.bf16.mxu0 0
        %2658 = vmatpush1.bf16.msra.mxu0 0
        %2659 = vmatprep.subr.bf16.mxu0 0
        %2660 = vmatpush1.bf16.msra.mxu0 0
        %2661 = vmatprep.subr.bf16.mxu0 0
        %2662 = vmatpush1.bf16.msra.mxu0 0
        %2663 = vmatprep.mubr.bf16.mxu0 0
        %2664 = vmatmul.mubr.bf16.gmra.mrb[0].mxu0 %v2629
        %v2665 = vpop.f32.mrb[0].mxu0
        %v2666 = vadd.f32 %v2610, %v2665
        %v2667 = vpop.f32.mrb[0].mxu0
        %v2668 = vpop.f32.mrb[0].mxu0
        %v2669 = vadd.f32 %v2610, %v2668
        %v2670 = vpop.f32.mrb[0].mxu0
        %2671 = vdwg.mxu0
        %v2672 = vadd.f32 %v530, %v2666
        %v2673 = vadd.f32 %v531, %v2669
        %v2674 = vsel %vm559, %v2672, 0.0
        %2675 = vadd.xlane.f32.xlu0 %v2674
        %v2676 = vpop.xlane.xlu0 %2675
        %v2677 = vsel %vm559, %v2673, 0.0
        %2678 = vadd.xlane.f32.xlu0 %v2677
        %v2679 = vpop.xlane.xlu0 %2678
        %v2680 = vrcp.pop 32.0
        %v2681 = vmul.f32 %v2676, %v2680
        %v2682 = vmul.f32 %v2679, %v2680
        %v2683 = vsub.f32 %v2672, %v2681
        %v2684 = vsub.f32 %v2673, %v2682
        %v2685 = vmul.f32 %v2683, %v2683
        %v2686 = vmul.f32 %v2684, %v2684
        %v2687 = vsel %vm559, %v2685, 0.0
        %2688 = vadd.xlane.f32.xlu0 %v2687
        %v2689 = vpop.xlane.xlu0 %2688
        %v2690 = vsel %vm559, %v2686, 0.0
        %2691 = vadd.xlane.f32.xlu0 %v2690
        %v2692 = vpop.xlane.xlu0 %2691
        %v2693 = vmul.f32 %v2689, %v2680
        %v2694 = vmul.f32 %v2692, %v2680
        %v2695 = vadd.f32 %v2693, 1e-05
        %v2696 = vadd.f32 %v2694, 1e-05
        %v2697 = vrsqrt.pop %v2695
        %v2698 = vrsqrt.pop %v2696
        %v2699 = vmul.f32 %v2683, %v2697
        %v2700 = vmul.f32 %v2684, %v2698
        %v2701 = vlaneseq
        %v2702 = vshrl.u32 %v2701, 7
        %v2703 = vsub.s32 2, %v2702
        %v2704 = vrot.slane %v535, %v2703
        %v2705 = vmul.f32 %v2699, %v2704
        %v2706 = vmul.f32 %v2700, %v2704
        %v2707 = vlaneseq
        %v2708 = vshrl.u32 %v2707, 7
        %v2709 = vsub.s32 3, %v2708
        %v2710 = vrot.slane %v535, %v2709
        %v2711 = vadd.f32 %v2705, %v2710
        %v2712 = vadd.f32 %v2706, %v2710
        %v2713 = vpack.c.bf16 %v2712, %v2711
        %v2714 = vld [vmem:[%s502] sm:$0xf]
        %v2715 = vld [vmem:[%s502 + $0x4] sm:$0xf]
        %v2716 = vld [vmem:[%s502 + $0x8] sm:$0xf]
        %v2717 = vld [vmem:[%s502 + $0xc] sm:$0xf]
        %v2718 = vld [vmem:[%s513] sm:$0x1]
        %v2720 = vlaneseq
        %v2721 = vshrl.u32 %v2720, 7
        %v2722 = vsub.s32 0, %v2721
        %v2723 = vrot.slane %v2718, %v2722
        %v2729 = vunpack.c.l.b16 %v2714
        %v2730 = vunpack.c.l.b16 %v2715
        %v2731 = vunpack.c.l.b16 %v2716
        %v2732 = vunpack.c.l.b16 %v2717
        %v2733 = vpack.c.b16 %v2730, %v2729
        %v2734 = vpack.c.b16 %v2732, %v2731
        %v2738 = vsel %vm559, %v2713, 0
        %2740 = vmatprep.subr.bf16.mxu0 0
        %2741 = vmatpush1.bf16.msra.mxu0 %v2733
        %2742 = vmatprep.subr.bf16.mxu0 0
        %2743 = vmatpush1.bf16.msra.mxu0 %v2734
        %2744 = vmatprep.subr.bf16.mxu0 0
        %2745 = vmatpush1.bf16.msra.mxu0 0
        %2746 = vmatprep.subr.bf16.mxu0 0
        %2747 = vmatpush1.bf16.msra.mxu0 0
        %2748 = vmatprep.subr.bf16.mxu0 0
        %2749 = vmatpush1.bf16.msra.mxu0 0
        %2750 = vmatprep.subr.bf16.mxu0 0
        %2751 = vmatpush1.bf16.msra.mxu0 0
        %2752 = vmatprep.subr.bf16.mxu0 0
        %2753 = vmatpush1.bf16.msra.mxu0 0
        %2754 = vmatprep.subr.bf16.mxu0 0
        %2755 = vmatpush1.bf16.msra.mxu0 0
        %2756 = vmatprep.subr.bf16.mxu0 0
        %2757 = vmatpush1.bf16.msra.mxu0 0
        %2758 = vmatprep.subr.bf16.mxu0 0
        %2759 = vmatpush1.bf16.msra.mxu0 0
        %2760 = vmatprep.subr.bf16.mxu0 0
        %2761 = vmatpush1.bf16.msra.mxu0 0
        %2762 = vmatprep.subr.bf16.mxu0 0
        %2763 = vmatpush1.bf16.msra.mxu0 0
        %2764 = vmatprep.subr.bf16.mxu0 0
        %2765 = vmatpush1.bf16.msra.mxu0 0
        %2766 = vmatprep.subr.bf16.mxu0 0
        %2767 = vmatpush1.bf16.msra.mxu0 0
        %2768 = vmatprep.subr.bf16.mxu0 0
        %2769 = vmatpush1.bf16.msra.mxu0 0
        %2770 = vmatprep.subr.bf16.mxu0 0
        %2771 = vmatpush1.bf16.msra.mxu0 0
        %2772 = vmatprep.mubr.bf16.mxu0 0
        %2773 = vmatmul.mubr.bf16.gmra.mrb[0].mxu0 %v2738
        %v2774 = vpop.f32.mrb[0].mxu0
        %v2775 = vadd.f32 %v2723, %v2774
        %v2776 = vpop.f32.mrb[0].mxu0
        %v2777 = vpop.f32.mrb[0].mxu0
        %v2778 = vadd.f32 %v2723, %v2777
        %v2779 = vpop.f32.mrb[0].mxu0
        %2780 = vdwg.mxu0
        %v2781 = vxor.u32 %v2775, 2147483648
        %v2782 = vxor.u32 %v2778, 2147483648
        %v2783 = vmul.f32 %v2781, 1.442695
        %v2784 = vpow.pop %v2783
        %v2785 = vmul.f32 %v2782, 1.442695
        %v2786 = vpow.pop %v2785
        %v2787 = vadd.f32 %v2784, 1.0
        %v2788 = vadd.f32 %v2786, 1.0
        %v2789 = vrcp.pop %v2787
        %v2790 = vmul.f32 1.0, %v2789
        %v2791 = vrcp.pop %v2788
        %v2792 = vmul.f32 1.0, %v2791
        %v2793 = vmul.f32 %v2775, %v2790
        %v2794 = vmul.f32 %v2778, %v2792
        %v2795 = vpack.c.bf16 %v2794, %v2793
        %v2796 = vld [vmem:[%s507] sm:$0xf]
        %v2797 = vld [vmem:[%s507 + $0x4] sm:$0xf]
        %v2798 = vld [vmem:[%s507 + $0x8] sm:$0xf]
        %v2799 = vld [vmem:[%s507 + $0xc] sm:$0xf]
        %v2800 = vld [vmem:[%s507 + $0x10] sm:$0xf]
        %v2801 = vld [vmem:[%s507 + $0x14] sm:$0xf]
        %v2802 = vld [vmem:[%s507 + $0x18] sm:$0xf]
        %v2803 = vld [vmem:[%s507 + $0x1c] sm:$0xf]
        %v2804 = vlaneseq
        %v2805 = vshrl.u32 %v2804, 7
        %v2806 = vsub.s32 1, %v2805
        %v2807 = vrot.slane %v535, %v2806
        %v2816 = vunpack.c.l.b16 %v2796
        %v2817 = vunpack.c.l.b16 %v2797
        %v2818 = vunpack.c.l.b16 %v2798
        %v2819 = vunpack.c.l.b16 %v2799
        %v2820 = vunpack.c.l.b16 %v2800
        %v2821 = vunpack.c.l.b16 %v2801
        %v2822 = vunpack.c.l.b16 %v2802
        %v2823 = vunpack.c.l.b16 %v2803
        %v2824 = vpack.c.b16 %v2817, %v2816
        %v2825 = vpack.c.b16 %v2819, %v2818
        %v2826 = vpack.c.b16 %v2821, %v2820
        %v2827 = vpack.c.b16 %v2823, %v2822
        %vm2832 = vcmask 523264
        %v2834 = vsel %vm2832, %v2795, 0
        %2836 = vmatprep.subr.bf16.mxu0 0
        %2837 = vmatpush1.bf16.msra.mxu0 %v2824
        %2838 = vmatprep.subr.bf16.mxu0 0
        %2839 = vmatpush1.bf16.msra.mxu0 %v2825
        %2840 = vmatprep.subr.bf16.mxu0 0
        %2841 = vmatpush1.bf16.msra.mxu0 %v2826
        %2842 = vmatprep.subr.bf16.mxu0 0
        %2843 = vmatpush1.bf16.msra.mxu0 %v2827
        %2844 = vmatprep.subr.bf16.mxu0 0
        %2845 = vmatpush1.bf16.msra.mxu0 0
        %2846 = vmatprep.subr.bf16.mxu0 0
        %2847 = vmatpush1.bf16.msra.mxu0 0
        %2848 = vmatprep.subr.bf16.mxu0 0
        %2849 = vmatpush1.bf16.msra.mxu0 0
        %2850 = vmatprep.subr.bf16.mxu0 0
        %2851 = vmatpush1.bf16.msra.mxu0 0
        %2852 = vmatprep.subr.bf16.mxu0 0
        %2853 = vmatpush1.bf16.msra.mxu0 0
        %2854 = vmatprep.subr.bf16.mxu0 0
        %2855 = vmatpush1.bf16.msra.mxu0 0
        %2856 = vmatprep.subr.bf16.mxu0 0
        %2857 = vmatpush1.bf16.msra.mxu0 0
        %2858 = vmatprep.subr.bf16.mxu0 0
        %2859 = vmatpush1.bf16.msra.mxu0 0
        %2860 = vmatprep.subr.bf16.mxu0 0
        %2861 = vmatpush1.bf16.msra.mxu0 0
        %2862 = vmatprep.subr.bf16.mxu0 0
        %2863 = vmatpush1.bf16.msra.mxu0 0
        %2864 = vmatprep.subr.bf16.mxu0 0
        %2865 = vmatpush1.bf16.msra.mxu0 0
        %2866 = vmatprep.subr.bf16.mxu0 0
        %2867 = vmatpush1.bf16.msra.mxu0 0
        %2868 = vmatprep.mubr.bf16.mxu0 0
        %2869 = vmatmul.mubr.bf16.gmra.mrb[0].mxu0 %v2834
        %v2870 = vpop.f32.mrb[0].mxu0
        %v2871 = vadd.f32 %v2807, %v2870
        %v2872 = vpop.f32.mrb[0].mxu0
        %v2873 = vpop.f32.mrb[0].mxu0
        %v2874 = vadd.f32 %v2807, %v2873
        %v2875 = vpop.f32.mrb[0].mxu0
        %2876 = vdwg.mxu0
        %v2877 = vadd.f32 %v2711, %v2871
        %v2878 = vadd.f32 %v2712, %v2874
        %v2879 = vsel %vm559, %v2877, 0.0
        %2880 = vadd.xlane.f32.xlu0 %v2879
        %v2881 = vpop.xlane.xlu0 %2880
        %v2882 = vsel %vm559, %v2878, 0.0
        %2883 = vadd.xlane.f32.xlu0 %v2882
        %v2884 = vpop.xlane.xlu0 %2883
        %v2885 = vmul.f32 %v2881, %v2680
        %v2886 = vmul.f32 %v2884, %v2680
        %v2887 = vsub.f32 %v2877, %v2885
        %v2888 = vsub.f32 %v2878, %v2886
        %v2889 = vmul.f32 %v2887, %v2887
        %v2890 = vmul.f32 %v2888, %v2888
        %v2891 = vsel %vm559, %v2889, 0.0
        %2892 = vadd.xlane.f32.xlu0 %v2891
        %v2893 = vpop.xlane.xlu0 %2892
        %v2894 = vsel %vm559, %v2890, 0.0
        %2895 = vadd.xlane.f32.xlu0 %v2894
        %v2896 = vpop.xlane.xlu0 %2895
        %v2897 = vmul.f32 %v2893, %v2680
        %v2898 = vmul.f32 %v2896, %v2680
        %v2899 = vadd.f32 %v2897, 1e-05
        %v2900 = vadd.f32 %v2898, 1e-05
        %v2901 = vrsqrt.pop %v2899
        %v2902 = vrsqrt.pop %v2900
        %v2903 = vmul.f32 %v2887, %v2901
        %v2904 = vmul.f32 %v2888, %v2902
        %v2905 = vlaneseq
        %v2906 = vshrl.u32 %v2905, 7
        %v2907 = vsub.s32 4, %v2906
        %v2908 = vrot.slane %v535, %v2907
        %v2909 = vmul.f32 %v2903, %v2908
        %v2910 = vmul.f32 %v2904, %v2908
        %v2911 = vlaneseq
        %v2912 = vshrl.u32 %v2911, 7
        %v2913 = vsub.s32 5, %v2912
        %v2914 = vrot.slane %v535, %v2913
        %v2915 = vadd.f32 %v2909, %v2914
        %v2916 = vadd.f32 %v2910, %v2914
        %2917 = vst.msk [vmem:[#allocation6] sm:$0xff] %vm559, %v2915
        %2918 = vst.msk [vmem:[#allocation6 + $0x8] sm:$0xff] %vm559, %v2916
        %p2919 = scmp.eq.s32.totalorder %s30, 1
        // Predicated region
        $region65: #{tpu_custom_call.1} parent=55 // pred_check
          %p2920 = pneg %p2919
        $region66: #{tpu_custom_call.1} parent=55 // pred_check_branch
          %2922 = sbr.rel (%p2920) target = $region68
        $region67: #{tpu_custom_call.1} parent=55 // pred_region
          %v2923 = vld [vmem:[%s486] sm:$0x1]
          %v2924 = vld [vmem:[%s486 + $0x2] sm:$0x1]
          %v2925 = vlaneseq
          %v2926 = vshrl.u32 %v2925, 7
          %v2927 = vsub.s32 0, %v2926
          %v2928 = vrot.slane %v2923, %v2927
          %2930 = vbcast.lane.b32.xlu0 %v2928, 256
          %v2931 = vpop.permute.xlu0 %2930
          %v2932 = vlaneseq
          %v2933 = vshrl.u32 %v2932, 7
          %v2934 = vsub.s32 0, %v2933
          %v2935 = vrot.slane %v2924, %v2934
          %2937 = vbcast.lane.b32.xlu0 %v2935, 256
          %v2938 = vpop.permute.xlu0 %2937
          %v2939 = vmul.f32 %v2915, %v2931
          %v2940 = vmul.f32 %v2916, %v2938
          %v2941 = vsel %vm559, %v2939, 0.0
          %v2942 = vrot.slane %v2941, 4
          %v2943 = vadd.f32 %v2941, %v2942
          %v2944 = vrot.slane %v2943, 2
          %v2945 = vadd.f32 %v2943, %v2944
          %v2946 = vrot.slane %v2945, 1
          %v2947 = vadd.f32 %v2945, %v2946
          %v2948 = vsel %vm559, %v2940, 0.0
          %v2949 = vrot.slane %v2948, 4
          %v2950 = vadd.f32 %v2948, %v2949
          %v2951 = vrot.slane %v2950, 2
          %v2952 = vadd.f32 %v2950, %v2951
          %v2953 = vrot.slane %v2952, 1
          %v2954 = vadd.f32 %v2952, %v2953
          %v2957 = vrot.slane %v2924, 7
          %vm2958 = vcmask 1041409
          %v2959 = vsel %vm2958, %v2957, %v2923
          %vm2961 = vcmask 58368
          %v2962 = vsel %vm2961, %v2959, 0.0
          %2963 = vadd.xlane.f32.xlu0 %v2962
          %v2964 = vpop.xlane.xlu0 %2963
          %v2965 = vmax.f32 %v2964, 1e-09
          %v2967 = vrot.slane %v2965, 1
          %v2970 = vrcp.pop %v2965
          %v2971 = vmul.f32 %v2947, %v2970
          %v2972 = vrcp.pop %v2967
          %v2973 = vmul.f32 %v2954, %v2972
          %vm2974 = vcmask 253952
          %2975 = vst.msk [vmem:[#allocation7] sm:$0x1] %vm2974, %v2971
          %2976 = vst.msk [vmem:[#allocation7 + $0x1] sm:$0x1] %vm2974, %v2973
        $region68: #{tpu_custom_call.1} parent=55 // pred_fallthru
          _
        // Predicated region
        $region69: #{tpu_custom_call.1} parent=55 // pred_check
          %p2977 = pneg %p289
        $region70: #{tpu_custom_call.1} parent=55 // pred_check_branch
          %2979 = sbr.rel (%p2977) target = $region72
        $region71: #{tpu_custom_call.1} parent=55 // pred_region
          %s2980 = smul.u32 2, %s29
          %s2982 = ssub.s32 256, 256
          %2983 = vsyncadd [#allocation5], %s2982
          %s2984 = smul.addr %s2980, 128
          %s2985 = scalar_lea.hbm %s9, %s2984
          %s2986 = sshll.u32 [#allocation6], 4
          %s2987 = int_to_ptr.vmem [resolvable:$true] %s2986
          %2992 = dma.vmem_to_hbm [thread:$0]  %s2987, 256, %s2985, [#allocation5], 128, 128, 8
        $region72: #{tpu_custom_call.1} parent=55 // pred_fallthru
          _
        // Predicated region
        $region73: #{tpu_custom_call.1} parent=55 // pred_check
          %p2993 = pneg %p315
        $region74: #{tpu_custom_call.1} parent=55 // pred_check_branch
          %2995 = sbr.rel (%p2993) target = $region76
        $region75: #{tpu_custom_call.1} parent=55 // pred_region
          %s2996 = smul.u32 2, %s29
          %s2998 = ssub.s32 32, 32
          %2999 = vsyncadd [#allocation8], %s2998
          %s3000 = smul.addr %s2996, 16
          %s3001 = scalar_lea.hbm %s10, %s3000
          %s3002 = sshll.u32 [#allocation7], 4
          %s3003 = int_to_ptr.vmem [resolvable:$true] %s3002
          %3008 = dma.vmem_to_hbm [thread:$0]  %s3003, 32, %s3001, [#allocation8], 16, 16, 1
        $region76: #{tpu_custom_call.1} parent=55 // pred_fallthru
          _
        // Predicated region
        $region77: #{tpu_custom_call.1} parent=55 // pred_check
          %p3009 = pneg %p289
        $region78: #{tpu_custom_call.1} parent=55 // pred_check_branch
          %3011 = sbr.rel (%p3009) target = $region80
        $region79: #{tpu_custom_call.1} parent=55 // pred_region
          %3012 = dma.done [#allocation5], 256
        $region80: #{tpu_custom_call.1} parent=55 // pred_fallthru
          _
        // Predicated region
        $region81: #{tpu_custom_call.1} parent=55 // pred_check
          %p3013 = pneg %p315
        $region82: #{tpu_custom_call.1} parent=55 // pred_check_branch
          %3015 = sbr.rel (%p3013) target = $region84
        $region83: #{tpu_custom_call.1} parent=55 // pred_region
          %3016 = dma.done [#allocation8], 32
        $region84: #{tpu_custom_call.1} parent=55 // pred_fallthru
          _
      $region56: #{tpu_custom_call.1} parent=5 // pred_fallthru
        _
      %p3017 = scmp.le.s32.totalorder 2, %s20
      // Predicated region
      $region85: #{tpu_custom_call.1} parent=5 // pred_check
        %p3018 = pneg %p3017
      $region86: #{tpu_custom_call.1} parent=5 // pred_check_branch
        %3020 = sbr.rel (%p3018) target = $region88
      $region87: #{tpu_custom_call.1} parent=5 // pred_region
        %s3021 = ssub.s32 %s20, 2
      $region88: #{tpu_custom_call.1} parent=5 // pred_fallthru
        _
    $region6: #{tpu_custom_call.1} parent=1 // loop_footer
      %s24 = sadd.s32 1, %s20
    $region7: #{tpu_custom_call.1} parent=1 // loop_footer_branch
      %19 = sbr.rel target = $region3
    $region8: #{tpu_custom_call.1} parent=1 // loop_exit
      _
    %3022 = vsyncpa [#allocation4], 1
    %s3023 = scalar_lea.sflag [#allocation4], 1
    %3024 = vsyncpa %s3023, 1
    %3025 = vsyncpa [#allocation5], 1
    %s3026 = scalar_lea.sflag [#allocation5], 1
    %3027 = vsyncpa %s3026, 1
    %3028 = vsyncpa [#allocation8], 1

</llo_original>
